<compile_context>
chip_gen: v6e
topology: v6e:2x2x1
jax: 0.10.0
libtpu: 0.0.40
codegen_flags: <defaults>
</compile_context>

<pallas_src>
import jax
import jax.numpy as jnp
from jax.experimental import pallas as pl
from jax.experimental.pallas import tpu as pltpu


def _round_up(n, m):
    return (n + m - 1) // m * m


def _sigmoid(z):
    # exp on the EUP, divide replaced by the EUP approx reciprocal (separate
    # VLIW slots from the VPU max/add work and the MXU matmuls).
    return pl.reciprocal(1.0 + jnp.exp(-z), approx=True)


# ---------------------------------------------------------------------------
# Fused kernel: conv1+pool1+sig -> conv2+pool2+sig -> fc1 -> fc2 -> fc3
# ---------------------------------------------------------------------------
def _lenet_kernel(x_ref, w1b_ref, b1_ref, w2b_ref, b2_ref,
                  w1fc_ref, v1_ref, w2fc_ref, v2_ref, w3fc_ref, v3_ref,
                  o_ref, p1_ref):
    f32 = jnp.float32
    bf16 = jnp.bfloat16
    TB = x_ref.shape[0]

    # Zero the pool1 scratch so the 56 pad lanes of each 128-wide row slot are 0.
    # (Their conv2 band rows are 0, but 0 * uninitialized-NaN would still poison
    # the conv2 accumulation.)  Cost: ~TB*1536 bf16 of plain vector stores.
    p1_ref[...] = jnp.zeros_like(p1_ref)

    # ---- conv1 (5x5, 1->6ch) + 2x2 max-pool + sigmoid, one output-row PAIR at a
    # time.  Pooled row r uses conv rows 2r, 2r+1, which read input rows 2r..2r+5,
    # i.e. the contiguous lane window x[:, 56r : 56r+168] of the (TB, 784) slab.
    # Band N columns are ordered rp*144 + wp*72 + o*12 + pw, so the row pool and
    # the column pool are both maxes of contiguous halves.
    for r in range(12):
        xs = x_ref[:, 56 * r: 56 * r + 168]                         # (TB, 168) bf16
        c = jnp.dot(xs, w1b_ref[...], preferred_element_type=f32)   # (TB, 288) f32
        m = jnp.maximum(c[:, :144], c[:, 144:])                     # pool conv rows
        m = jnp.maximum(m[:, :72], m[:, 72:])                       # pool conv cols
        # pool-then-sigmoid(+bias) == sigmoid(+bias)-then-pool: sigmoid is monotone
        # and the bias is constant per channel within every 2x2 window.
        p1 = _sigmoid(m + b1_ref[...])                              # (TB, 72)
        # pooled row r lives in lanes [128r, 128r+72) of the scratch slab.
        p1_ref[:, 128 * r: 128 * r + 72] = p1.astype(bf16)

    # ---- conv2 (5x5, 6->16ch) + 2x2 max-pool + sigmoid, fused with fc1.
    # Pooled output row r uses p1 rows 2r..2r+5 = lanes [256r, 256r+768) (aligned).
    h1pre = jnp.zeros((TB, 120), f32)
    for r in range(4):
        s = p1_ref[:, 256 * r: 256 * r + 768]                       # (TB, 768) bf16
        c2 = jnp.dot(s, w2b_ref[...], preferred_element_type=f32)   # (TB, 256) f32
        m2 = jnp.maximum(c2[:, :128], c2[:, 128:])                  # pool conv rows
        m2 = jnp.maximum(m2[:, :64], m2[:, 64:])                    # pool conv cols
        p2 = _sigmoid(m2 + b2_ref[...])                             # (TB, 64)
        # The NCHW flatten is folded into fc1: accumulate this pooled row's slice.
        h1pre = h1pre + jnp.dot(p2.astype(bf16), w1fc_ref[r],
                                preferred_element_type=f32)         # (TB, 120)

    # ---- FC stack (weights resident in VMEM, batch fills the MXU M axis) -------
    h1 = _sigmoid(h1pre + v1_ref[...])                              # (TB, 120)
    h2 = _sigmoid(jnp.dot(h1.astype(bf16), w2fc_ref[...],
                          preferred_element_type=f32) + v2_ref[...])  # (TB, 84)
    logits = jnp.dot(h2.astype(bf16), w3fc_ref[...],
                     preferred_element_type=f32) + v3_ref[...]      # (TB, 128)
    o_ref[...] = logits                                             # dense slab store


# ---------------------------------------------------------------------------
# Wrapper: weight preprocessing (tiny, runs once under jit) + pallas_call
# ---------------------------------------------------------------------------
def _conv1_band(w):
    """(6,1,5,5) conv weight -> (168, 288) band matrix.

    K index = rho*28 + col   (rho = input row within the 6-row slab, col = 0..27)
    N index = rp*144 + wp*72 + o*12 + pw   (conv row 2r+rp, conv col 2*pw+wp, chan o)
    """
    w = w.astype(jnp.float32)[:, 0]                                  # (6, 5, 5)
    rho = jnp.arange(6).reshape(6, 1, 1, 1, 1, 1)
    col = jnp.arange(28).reshape(1, 28, 1, 1, 1, 1)
    rp = jnp.arange(2).reshape(1, 1, 2, 1, 1, 1)
    wp = jnp.arange(2).reshape(1, 1, 1, 2, 1, 1)
    o = jnp.arange(6).reshape(1, 1, 1, 1, 6, 1)
    pw = jnp.arange(12).reshape(1, 1, 1, 1, 1, 12)
    ki = rho - rp
    kj = col - (2 * pw + wp)
    valid = (ki >= 0) & (ki < 5) & (kj >= 0) & (kj < 5)
    val = w[o, jnp.clip(ki, 0, 4), jnp.clip(kj, 0, 4)]
    return jnp.where(valid, val, 0.0).reshape(168, 288).astype(jnp.bfloat16)


def _conv2_band(w):
    """(16,6,5,5) conv weight -> (768, 256) band matrix over the p1 scratch layout.

    K index = rho*128 + slot, slot = cin*12 + pwin for slot < 72 (pad slots -> 0)
    N index = rp*128 + wp*64 + o*4 + pwo   (conv row 2r+rp, conv col 2*pwo+wp, chan o)
    """
    w = w.astype(jnp.float32)                                        # (16, 6, 5, 5)
    rho = jnp.arange(6).reshape(6, 1, 1, 1, 1, 1)
    slot = jnp.arange(128).reshape(1, 128, 1, 1, 1, 1)
    rp = jnp.arange(2).reshape(1, 1, 2, 1, 1, 1)
    wp = jnp.arange(2).reshape(1, 1, 1, 2, 1, 1)
    o = jnp.arange(16).reshape(1, 1, 1, 1, 16, 1)
    pwo = jnp.arange(4).reshape(1, 1, 1, 1, 1, 4)
    cin = slot // 12
    pwin = slot % 12
    ki = rho - rp
    kj = pwin - (2 * pwo + wp)
    valid = (slot < 72) & (ki >= 0) & (ki < 5) & (kj >= 0) & (kj < 5)
    val = w[o, jnp.clip(cin, 0, 5), jnp.clip(ki, 0, 4), jnp.clip(kj, 0, 4)]
    return jnp.where(valid, val, 0.0).reshape(768, 256).astype(jnp.bfloat16)


def lenet_forward(params, x, num_classes=10, batch_tile=256):
    B = x.shape[0]
    assert x.shape[1:] == (1, 28, 28), "LeNet's 16*4*4 flatten implies 1x28x28 inputs"
    assert num_classes <= 128

    TB = min(batch_tile, _round_up(B, 8))                            # images per grid step
    Bp = _round_up(B, TB)
    xf = x.reshape(B, 28 * 28).astype(jnp.bfloat16)                  # lane-flat image slab
    if Bp != B:
        xf = jnp.pad(xf, ((0, Bp - B), (0, 0)))

    # ---- bf16 matmul operands, prepared once ------------------------------------
    w1b = _conv1_band(params["conv1_w"])                             # (168, 288)
    w2b = _conv2_band(params["conv2_w"])                             # (768, 256)
    b1 = jnp.repeat(params["conv1_b"].astype(jnp.float32), 12)[None, :]   # (1, 72)
    b2 = jnp.repeat(params["conv2_b"].astype(jnp.float32), 4)[None, :]    # (1, 64)
    # fc1 with the NCHW flatten folded in: rows regrouped per pooled row r.
    w1fc = (params["lin1_w"].T.reshape(16, 4, 4, 120)
            .transpose(1, 0, 2, 3).reshape(4, 64, 120).astype(jnp.bfloat16))
    v1 = params["lin1_b"].astype(jnp.float32)[None, :]               # (1, 120)
    w2fc = params["lin2_w"].T.astype(jnp.bfloat16)                   # (120, 84)
    v2 = params["lin2_b"].astype(jnp.float32)[None, :]               # (1, 84)
    w3fc = jnp.zeros((84, 128), jnp.bfloat16).at[:, :num_classes].set(
        params["lin3_w"].T.astype(jnp.bfloat16))                     # class-padded fc3
    v3 = jnp.zeros((1, 128), jnp.float32).at[:, :num_classes].set(
        params["lin3_b"].astype(jnp.float32)[None, :])

    def resident(shape):          # constant index_map -> fetched once, stays in VMEM
        return pl.BlockSpec(shape, lambda g: (0,) * len(shape))

    out = pl.pallas_call(
        _lenet_kernel,
        out_shape=jax.ShapeDtypeStruct((Bp, 128), jnp.float32),
        grid_spec=pltpu.PrefetchScalarGridSpec(
            num_scalar_prefetch=0,
            grid=(Bp // TB,),                                        # TB images per step
            in_specs=[
                pl.BlockSpec((TB, 28 * 28), lambda g: (g, 0)),       # image tile
                resident((168, 288)), resident((1, 72)),             # conv1 band + bias
                resident((768, 256)), resident((1, 64)),             # conv2 band + bias
                resident((4, 64, 120)), resident((1, 120)),          # fc1 (flatten folded)
                resident((120, 84)), resident((1, 84)),              # fc2
                resident((84, 128)), resident((1, 128)),             # fc3 (class-padded)
            ],
            out_specs=pl.BlockSpec((TB, 128), lambda g: (g, 0)),
            scratch_shapes=[pltpu.VMEM((TB, 12 * 128), jnp.bfloat16)],  # pool1 activations
        ),
        compiler_params=pltpu.CompilerParams(
            dimension_semantics=("parallel",)),                      # v7x: split tiles/core
    )(xf, w1b, b1, w2b, b2, w1fc, v1, w2fc, v2, w3fc, v3)
    return out[:B, :num_classes]


# ---------------------------------------------------------------------------
# Parameters (deterministic, PyTorch-default-style uniform init)
# ---------------------------------------------------------------------------
def init_params(key, num_classes=10):
    ks = jax.random.split(key, 10)

    def u(k, shape, fan_in):
        bound = 1.0 / jnp.sqrt(float(fan_in))
        return jax.random.uniform(k, shape, jnp.float32, -bound, bound)

    return {
        "conv1_w": u(ks[0], (6, 1, 5, 5), 1 * 5 * 5),
        "conv1_b": u(ks[1], (6,), 1 * 5 * 5),
        "conv2_w": u(ks[2], (16, 6, 5, 5), 6 * 5 * 5),
        "conv2_b": u(ks[3], (16,), 6 * 5 * 5),
        "lin1_w": u(ks[4], (120, 16 * 4 * 4), 16 * 4 * 4),
        "lin1_b": u(ks[5], (120,), 16 * 4 * 4),
        "lin2_w": u(ks[6], (84, 120), 120),
        "lin2_b": u(ks[7], (84,), 120),
        "lin3_w": u(ks[8], (num_classes, 84), 84),
        "lin3_b": u(ks[9], (num_classes,), 84),
    }


# ---------------------------------------------------------------------------
# Pure-JAX reference (mirrors the PyTorch module) for a correctness check
# ---------------------------------------------------------------------------
def _lenet_reference(params, x):
    def conv(v, w, b):
        y = jax.lax.conv_general_dilated(
            v, w, window_strides=(1, 1), padding="VALID",
            dimension_numbers=("NCHW", "OIHW", "NCHW"))
        return y + b[None, :, None, None]

    def pool(v):
        B, C, H, W = v.shape
        return v.reshape(B, C, H // 2, 2, W // 2, 2).max(axis=(3, 5))

    sig = lambda v: 1.0 / (1.0 + jnp.exp(-v))
    out = pool(sig(conv(x, params["conv1_w"], params["conv1_b"])))
    out = pool(sig(conv(out, params["conv2_w"], params["conv2_b"])))
    out = out.reshape(x.shape[0], -1)
    out = sig(out @ params["lin1_w"].T + params["lin1_b"])
    out = sig(out @ params["lin2_w"].T + params["lin2_b"])
    return out @ params["lin3_w"].T + params["lin3_b"]


if __name__ == "__main__":
    key = jax.random.PRNGKey(0)
    pkey, xkey = jax.random.split(key)
    params = init_params(pkey)
    # LeNet's linear1 (16*4*4 inputs) implies 1x28x28 images; small batch for the check.
    x = jax.random.normal(xkey, (2, 1, 28, 28), jnp.float32)

    out = jax.jit(lenet_forward)(params, x)
    out = jax.block_until_ready(out)
    assert out.shape == (2, 10) and out.dtype == jnp.float32

    ref = _lenet_reference(params, x)
    max_err = float(jnp.max(jnp.abs(out - ref)))
    # bf16 matmul operands with f32 accumulation: expect a few e-3 absolute error.
    assert max_err < 2e-2, f"mismatch vs reference: {max_err}"
    print("KERNEL_OK")
</pallas_src>

<mosaic_0001>
module attributes {stable_mosaic.version = 11 : i64} {
  func.func @_lenet_kernel(%arg0: i32, %arg1: memref<8x784xbf16, #tpu.memory_space<vmem>>, %arg2: memref<168x288xbf16, #tpu.memory_space<vmem>>, %arg3: memref<1x72xf32, #tpu.memory_space<vmem>>, %arg4: memref<768x256xbf16, #tpu.memory_space<vmem>>, %arg5: memref<1x64xf32, #tpu.memory_space<vmem>>, %arg6: memref<4x64x120xbf16, #tpu.memory_space<vmem>>, %arg7: memref<1x120xf32, #tpu.memory_space<vmem>>, %arg8: memref<120x84xbf16, #tpu.memory_space<vmem>>, %arg9: memref<1x84xf32, #tpu.memory_space<vmem>>, %arg10: memref<84x128xbf16, #tpu.memory_space<vmem>>, %arg11: memref<1x128xf32, #tpu.memory_space<vmem>>, %arg12: memref<8x128xf32, #tpu.memory_space<vmem>>, %arg13: memref<8x1536xbf16, #tpu.memory_space<vmem>>) attributes {dimension_semantics = [#tpu.dimension_semantics<parallel>], iteration_bounds = array<i64: 1>, scalar_prefetch = 0 : i64, scratch_operands = 1 : i64, tpu.core_type = #tpu.core_type<tc>, window_params = [{transform_indices = @transform_0, window_bounds = array<i64: 8, 784>}, {pipeline_mode = #tpu.pipeline_mode<synchronous>, transform_indices = @transform_1, window_bounds = array<i64: 168, 288>}, {pipeline_mode = #tpu.pipeline_mode<synchronous>, transform_indices = @transform_2, window_bounds = array<i64: 1, 72>}, {pipeline_mode = #tpu.pipeline_mode<synchronous>, transform_indices = @transform_3, window_bounds = array<i64: 768, 256>}, {pipeline_mode = #tpu.pipeline_mode<synchronous>, transform_indices = @transform_4, window_bounds = array<i64: 1, 64>}, {pipeline_mode = #tpu.pipeline_mode<synchronous>, transform_indices = @transform_5, window_bounds = array<i64: 4, 64, 120>}, {pipeline_mode = #tpu.pipeline_mode<synchronous>, transform_indices = @transform_6, window_bounds = array<i64: 1, 120>}, {pipeline_mode = #tpu.pipeline_mode<synchronous>, transform_indices = @transform_7, window_bounds = array<i64: 120, 84>}, {pipeline_mode = #tpu.pipeline_mode<synchronous>, transform_indices = @transform_8, window_bounds = array<i64: 1, 84>}, {pipeline_mode = #tpu.pipeline_mode<synchronous>, transform_indices = @transform_9, window_bounds = array<i64: 84, 128>}, {pipeline_mode = #tpu.pipeline_mode<synchronous>, transform_indices = @transform_10, window_bounds = array<i64: 1, 128>}, {transform_indices = @transform_11, window_bounds = array<i64: 8, 128>}]} {
    %cst = arith.constant 0.000000e+00 : bf16
    %0 = vector.broadcast %cst : bf16 to vector<8x1536xbf16>
    %c0 = arith.constant 0 : index
    %c0_0 = arith.constant 0 : index
    %1 = vector.load %arg13[%c0, %c0_0] : memref<8x1536xbf16, #tpu.memory_space<vmem>>, vector<8x1536xbf16>
    tpu.vector_store %arg13[%c0, %c0_0], %0 {strides = array<i32>} : memref<8x1536xbf16, #tpu.memory_space<vmem>>, vector<8x1536xbf16>,
    %c0_1 = arith.constant 0 : index
    %c0_2 = arith.constant 0 : index
    %2 = vector.load %arg1[%c0_1, %c0_2] : memref<8x784xbf16, #tpu.memory_space<vmem>>, vector<8x168xbf16>
    %c0_3 = arith.constant 0 : index
    %c0_4 = arith.constant 0 : index
    %3 = vector.load %arg2[%c0_3, %c0_4] : memref<168x288xbf16, #tpu.memory_space<vmem>>, vector<168x288xbf16>
    %cst_5 = arith.constant dense<0.000000e+00> : vector<8x288xf32>
    %4 = tpu.matmul %2, %3, %cst_5 {dimension_numbers = #tpu.dot_dimension_numbers<[1], [0], [0], [1], [0, 0, 1, 1], [], []>} : vector<8x168xbf16>, vector<168x288xbf16>, vector<8x288xf32> -> vector<8x288xf32>
    %5 = vector.extract_strided_slice %4 {offsets = [0, 0], sizes = [8, 144], strides = [1, 1]} : vector<8x288xf32> to vector<8x144xf32>
    %6 = vector.extract_strided_slice %4 {offsets = [0, 144], sizes = [8, 144], strides = [1, 1]} : vector<8x288xf32> to vector<8x144xf32>
    %7 = arith.maximumf %5, %6 : vector<8x144xf32>
    %8 = vector.extract_strided_slice %7 {offsets = [0, 0], sizes = [8, 72], strides = [1, 1]} : vector<8x144xf32> to vector<8x72xf32>
    %9 = vector.extract_strided_slice %7 {offsets = [0, 72], sizes = [8, 72], strides = [1, 1]} : vector<8x144xf32> to vector<8x72xf32>
    %10 = arith.maximumf %8, %9 : vector<8x72xf32>
    %c0_6 = arith.constant 0 : index
    %c0_7 = arith.constant 0 : index
    %11 = vector.load %arg3[%c0_6, %c0_7] : memref<1x72xf32, #tpu.memory_space<vmem>>, vector<1x72xf32>
    %12 = vector.broadcast %11 : vector<1x72xf32> to vector<8x72xf32>
    %13 = arith.addf %10, %12 : vector<8x72xf32>
    %cst_8 = arith.constant 0.000000e+00 : f32
    %14 = vector.broadcast %cst_8 : f32 to vector<8x72xf32>
    %15 = arith.subf %14, %13 : vector<8x72xf32>
    %16 = math.exp %15 : vector<8x72xf32>
    %cst_9 = arith.constant 1.000000e+00 : f32
    %17 = vector.broadcast %cst_9 : f32 to vector<8x72xf32>
    %18 = arith.addf %17, %16 : vector<8x72xf32>
    %19 = tpu.reciprocal %18 {approx = true} : vector<8x72xf32> -> vector<8x72xf32>
    %20 = arith.truncf %19 : vector<8x72xf32> to vector<8x72xbf16>
    %c0_10 = arith.constant 0 : index
    %c0_11 = arith.constant 0 : index
    %21 = vector.load %arg13[%c0_10, %c0_11] : memref<8x1536xbf16, #tpu.memory_space<vmem>>, vector<8x72xbf16>
    tpu.vector_store %arg13[%c0_10, %c0_11], %20 {strides = array<i32>} : memref<8x1536xbf16, #tpu.memory_space<vmem>>, vector<8x72xbf16>,
    %c0_12 = arith.constant 0 : index
    %c56 = arith.constant 56 : index
    %22 = vector.load %arg1[%c0_12, %c56] : memref<8x784xbf16, #tpu.memory_space<vmem>>, vector<8x168xbf16>
    %c0_13 = arith.constant 0 : index
    %c0_14 = arith.constant 0 : index
    %23 = vector.load %arg2[%c0_13, %c0_14] : memref<168x288xbf16, #tpu.memory_space<vmem>>, vector<168x288xbf16>
    %cst_15 = arith.constant dense<0.000000e+00> : vector<8x288xf32>
    %24 = tpu.matmul %22, %23, %cst_15 {dimension_numbers = #tpu.dot_dimension_numbers<[1], [0], [0], [1], [0, 0, 1, 1], [], []>} : vector<8x168xbf16>, vector<168x288xbf16>, vector<8x288xf32> -> vector<8x288xf32>
    %25 = vector.extract_strided_slice %24 {offsets = [0, 0], sizes = [8, 144], strides = [1, 1]} : vector<8x288xf32> to vector<8x144xf32>
    %26 = vector.extract_strided_slice %24 {offsets = [0, 144], sizes = [8, 144], strides = [1, 1]} : vector<8x288xf32> to vector<8x144xf32>
    %27 = arith.maximumf %25, %26 : vector<8x144xf32>
    %28 = vector.extract_strided_slice %27 {offsets = [0, 0], sizes = [8, 72], strides = [1, 1]} : vector<8x144xf32> to vector<8x72xf32>
    %29 = vector.extract_strided_slice %27 {offsets = [0, 72], sizes = [8, 72], strides = [1, 1]} : vector<8x144xf32> to vector<8x72xf32>
    %30 = arith.maximumf %28, %29 : vector<8x72xf32>
    %c0_16 = arith.constant 0 : index
    %c0_17 = arith.constant 0 : index
    %31 = vector.load %arg3[%c0_16, %c0_17] : memref<1x72xf32, #tpu.memory_space<vmem>>, vector<1x72xf32>
    %32 = vector.broadcast %31 : vector<1x72xf32> to vector<8x72xf32>
    %33 = arith.addf %30, %32 : vector<8x72xf32>
    %cst_18 = arith.constant 0.000000e+00 : f32
    %34 = vector.broadcast %cst_18 : f32 to vector<8x72xf32>
    %35 = arith.subf %34, %33 : vector<8x72xf32>
    %36 = math.exp %35 : vector<8x72xf32>
    %cst_19 = arith.constant 1.000000e+00 : f32
    %37 = vector.broadcast %cst_19 : f32 to vector<8x72xf32>
    %38 = arith.addf %37, %36 : vector<8x72xf32>
    %39 = tpu.reciprocal %38 {approx = true} : vector<8x72xf32> -> vector<8x72xf32>
    %40 = arith.truncf %39 : vector<8x72xf32> to vector<8x72xbf16>
    %c0_20 = arith.constant 0 : index
    %c128 = arith.constant 128 : index
    %41 = vector.load %arg13[%c0_20, %c128] : memref<8x1536xbf16, #tpu.memory_space<vmem>>, vector<8x72xbf16>
    tpu.vector_store %arg13[%c0_20, %c128], %40 {strides = array<i32>} : memref<8x1536xbf16, #tpu.memory_space<vmem>>, vector<8x72xbf16>,
    %c0_21 = arith.constant 0 : index
    %c112 = arith.constant 112 : index
    %42 = vector.load %arg1[%c0_21, %c112] : memref<8x784xbf16, #tpu.memory_space<vmem>>, vector<8x168xbf16>
    %c0_22 = arith.constant 0 : index
    %c0_23 = arith.constant 0 : index
    %43 = vector.load %arg2[%c0_22, %c0_23] : memref<168x288xbf16, #tpu.memory_space<vmem>>, vector<168x288xbf16>
    %cst_24 = arith.constant dense<0.000000e+00> : vector<8x288xf32>
    %44 = tpu.matmul %42, %43, %cst_24 {dimension_numbers = #tpu.dot_dimension_numbers<[1], [0], [0], [1], [0, 0, 1, 1], [], []>} : vector<8x168xbf16>, vector<168x288xbf16>, vector<8x288xf32> -> vector<8x288xf32>
    %45 = vector.extract_strided_slice %44 {offsets = [0, 0], sizes = [8, 144], strides = [1, 1]} : vector<8x288xf32> to vector<8x144xf32>
    %46 = vector.extract_strided_slice %44 {offsets = [0, 144], sizes = [8, 144], strides = [1, 1]} : vector<8x288xf32> to vector<8x144xf32>
    %47 = arith.maximumf %45, %46 : vector<8x144xf32>
    %48 = vector.extract_strided_slice %47 {offsets = [0, 0], sizes = [8, 72], strides = [1, 1]} : vector<8x144xf32> to vector<8x72xf32>
    %49 = vector.extract_strided_slice %47 {offsets = [0, 72], sizes = [8, 72], strides = [1, 1]} : vector<8x144xf32> to vector<8x72xf32>
    %50 = arith.maximumf %48, %49 : vector<8x72xf32>
    %c0_25 = arith.constant 0 : index
    %c0_26 = arith.constant 0 : index
    %51 = vector.load %arg3[%c0_25, %c0_26] : memref<1x72xf32, #tpu.memory_space<vmem>>, vector<1x72xf32>
    %52 = vector.broadcast %51 : vector<1x72xf32> to vector<8x72xf32>
    %53 = arith.addf %50, %52 : vector<8x72xf32>
    %cst_27 = arith.constant 0.000000e+00 : f32
    %54 = vector.broadcast %cst_27 : f32 to vector<8x72xf32>
    %55 = arith.subf %54, %53 : vector<8x72xf32>
    %56 = math.exp %55 : vector<8x72xf32>
    %cst_28 = arith.constant 1.000000e+00 : f32
    %57 = vector.broadcast %cst_28 : f32 to vector<8x72xf32>
    %58 = arith.addf %57, %56 : vector<8x72xf32>
    %59 = tpu.reciprocal %58 {approx = true} : vector<8x72xf32> -> vector<8x72xf32>
    %60 = arith.truncf %59 : vector<8x72xf32> to vector<8x72xbf16>
    %c0_29 = arith.constant 0 : index
    %c256 = arith.constant 256 : index
    %61 = vector.load %arg13[%c0_29, %c256] : memref<8x1536xbf16, #tpu.memory_space<vmem>>, vector<8x72xbf16>
    tpu.vector_store %arg13[%c0_29, %c256], %60 {strides = array<i32>} : memref<8x1536xbf16, #tpu.memory_space<vmem>>, vector<8x72xbf16>,
    %c0_30 = arith.constant 0 : index
    %c168 = arith.constant 168 : index
    %62 = vector.load %arg1[%c0_30, %c168] : memref<8x784xbf16, #tpu.memory_space<vmem>>, vector<8x168xbf16>
    %c0_31 = arith.constant 0 : index
    %c0_32 = arith.constant 0 : index
    %63 = vector.load %arg2[%c0_31, %c0_32] : memref<168x288xbf16, #tpu.memory_space<vmem>>, vector<168x288xbf16>
    %cst_33 = arith.constant dense<0.000000e+00> : vector<8x288xf32>
    %64 = tpu.matmul %62, %63, %cst_33 {dimension_numbers = #tpu.dot_dimension_numbers<[1], [0], [0], [1], [0, 0, 1, 1], [], []>} : vector<8x168xbf16>, vector<168x288xbf16>, vector<8x288xf32> -> vector<8x288xf32>
    %65 = vector.extract_strided_slice %64 {offsets = [0, 0], sizes = [8, 144], strides = [1, 1]} : vector<8x288xf32> to vector<8x144xf32>
    %66 = vector.extract_strided_slice %64 {offsets = [0, 144], sizes = [8, 144], strides = [1, 1]} : vector<8x288xf32> to vector<8x144xf32>
    %67 = arith.maximumf %65, %66 : vector<8x144xf32>
    %68 = vector.extract_strided_slice %67 {offsets = [0, 0], sizes = [8, 72], strides = [1, 1]} : vector<8x144xf32> to vector<8x72xf32>
    %69 = vector.extract_strided_slice %67 {offsets = [0, 72], sizes = [8, 72], strides = [1, 1]} : vector<8x144xf32> to vector<8x72xf32>
    %70 = arith.maximumf %68, %69 : vector<8x72xf32>
    %c0_34 = arith.constant 0 : index
    %c0_35 = arith.constant 0 : index
    %71 = vector.load %arg3[%c0_34, %c0_35] : memref<1x72xf32, #tpu.memory_space<vmem>>, vector<1x72xf32>
    %72 = vector.broadcast %71 : vector<1x72xf32> to vector<8x72xf32>
    %73 = arith.addf %70, %72 : vector<8x72xf32>
    %cst_36 = arith.constant 0.000000e+00 : f32
    %74 = vector.broadcast %cst_36 : f32 to vector<8x72xf32>
    %75 = arith.subf %74, %73 : vector<8x72xf32>
    %76 = math.exp %75 : vector<8x72xf32>
    %cst_37 = arith.constant 1.000000e+00 : f32
    %77 = vector.broadcast %cst_37 : f32 to vector<8x72xf32>
    %78 = arith.addf %77, %76 : vector<8x72xf32>
    %79 = tpu.reciprocal %78 {approx = true} : vector<8x72xf32> -> vector<8x72xf32>
    %80 = arith.truncf %79 : vector<8x72xf32> to vector<8x72xbf16>
    %c0_38 = arith.constant 0 : index
    %c384 = arith.constant 384 : index
    %81 = vector.load %arg13[%c0_38, %c384] : memref<8x1536xbf16, #tpu.memory_space<vmem>>, vector<8x72xbf16>
    tpu.vector_store %arg13[%c0_38, %c384], %80 {strides = array<i32>} : memref<8x1536xbf16, #tpu.memory_space<vmem>>, vector<8x72xbf16>,
    %c0_39 = arith.constant 0 : index
    %c224 = arith.constant 224 : index
    %82 = vector.load %arg1[%c0_39, %c224] : memref<8x784xbf16, #tpu.memory_space<vmem>>, vector<8x168xbf16>
    %c0_40 = arith.constant 0 : index
    %c0_41 = arith.constant 0 : index
    %83 = vector.load %arg2[%c0_40, %c0_41] : memref<168x288xbf16, #tpu.memory_space<vmem>>, vector<168x288xbf16>
    %cst_42 = arith.constant dense<0.000000e+00> : vector<8x288xf32>
    %84 = tpu.matmul %82, %83, %cst_42 {dimension_numbers = #tpu.dot_dimension_numbers<[1], [0], [0], [1], [0, 0, 1, 1], [], []>} : vector<8x168xbf16>, vector<168x288xbf16>, vector<8x288xf32> -> vector<8x288xf32>
    %85 = vector.extract_strided_slice %84 {offsets = [0, 0], sizes = [8, 144], strides = [1, 1]} : vector<8x288xf32> to vector<8x144xf32>
    %86 = vector.extract_strided_slice %84 {offsets = [0, 144], sizes = [8, 144], strides = [1, 1]} : vector<8x288xf32> to vector<8x144xf32>
    %87 = arith.maximumf %85, %86 : vector<8x144xf32>
    %88 = vector.extract_strided_slice %87 {offsets = [0, 0], sizes = [8, 72], strides = [1, 1]} : vector<8x144xf32> to vector<8x72xf32>
    %89 = vector.extract_strided_slice %87 {offsets = [0, 72], sizes = [8, 72], strides = [1, 1]} : vector<8x144xf32> to vector<8x72xf32>
    %90 = arith.maximumf %88, %89 : vector<8x72xf32>
    %c0_43 = arith.constant 0 : index
    %c0_44 = arith.constant 0 : index
    %91 = vector.load %arg3[%c0_43, %c0_44] : memref<1x72xf32, #tpu.memory_space<vmem>>, vector<1x72xf32>
    %92 = vector.broadcast %91 : vector<1x72xf32> to vector<8x72xf32>
    %93 = arith.addf %90, %92 : vector<8x72xf32>
    %cst_45 = arith.constant 0.000000e+00 : f32
    %94 = vector.broadcast %cst_45 : f32 to vector<8x72xf32>
    %95 = arith.subf %94, %93 : vector<8x72xf32>
    %96 = math.exp %95 : vector<8x72xf32>
    %cst_46 = arith.constant 1.000000e+00 : f32
    %97 = vector.broadcast %cst_46 : f32 to vector<8x72xf32>
    %98 = arith.addf %97, %96 : vector<8x72xf32>
    %99 = tpu.reciprocal %98 {approx = true} : vector<8x72xf32> -> vector<8x72xf32>
    %100 = arith.truncf %99 : vector<8x72xf32> to vector<8x72xbf16>
    %c0_47 = arith.constant 0 : index
    %c512 = arith.constant 512 : index
    %101 = vector.load %arg13[%c0_47, %c512] : memref<8x1536xbf16, #tpu.memory_space<vmem>>, vector<8x72xbf16>
    tpu.vector_store %arg13[%c0_47, %c512], %100 {strides = array<i32>} : memref<8x1536xbf16, #tpu.memory_space<vmem>>, vector<8x72xbf16>,
    %c0_48 = arith.constant 0 : index
    %c280 = arith.constant 280 : index
    %102 = vector.load %arg1[%c0_48, %c280] : memref<8x784xbf16, #tpu.memory_space<vmem>>, vector<8x168xbf16>
    %c0_49 = arith.constant 0 : index
    %c0_50 = arith.constant 0 : index
    %103 = vector.load %arg2[%c0_49, %c0_50] : memref<168x288xbf16, #tpu.memory_space<vmem>>, vector<168x288xbf16>
    %cst_51 = arith.constant dense<0.000000e+00> : vector<8x288xf32>
    %104 = tpu.matmul %102, %103, %cst_51 {dimension_numbers = #tpu.dot_dimension_numbers<[1], [0], [0], [1], [0, 0, 1, 1], [], []>} : vector<8x168xbf16>, vector<168x288xbf16>, vector<8x288xf32> -> vector<8x288xf32>
    %105 = vector.extract_strided_slice %104 {offsets = [0, 0], sizes = [8, 144], strides = [1, 1]} : vector<8x288xf32> to vector<8x144xf32>
    %106 = vector.extract_strided_slice %104 {offsets = [0, 144], sizes = [8, 144], strides = [1, 1]} : vector<8x288xf32> to vector<8x144xf32>
    %107 = arith.maximumf %105, %106 : vector<8x144xf32>
    %108 = vector.extract_strided_slice %107 {offsets = [0, 0], sizes = [8, 72], strides = [1, 1]} : vector<8x144xf32> to vector<8x72xf32>
    %109 = vector.extract_strided_slice %107 {offsets = [0, 72], sizes = [8, 72], strides = [1, 1]} : vector<8x144xf32> to vector<8x72xf32>
    %110 = arith.maximumf %108, %109 : vector<8x72xf32>
    %c0_52 = arith.constant 0 : index
    %c0_53 = arith.constant 0 : index
    %111 = vector.load %arg3[%c0_52, %c0_53] : memref<1x72xf32, #tpu.memory_space<vmem>>, vector<1x72xf32>
    %112 = vector.broadcast %111 : vector<1x72xf32> to vector<8x72xf32>
    %113 = arith.addf %110, %112 : vector<8x72xf32>
    %cst_54 = arith.constant 0.000000e+00 : f32
    %114 = vector.broadcast %cst_54 : f32 to vector<8x72xf32>
    %115 = arith.subf %114, %113 : vector<8x72xf32>
    %116 = math.exp %115 : vector<8x72xf32>
    %cst_55 = arith.constant 1.000000e+00 : f32
    %117 = vector.broadcast %cst_55 : f32 to vector<8x72xf32>
    %118 = arith.addf %117, %116 : vector<8x72xf32>
    %119 = tpu.reciprocal %118 {approx = true} : vector<8x72xf32> -> vector<8x72xf32>
    %120 = arith.truncf %119 : vector<8x72xf32> to vector<8x72xbf16>
    %c0_56 = arith.constant 0 : index
    %c640 = arith.constant 640 : index
    %121 = vector.load %arg13[%c0_56, %c640] : memref<8x1536xbf16, #tpu.memory_space<vmem>>, vector<8x72xbf16>
    tpu.vector_store %arg13[%c0_56, %c640], %120 {strides = array<i32>} : memref<8x1536xbf16, #tpu.memory_space<vmem>>, vector<8x72xbf16>,
    %c0_57 = arith.constant 0 : index
    %c336 = arith.constant 336 : index
    %122 = vector.load %arg1[%c0_57, %c336] : memref<8x784xbf16, #tpu.memory_space<vmem>>, vector<8x168xbf16>
    %c0_58 = arith.constant 0 : index
    %c0_59 = arith.constant 0 : index
    %123 = vector.load %arg2[%c0_58, %c0_59] : memref<168x288xbf16, #tpu.memory_space<vmem>>, vector<168x288xbf16>
    %cst_60 = arith.constant dense<0.000000e+00> : vector<8x288xf32>
    %124 = tpu.matmul %122, %123, %cst_60 {dimension_numbers = #tpu.dot_dimension_numbers<[1], [0], [0], [1], [0, 0, 1, 1], [], []>} : vector<8x168xbf16>, vector<168x288xbf16>, vector<8x288xf32> -> vector<8x288xf32>
    %125 = vector.extract_strided_slice %124 {offsets = [0, 0], sizes = [8, 144], strides = [1, 1]} : vector<8x288xf32> to vector<8x144xf32>
    %126 = vector.extract_strided_slice %124 {offsets = [0, 144], sizes = [8, 144], strides = [1, 1]} : vector<8x288xf32> to vector<8x144xf32>
    %127 = arith.maximumf %125, %126 : vector<8x144xf32>
    %128 = vector.extract_strided_slice %127 {offsets = [0, 0], sizes = [8, 72], strides = [1, 1]} : vector<8x144xf32> to vector<8x72xf32>
    %129 = vector.extract_strided_slice %127 {offsets = [0, 72], sizes = [8, 72], strides = [1, 1]} : vector<8x144xf32> to vector<8x72xf32>
    %130 = arith.maximumf %128, %129 : vector<8x72xf32>
    %c0_61 = arith.constant 0 : index
    %c0_62 = arith.constant 0 : index
    %131 = vector.load %arg3[%c0_61, %c0_62] : memref<1x72xf32, #tpu.memory_space<vmem>>, vector<1x72xf32>
    %132 = vector.broadcast %131 : vector<1x72xf32> to vector<8x72xf32>
    %133 = arith.addf %130, %132 : vector<8x72xf32>
    %cst_63 = arith.constant 0.000000e+00 : f32
    %134 = vector.broadcast %cst_63 : f32 to vector<8x72xf32>
    %135 = arith.subf %134, %133 : vector<8x72xf32>
    %136 = math.exp %135 : vector<8x72xf32>
    %cst_64 = arith.constant 1.000000e+00 : f32
    %137 = vector.broadcast %cst_64 : f32 to vector<8x72xf32>
    %138 = arith.addf %137, %136 : vector<8x72xf32>
    %139 = tpu.reciprocal %138 {approx = true} : vector<8x72xf32> -> vector<8x72xf32>
    %140 = arith.truncf %139 : vector<8x72xf32> to vector<8x72xbf16>
    %c0_65 = arith.constant 0 : index
    %c768 = arith.constant 768 : index
    %141 = vector.load %arg13[%c0_65, %c768] : memref<8x1536xbf16, #tpu.memory_space<vmem>>, vector<8x72xbf16>
    tpu.vector_store %arg13[%c0_65, %c768], %140 {strides = array<i32>} : memref<8x1536xbf16, #tpu.memory_space<vmem>>, vector<8x72xbf16>,
    %c0_66 = arith.constant 0 : index
    %c392 = arith.constant 392 : index
    %142 = vector.load %arg1[%c0_66, %c392] : memref<8x784xbf16, #tpu.memory_space<vmem>>, vector<8x168xbf16>
    %c0_67 = arith.constant 0 : index
    %c0_68 = arith.constant 0 : index
    %143 = vector.load %arg2[%c0_67, %c0_68] : memref<168x288xbf16, #tpu.memory_space<vmem>>, vector<168x288xbf16>
    %cst_69 = arith.constant dense<0.000000e+00> : vector<8x288xf32>
    %144 = tpu.matmul %142, %143, %cst_69 {dimension_numbers = #tpu.dot_dimension_numbers<[1], [0], [0], [1], [0, 0, 1, 1], [], []>} : vector<8x168xbf16>, vector<168x288xbf16>, vector<8x288xf32> -> vector<8x288xf32>
    %145 = vector.extract_strided_slice %144 {offsets = [0, 0], sizes = [8, 144], strides = [1, 1]} : vector<8x288xf32> to vector<8x144xf32>
    %146 = vector.extract_strided_slice %144 {offsets = [0, 144], sizes = [8, 144], strides = [1, 1]} : vector<8x288xf32> to vector<8x144xf32>
    %147 = arith.maximumf %145, %146 : vector<8x144xf32>
    %148 = vector.extract_strided_slice %147 {offsets = [0, 0], sizes = [8, 72], strides = [1, 1]} : vector<8x144xf32> to vector<8x72xf32>
    %149 = vector.extract_strided_slice %147 {offsets = [0, 72], sizes = [8, 72], strides = [1, 1]} : vector<8x144xf32> to vector<8x72xf32>
    %150 = arith.maximumf %148, %149 : vector<8x72xf32>
    %c0_70 = arith.constant 0 : index
    %c0_71 = arith.constant 0 : index
    %151 = vector.load %arg3[%c0_70, %c0_71] : memref<1x72xf32, #tpu.memory_space<vmem>>, vector<1x72xf32>
    %152 = vector.broadcast %151 : vector<1x72xf32> to vector<8x72xf32>
    %153 = arith.addf %150, %152 : vector<8x72xf32>
    %cst_72 = arith.constant 0.000000e+00 : f32
    %154 = vector.broadcast %cst_72 : f32 to vector<8x72xf32>
    %155 = arith.subf %154, %153 : vector<8x72xf32>
    %156 = math.exp %155 : vector<8x72xf32>
    %cst_73 = arith.constant 1.000000e+00 : f32
    %157 = vector.broadcast %cst_73 : f32 to vector<8x72xf32>
    %158 = arith.addf %157, %156 : vector<8x72xf32>
    %159 = tpu.reciprocal %158 {approx = true} : vector<8x72xf32> -> vector<8x72xf32>
    %160 = arith.truncf %159 : vector<8x72xf32> to vector<8x72xbf16>
    %c0_74 = arith.constant 0 : index
    %c896 = arith.constant 896 : index
    %161 = vector.load %arg13[%c0_74, %c896] : memref<8x1536xbf16, #tpu.memory_space<vmem>>, vector<8x72xbf16>
    tpu.vector_store %arg13[%c0_74, %c896], %160 {strides = array<i32>} : memref<8x1536xbf16, #tpu.memory_space<vmem>>, vector<8x72xbf16>,
    %c0_75 = arith.constant 0 : index
    %c448 = arith.constant 448 : index
    %162 = vector.load %arg1[%c0_75, %c448] : memref<8x784xbf16, #tpu.memory_space<vmem>>, vector<8x168xbf16>
    %c0_76 = arith.constant 0 : index
    %c0_77 = arith.constant 0 : index
    %163 = vector.load %arg2[%c0_76, %c0_77] : memref<168x288xbf16, #tpu.memory_space<vmem>>, vector<168x288xbf16>
    %cst_78 = arith.constant dense<0.000000e+00> : vector<8x288xf32>
    %164 = tpu.matmul %162, %163, %cst_78 {dimension_numbers = #tpu.dot_dimension_numbers<[1], [0], [0], [1], [0, 0, 1, 1], [], []>} : vector<8x168xbf16>, vector<168x288xbf16>, vector<8x288xf32> -> vector<8x288xf32>
    %165 = vector.extract_strided_slice %164 {offsets = [0, 0], sizes = [8, 144], strides = [1, 1]} : vector<8x288xf32> to vector<8x144xf32>
    %166 = vector.extract_strided_slice %164 {offsets = [0, 144], sizes = [8, 144], strides = [1, 1]} : vector<8x288xf32> to vector<8x144xf32>
    %167 = arith.maximumf %165, %166 : vector<8x144xf32>
    %168 = vector.extract_strided_slice %167 {offsets = [0, 0], sizes = [8, 72], strides = [1, 1]} : vector<8x144xf32> to vector<8x72xf32>
    %169 = vector.extract_strided_slice %167 {offsets = [0, 72], sizes = [8, 72], strides = [1, 1]} : vector<8x144xf32> to vector<8x72xf32>
    %170 = arith.maximumf %168, %169 : vector<8x72xf32>
    %c0_79 = arith.constant 0 : index
    %c0_80 = arith.constant 0 : index
    %171 = vector.load %arg3[%c0_79, %c0_80] : memref<1x72xf32, #tpu.memory_space<vmem>>, vector<1x72xf32>
    %172 = vector.broadcast %171 : vector<1x72xf32> to vector<8x72xf32>
    %173 = arith.addf %170, %172 : vector<8x72xf32>
    %cst_81 = arith.constant 0.000000e+00 : f32
    %174 = vector.broadcast %cst_81 : f32 to vector<8x72xf32>
    %175 = arith.subf %174, %173 : vector<8x72xf32>
    %176 = math.exp %175 : vector<8x72xf32>
    %cst_82 = arith.constant 1.000000e+00 : f32
    %177 = vector.broadcast %cst_82 : f32 to vector<8x72xf32>
    %178 = arith.addf %177, %176 : vector<8x72xf32>
    %179 = tpu.reciprocal %178 {approx = true} : vector<8x72xf32> -> vector<8x72xf32>
    %180 = arith.truncf %179 : vector<8x72xf32> to vector<8x72xbf16>
    %c0_83 = arith.constant 0 : index
    %c1024 = arith.constant 1024 : index
    %181 = vector.load %arg13[%c0_83, %c1024] : memref<8x1536xbf16, #tpu.memory_space<vmem>>, vector<8x72xbf16>
    tpu.vector_store %arg13[%c0_83, %c1024], %180 {strides = array<i32>} : memref<8x1536xbf16, #tpu.memory_space<vmem>>, vector<8x72xbf16>,
    %c0_84 = arith.constant 0 : index
    %c504 = arith.constant 504 : index
    %182 = vector.load %arg1[%c0_84, %c504] : memref<8x784xbf16, #tpu.memory_space<vmem>>, vector<8x168xbf16>
    %c0_85 = arith.constant 0 : index
    %c0_86 = arith.constant 0 : index
    %183 = vector.load %arg2[%c0_85, %c0_86] : memref<168x288xbf16, #tpu.memory_space<vmem>>, vector<168x288xbf16>
    %cst_87 = arith.constant dense<0.000000e+00> : vector<8x288xf32>
    %184 = tpu.matmul %182, %183, %cst_87 {dimension_numbers = #tpu.dot_dimension_numbers<[1], [0], [0], [1], [0, 0, 1, 1], [], []>} : vector<8x168xbf16>, vector<168x288xbf16>, vector<8x288xf32> -> vector<8x288xf32>
    %185 = vector.extract_strided_slice %184 {offsets = [0, 0], sizes = [8, 144], strides = [1, 1]} : vector<8x288xf32> to vector<8x144xf32>
    %186 = vector.extract_strided_slice %184 {offsets = [0, 144], sizes = [8, 144], strides = [1, 1]} : vector<8x288xf32> to vector<8x144xf32>
    %187 = arith.maximumf %185, %186 : vector<8x144xf32>
    %188 = vector.extract_strided_slice %187 {offsets = [0, 0], sizes = [8, 72], strides = [1, 1]} : vector<8x144xf32> to vector<8x72xf32>
    %189 = vector.extract_strided_slice %187 {offsets = [0, 72], sizes = [8, 72], strides = [1, 1]} : vector<8x144xf32> to vector<8x72xf32>
    %190 = arith.maximumf %188, %189 : vector<8x72xf32>
    %c0_88 = arith.constant 0 : index
    %c0_89 = arith.constant 0 : index
    %191 = vector.load %arg3[%c0_88, %c0_89] : memref<1x72xf32, #tpu.memory_space<vmem>>, vector<1x72xf32>
    %192 = vector.broadcast %191 : vector<1x72xf32> to vector<8x72xf32>
    %193 = arith.addf %190, %192 : vector<8x72xf32>
    %cst_90 = arith.constant 0.000000e+00 : f32
    %194 = vector.broadcast %cst_90 : f32 to vector<8x72xf32>
    %195 = arith.subf %194, %193 : vector<8x72xf32>
    %196 = math.exp %195 : vector<8x72xf32>
    %cst_91 = arith.constant 1.000000e+00 : f32
    %197 = vector.broadcast %cst_91 : f32 to vector<8x72xf32>
    %198 = arith.addf %197, %196 : vector<8x72xf32>
    %199 = tpu.reciprocal %198 {approx = true} : vector<8x72xf32> -> vector<8x72xf32>
    %200 = arith.truncf %199 : vector<8x72xf32> to vector<8x72xbf16>
    %c0_92 = arith.constant 0 : index
    %c1152 = arith.constant 1152 : index
    %201 = vector.load %arg13[%c0_92, %c1152] : memref<8x1536xbf16, #tpu.memory_space<vmem>>, vector<8x72xbf16>
    tpu.vector_store %arg13[%c0_92, %c1152], %200 {strides = array<i32>} : memref<8x1536xbf16, #tpu.memory_space<vmem>>, vector<8x72xbf16>,
    %c0_93 = arith.constant 0 : index
    %c560 = arith.constant 560 : index
    %202 = vector.load %arg1[%c0_93, %c560] : memref<8x784xbf16, #tpu.memory_space<vmem>>, vector<8x168xbf16>
    %c0_94 = arith.constant 0 : index
    %c0_95 = arith.constant 0 : index
    %203 = vector.load %arg2[%c0_94, %c0_95] : memref<168x288xbf16, #tpu.memory_space<vmem>>, vector<168x288xbf16>
    %cst_96 = arith.constant dense<0.000000e+00> : vector<8x288xf32>
    %204 = tpu.matmul %202, %203, %cst_96 {dimension_numbers = #tpu.dot_dimension_numbers<[1], [0], [0], [1], [0, 0, 1, 1], [], []>} : vector<8x168xbf16>, vector<168x288xbf16>, vector<8x288xf32> -> vector<8x288xf32>
    %205 = vector.extract_strided_slice %204 {offsets = [0, 0], sizes = [8, 144], strides = [1, 1]} : vector<8x288xf32> to vector<8x144xf32>
    %206 = vector.extract_strided_slice %204 {offsets = [0, 144], sizes = [8, 144], strides = [1, 1]} : vector<8x288xf32> to vector<8x144xf32>
    %207 = arith.maximumf %205, %206 : vector<8x144xf32>
    %208 = vector.extract_strided_slice %207 {offsets = [0, 0], sizes = [8, 72], strides = [1, 1]} : vector<8x144xf32> to vector<8x72xf32>
    %209 = vector.extract_strided_slice %207 {offsets = [0, 72], sizes = [8, 72], strides = [1, 1]} : vector<8x144xf32> to vector<8x72xf32>
    %210 = arith.maximumf %208, %209 : vector<8x72xf32>
    %c0_97 = arith.constant 0 : index
    %c0_98 = arith.constant 0 : index
    %211 = vector.load %arg3[%c0_97, %c0_98] : memref<1x72xf32, #tpu.memory_space<vmem>>, vector<1x72xf32>
    %212 = vector.broadcast %211 : vector<1x72xf32> to vector<8x72xf32>
    %213 = arith.addf %210, %212 : vector<8x72xf32>
    %cst_99 = arith.constant 0.000000e+00 : f32
    %214 = vector.broadcast %cst_99 : f32 to vector<8x72xf32>
    %215 = arith.subf %214, %213 : vector<8x72xf32>
    %216 = math.exp %215 : vector<8x72xf32>
    %cst_100 = arith.constant 1.000000e+00 : f32
    %217 = vector.broadcast %cst_100 : f32 to vector<8x72xf32>
    %218 = arith.addf %217, %216 : vector<8x72xf32>
    %219 = tpu.reciprocal %218 {approx = true} : vector<8x72xf32> -> vector<8x72xf32>
    %220 = arith.truncf %219 : vector<8x72xf32> to vector<8x72xbf16>
    %c0_101 = arith.constant 0 : index
    %c1280 = arith.constant 1280 : index
    %221 = vector.load %arg13[%c0_101, %c1280] : memref<8x1536xbf16, #tpu.memory_space<vmem>>, vector<8x72xbf16>
    tpu.vector_store %arg13[%c0_101, %c1280], %220 {strides = array<i32>} : memref<8x1536xbf16, #tpu.memory_space<vmem>>, vector<8x72xbf16>,
    %c0_102 = arith.constant 0 : index
    %c616 = arith.constant 616 : index
    %222 = vector.load %arg1[%c0_102, %c616] : memref<8x784xbf16, #tpu.memory_space<vmem>>, vector<8x168xbf16>
    %c0_103 = arith.constant 0 : index
    %c0_104 = arith.constant 0 : index
    %223 = vector.load %arg2[%c0_103, %c0_104] : memref<168x288xbf16, #tpu.memory_space<vmem>>, vector<168x288xbf16>
    %cst_105 = arith.constant dense<0.000000e+00> : vector<8x288xf32>
    %224 = tpu.matmul %222, %223, %cst_105 {dimension_numbers = #tpu.dot_dimension_numbers<[1], [0], [0], [1], [0, 0, 1, 1], [], []>} : vector<8x168xbf16>, vector<168x288xbf16>, vector<8x288xf32> -> vector<8x288xf32>
    %225 = vector.extract_strided_slice %224 {offsets = [0, 0], sizes = [8, 144], strides = [1, 1]} : vector<8x288xf32> to vector<8x144xf32>
    %226 = vector.extract_strided_slice %224 {offsets = [0, 144], sizes = [8, 144], strides = [1, 1]} : vector<8x288xf32> to vector<8x144xf32>
    %227 = arith.maximumf %225, %226 : vector<8x144xf32>
    %228 = vector.extract_strided_slice %227 {offsets = [0, 0], sizes = [8, 72], strides = [1, 1]} : vector<8x144xf32> to vector<8x72xf32>
    %229 = vector.extract_strided_slice %227 {offsets = [0, 72], sizes = [8, 72], strides = [1, 1]} : vector<8x144xf32> to vector<8x72xf32>
    %230 = arith.maximumf %228, %229 : vector<8x72xf32>
    %c0_106 = arith.constant 0 : index
    %c0_107 = arith.constant 0 : index
    %231 = vector.load %arg3[%c0_106, %c0_107] : memref<1x72xf32, #tpu.memory_space<vmem>>, vector<1x72xf32>
    %232 = vector.broadcast %231 : vector<1x72xf32> to vector<8x72xf32>
    %233 = arith.addf %230, %232 : vector<8x72xf32>
    %cst_108 = arith.constant 0.000000e+00 : f32
    %234 = vector.broadcast %cst_108 : f32 to vector<8x72xf32>
    %235 = arith.subf %234, %233 : vector<8x72xf32>
    %236 = math.exp %235 : vector<8x72xf32>
    %cst_109 = arith.constant 1.000000e+00 : f32
    %237 = vector.broadcast %cst_109 : f32 to vector<8x72xf32>
    %238 = arith.addf %237, %236 : vector<8x72xf32>
    %239 = tpu.reciprocal %238 {approx = true} : vector<8x72xf32> -> vector<8x72xf32>
    %240 = arith.truncf %239 : vector<8x72xf32> to vector<8x72xbf16>
    %c0_110 = arith.constant 0 : index
    %c1408 = arith.constant 1408 : index
    %241 = vector.load %arg13[%c0_110, %c1408] : memref<8x1536xbf16, #tpu.memory_space<vmem>>, vector<8x72xbf16>
    tpu.vector_store %arg13[%c0_110, %c1408], %240 {strides = array<i32>} : memref<8x1536xbf16, #tpu.memory_space<vmem>>, vector<8x72xbf16>,
    %cst_111 = arith.constant 0.000000e+00 : f32
    %242 = vector.broadcast %cst_111 : f32 to vector<8x120xf32>
    %c0_112 = arith.constant 0 : index
    %c0_113 = arith.constant 0 : index
    %243 = vector.load %arg13[%c0_112, %c0_113] : memref<8x1536xbf16, #tpu.memory_space<vmem>>, vector<8x768xbf16>
    %c0_114 = arith.constant 0 : index
    %c0_115 = arith.constant 0 : index
    %244 = vector.load %arg4[%c0_114, %c0_115] : memref<768x256xbf16, #tpu.memory_space<vmem>>, vector<768x256xbf16>
    %cst_116 = arith.constant dense<0.000000e+00> : vector<8x256xf32>
    %245 = tpu.matmul %243, %244, %cst_116 {dimension_numbers = #tpu.dot_dimension_numbers<[1], [0], [0], [1], [0, 0, 1, 1], [], []>} : vector<8x768xbf16>, vector<768x256xbf16>, vector<8x256xf32> -> vector<8x256xf32>
    %246 = vector.extract_strided_slice %245 {offsets = [0, 0], sizes = [8, 128], strides = [1, 1]} : vector<8x256xf32> to vector<8x128xf32>
    %247 = vector.extract_strided_slice %245 {offsets = [0, 128], sizes = [8, 128], strides = [1, 1]} : vector<8x256xf32> to vector<8x128xf32>
    %248 = arith.maximumf %246, %247 : vector<8x128xf32>
    %249 = vector.extract_strided_slice %248 {offsets = [0, 0], sizes = [8, 64], strides = [1, 1]} : vector<8x128xf32> to vector<8x64xf32>
    %250 = vector.extract_strided_slice %248 {offsets = [0, 64], sizes = [8, 64], strides = [1, 1]} : vector<8x128xf32> to vector<8x64xf32>
    %251 = arith.maximumf %249, %250 : vector<8x64xf32>
    %c0_117 = arith.constant 0 : index
    %c0_118 = arith.constant 0 : index
    %252 = vector.load %arg5[%c0_117, %c0_118] : memref<1x64xf32, #tpu.memory_space<vmem>>, vector<1x64xf32>
    %253 = vector.broadcast %252 : vector<1x64xf32> to vector<8x64xf32>
    %254 = arith.addf %251, %253 : vector<8x64xf32>
    %cst_119 = arith.constant 0.000000e+00 : f32
    %255 = vector.broadcast %cst_119 : f32 to vector<8x64xf32>
    %256 = arith.subf %255, %254 : vector<8x64xf32>
    %257 = math.exp %256 : vector<8x64xf32>
    %cst_120 = arith.constant 1.000000e+00 : f32
    %258 = vector.broadcast %cst_120 : f32 to vector<8x64xf32>
    %259 = arith.addf %258, %257 : vector<8x64xf32>
    %260 = tpu.reciprocal %259 {approx = true} : vector<8x64xf32> -> vector<8x64xf32>
    %261 = arith.truncf %260 : vector<8x64xf32> to vector<8x64xbf16>
    %c0_121 = arith.constant 0 : index
    %c0_122 = arith.constant 0 : index
    %c0_123 = arith.constant 0 : index
    %262 = vector.load %arg6[%c0_121, %c0_122, %c0_123] : memref<4x64x120xbf16, #tpu.memory_space<vmem>>, vector<1x64x120xbf16>
    %263 = vector.shape_cast %262 : vector<1x64x120xbf16> to vector<64x120xbf16>
    %cst_124 = arith.constant dense<0.000000e+00> : vector<8x120xf32>
    %264 = tpu.matmul %261, %263, %cst_124 {dimension_numbers = #tpu.dot_dimension_numbers<[1], [0], [0], [1], [0, 0, 1, 1], [], []>} : vector<8x64xbf16>, vector<64x120xbf16>, vector<8x120xf32> -> vector<8x120xf32>
    %265 = arith.addf %242, %264 : vector<8x120xf32>
    %c0_125 = arith.constant 0 : index
    %c256_126 = arith.constant 256 : index
    %266 = vector.load %arg13[%c0_125, %c256_126] : memref<8x1536xbf16, #tpu.memory_space<vmem>>, vector<8x768xbf16>
    %c0_127 = arith.constant 0 : index
    %c0_128 = arith.constant 0 : index
    %267 = vector.load %arg4[%c0_127, %c0_128] : memref<768x256xbf16, #tpu.memory_space<vmem>>, vector<768x256xbf16>
    %cst_129 = arith.constant dense<0.000000e+00> : vector<8x256xf32>
    %268 = tpu.matmul %266, %267, %cst_129 {dimension_numbers = #tpu.dot_dimension_numbers<[1], [0], [0], [1], [0, 0, 1, 1], [], []>} : vector<8x768xbf16>, vector<768x256xbf16>, vector<8x256xf32> -> vector<8x256xf32>
    %269 = vector.extract_strided_slice %268 {offsets = [0, 0], sizes = [8, 128], strides = [1, 1]} : vector<8x256xf32> to vector<8x128xf32>
    %270 = vector.extract_strided_slice %268 {offsets = [0, 128], sizes = [8, 128], strides = [1, 1]} : vector<8x256xf32> to vector<8x128xf32>
    %271 = arith.maximumf %269, %270 : vector<8x128xf32>
    %272 = vector.extract_strided_slice %271 {offsets = [0, 0], sizes = [8, 64], strides = [1, 1]} : vector<8x128xf32> to vector<8x64xf32>
    %273 = vector.extract_strided_slice %271 {offsets = [0, 64], sizes = [8, 64], strides = [1, 1]} : vector<8x128xf32> to vector<8x64xf32>
    %274 = arith.maximumf %272, %273 : vector<8x64xf32>
    %c0_130 = arith.constant 0 : index
    %c0_131 = arith.constant 0 : index
    %275 = vector.load %arg5[%c0_130, %c0_131] : memref<1x64xf32, #tpu.memory_space<vmem>>, vector<1x64xf32>
    %276 = vector.broadcast %275 : vector<1x64xf32> to vector<8x64xf32>
    %277 = arith.addf %274, %276 : vector<8x64xf32>
    %cst_132 = arith.constant 0.000000e+00 : f32
    %278 = vector.broadcast %cst_132 : f32 to vector<8x64xf32>
    %279 = arith.subf %278, %277 : vector<8x64xf32>
    %280 = math.exp %279 : vector<8x64xf32>
    %cst_133 = arith.constant 1.000000e+00 : f32
    %281 = vector.broadcast %cst_133 : f32 to vector<8x64xf32>
    %282 = arith.addf %281, %280 : vector<8x64xf32>
    %283 = tpu.reciprocal %282 {approx = true} : vector<8x64xf32> -> vector<8x64xf32>
    %284 = arith.truncf %283 : vector<8x64xf32> to vector<8x64xbf16>
    %c1 = arith.constant 1 : index
    %c0_134 = arith.constant 0 : index
    %c0_135 = arith.constant 0 : index
    %285 = vector.load %arg6[%c1, %c0_134, %c0_135] : memref<4x64x120xbf16, #tpu.memory_space<vmem>>, vector<1x64x120xbf16>
    %286 = vector.shape_cast %285 : vector<1x64x120xbf16> to vector<64x120xbf16>
    %cst_136 = arith.constant dense<0.000000e+00> : vector<8x120xf32>
    %287 = tpu.matmul %284, %286, %cst_136 {dimension_numbers = #tpu.dot_dimension_numbers<[1], [0], [0], [1], [0, 0, 1, 1], [], []>} : vector<8x64xbf16>, vector<64x120xbf16>, vector<8x120xf32> -> vector<8x120xf32>
    %288 = arith.addf %265, %287 : vector<8x120xf32>
    %c0_137 = arith.constant 0 : index
    %c512_138 = arith.constant 512 : index
    %289 = vector.load %arg13[%c0_137, %c512_138] : memref<8x1536xbf16, #tpu.memory_space<vmem>>, vector<8x768xbf16>
    %c0_139 = arith.constant 0 : index
    %c0_140 = arith.constant 0 : index
    %290 = vector.load %arg4[%c0_139, %c0_140] : memref<768x256xbf16, #tpu.memory_space<vmem>>, vector<768x256xbf16>
    %cst_141 = arith.constant dense<0.000000e+00> : vector<8x256xf32>
    %291 = tpu.matmul %289, %290, %cst_141 {dimension_numbers = #tpu.dot_dimension_numbers<[1], [0], [0], [1], [0, 0, 1, 1], [], []>} : vector<8x768xbf16>, vector<768x256xbf16>, vector<8x256xf32> -> vector<8x256xf32>
    %292 = vector.extract_strided_slice %291 {offsets = [0, 0], sizes = [8, 128], strides = [1, 1]} : vector<8x256xf32> to vector<8x128xf32>
    %293 = vector.extract_strided_slice %291 {offsets = [0, 128], sizes = [8, 128], strides = [1, 1]} : vector<8x256xf32> to vector<8x128xf32>
    %294 = arith.maximumf %292, %293 : vector<8x128xf32>
    %295 = vector.extract_strided_slice %294 {offsets = [0, 0], sizes = [8, 64], strides = [1, 1]} : vector<8x128xf32> to vector<8x64xf32>
    %296 = vector.extract_strided_slice %294 {offsets = [0, 64], sizes = [8, 64], strides = [1, 1]} : vector<8x128xf32> to vector<8x64xf32>
    %297 = arith.maximumf %295, %296 : vector<8x64xf32>
    %c0_142 = arith.constant 0 : index
    %c0_143 = arith.constant 0 : index
    %298 = vector.load %arg5[%c0_142, %c0_143] : memref<1x64xf32, #tpu.memory_space<vmem>>, vector<1x64xf32>
    %299 = vector.broadcast %298 : vector<1x64xf32> to vector<8x64xf32>
    %300 = arith.addf %297, %299 : vector<8x64xf32>
    %cst_144 = arith.constant 0.000000e+00 : f32
    %301 = vector.broadcast %cst_144 : f32 to vector<8x64xf32>
    %302 = arith.subf %301, %300 : vector<8x64xf32>
    %303 = math.exp %302 : vector<8x64xf32>
    %cst_145 = arith.constant 1.000000e+00 : f32
    %304 = vector.broadcast %cst_145 : f32 to vector<8x64xf32>
    %305 = arith.addf %304, %303 : vector<8x64xf32>
    %306 = tpu.reciprocal %305 {approx = true} : vector<8x64xf32> -> vector<8x64xf32>
    %307 = arith.truncf %306 : vector<8x64xf32> to vector<8x64xbf16>
    %c2 = arith.constant 2 : index
    %c0_146 = arith.constant 0 : index
    %c0_147 = arith.constant 0 : index
    %308 = vector.load %arg6[%c2, %c0_146, %c0_147] : memref<4x64x120xbf16, #tpu.memory_space<vmem>>, vector<1x64x120xbf16>
    %309 = vector.shape_cast %308 : vector<1x64x120xbf16> to vector<64x120xbf16>
    %cst_148 = arith.constant dense<0.000000e+00> : vector<8x120xf32>
    %310 = tpu.matmul %307, %309, %cst_148 {dimension_numbers = #tpu.dot_dimension_numbers<[1], [0], [0], [1], [0, 0, 1, 1], [], []>} : vector<8x64xbf16>, vector<64x120xbf16>, vector<8x120xf32> -> vector<8x120xf32>
    %311 = arith.addf %288, %310 : vector<8x120xf32>
    %c0_149 = arith.constant 0 : index
    %c768_150 = arith.constant 768 : index
    %312 = vector.load %arg13[%c0_149, %c768_150] : memref<8x1536xbf16, #tpu.memory_space<vmem>>, vector<8x768xbf16>
    %c0_151 = arith.constant 0 : index
    %c0_152 = arith.constant 0 : index
    %313 = vector.load %arg4[%c0_151, %c0_152] : memref<768x256xbf16, #tpu.memory_space<vmem>>, vector<768x256xbf16>
    %cst_153 = arith.constant dense<0.000000e+00> : vector<8x256xf32>
    %314 = tpu.matmul %312, %313, %cst_153 {dimension_numbers = #tpu.dot_dimension_numbers<[1], [0], [0], [1], [0, 0, 1, 1], [], []>} : vector<8x768xbf16>, vector<768x256xbf16>, vector<8x256xf32> -> vector<8x256xf32>
    %315 = vector.extract_strided_slice %314 {offsets = [0, 0], sizes = [8, 128], strides = [1, 1]} : vector<8x256xf32> to vector<8x128xf32>
    %316 = vector.extract_strided_slice %314 {offsets = [0, 128], sizes = [8, 128], strides = [1, 1]} : vector<8x256xf32> to vector<8x128xf32>
    %317 = arith.maximumf %315, %316 : vector<8x128xf32>
    %318 = vector.extract_strided_slice %317 {offsets = [0, 0], sizes = [8, 64], strides = [1, 1]} : vector<8x128xf32> to vector<8x64xf32>
    %319 = vector.extract_strided_slice %317 {offsets = [0, 64], sizes = [8, 64], strides = [1, 1]} : vector<8x128xf32> to vector<8x64xf32>
    %320 = arith.maximumf %318, %319 : vector<8x64xf32>
    %c0_154 = arith.constant 0 : index
    %c0_155 = arith.constant 0 : index
    %321 = vector.load %arg5[%c0_154, %c0_155] : memref<1x64xf32, #tpu.memory_space<vmem>>, vector<1x64xf32>
    %322 = vector.broadcast %321 : vector<1x64xf32> to vector<8x64xf32>
    %323 = arith.addf %320, %322 : vector<8x64xf32>
    %cst_156 = arith.constant 0.000000e+00 : f32
    %324 = vector.broadcast %cst_156 : f32 to vector<8x64xf32>
    %325 = arith.subf %324, %323 : vector<8x64xf32>
    %326 = math.exp %325 : vector<8x64xf32>
    %cst_157 = arith.constant 1.000000e+00 : f32
    %327 = vector.broadcast %cst_157 : f32 to vector<8x64xf32>
    %328 = arith.addf %327, %326 : vector<8x64xf32>
    %329 = tpu.reciprocal %328 {approx = true} : vector<8x64xf32> -> vector<8x64xf32>
    %330 = arith.truncf %329 : vector<8x64xf32> to vector<8x64xbf16>
    %c3 = arith.constant 3 : index
    %c0_158 = arith.constant 0 : index
    %c0_159 = arith.constant 0 : index
    %331 = vector.load %arg6[%c3, %c0_158, %c0_159] : memref<4x64x120xbf16, #tpu.memory_space<vmem>>, vector<1x64x120xbf16>
    %332 = vector.shape_cast %331 : vector<1x64x120xbf16> to vector<64x120xbf16>
    %cst_160 = arith.constant dense<0.000000e+00> : vector<8x120xf32>
    %333 = tpu.matmul %330, %332, %cst_160 {dimension_numbers = #tpu.dot_dimension_numbers<[1], [0], [0], [1], [0, 0, 1, 1], [], []>} : vector<8x64xbf16>, vector<64x120xbf16>, vector<8x120xf32> -> vector<8x120xf32>
    %334 = arith.addf %311, %333 : vector<8x120xf32>
    %c0_161 = arith.constant 0 : index
    %c0_162 = arith.constant 0 : index
    %335 = vector.load %arg7[%c0_161, %c0_162] : memref<1x120xf32, #tpu.memory_space<vmem>>, vector<1x120xf32>
    %336 = vector.broadcast %335 : vector<1x120xf32> to vector<8x120xf32>
    %337 = arith.addf %334, %336 : vector<8x120xf32>
    %cst_163 = arith.constant 0.000000e+00 : f32
    %338 = vector.broadcast %cst_163 : f32 to vector<8x120xf32>
    %339 = arith.subf %338, %337 : vector<8x120xf32>
    %340 = math.exp %339 : vector<8x120xf32>
    %cst_164 = arith.constant 1.000000e+00 : f32
    %341 = vector.broadcast %cst_164 : f32 to vector<8x120xf32>
    %342 = arith.addf %341, %340 : vector<8x120xf32>
    %343 = tpu.reciprocal %342 {approx = true} : vector<8x120xf32> -> vector<8x120xf32>
    %344 = arith.truncf %343 : vector<8x120xf32> to vector<8x120xbf16>
    %c0_165 = arith.constant 0 : index
    %c0_166 = arith.constant 0 : index
    %345 = vector.load %arg8[%c0_165, %c0_166] : memref<120x84xbf16, #tpu.memory_space<vmem>>, vector<120x84xbf16>
    %cst_167 = arith.constant dense<0.000000e+00> : vector<8x84xf32>
    %346 = tpu.matmul %344, %345, %cst_167 {dimension_numbers = #tpu.dot_dimension_numbers<[1], [0], [0], [1], [0, 0, 1, 1], [], []>} : vector<8x120xbf16>, vector<120x84xbf16>, vector<8x84xf32> -> vector<8x84xf32>
    %c0_168 = arith.constant 0 : index
    %c0_169 = arith.constant 0 : index
    %347 = vector.load %arg9[%c0_168, %c0_169] : memref<1x84xf32, #tpu.memory_space<vmem>>, vector<1x84xf32>
    %348 = vector.broadcast %347 : vector<1x84xf32> to vector<8x84xf32>
    %349 = arith.addf %346, %348 : vector<8x84xf32>
    %cst_170 = arith.constant 0.000000e+00 : f32
    %350 = vector.broadcast %cst_170 : f32 to vector<8x84xf32>
    %351 = arith.subf %350, %349 : vector<8x84xf32>
    %352 = math.exp %351 : vector<8x84xf32>
    %cst_171 = arith.constant 1.000000e+00 : f32
    %353 = vector.broadcast %cst_171 : f32 to vector<8x84xf32>
    %354 = arith.addf %353, %352 : vector<8x84xf32>
    %355 = tpu.reciprocal %354 {approx = true} : vector<8x84xf32> -> vector<8x84xf32>
    %356 = arith.truncf %355 : vector<8x84xf32> to vector<8x84xbf16>
    %c0_172 = arith.constant 0 : index
    %c0_173 = arith.constant 0 : index
    %357 = vector.load %arg10[%c0_172, %c0_173] : memref<84x128xbf16, #tpu.memory_space<vmem>>, vector<84x128xbf16>
    %cst_174 = arith.constant dense<0.000000e+00> : vector<8x128xf32>
    %358 = tpu.matmul %356, %357, %cst_174 {dimension_numbers = #tpu.dot_dimension_numbers<[1], [0], [0], [1], [0, 0, 1, 1], [], []>} : vector<8x84xbf16>, vector<84x128xbf16>, vector<8x128xf32> -> vector<8x128xf32>
    %c0_175 = arith.constant 0 : index
    %c0_176 = arith.constant 0 : index
    %359 = vector.load %arg11[%c0_175, %c0_176] : memref<1x128xf32, #tpu.memory_space<vmem>>, vector<1x128xf32>
    %360 = vector.broadcast %359 : vector<1x128xf32> to vector<8x128xf32>
    %361 = arith.addf %358, %360 : vector<8x128xf32>
    %c0_177 = arith.constant 0 : index
    %c0_178 = arith.constant 0 : index
    %362 = vector.load %arg12[%c0_177, %c0_178] : memref<8x128xf32, #tpu.memory_space<vmem>>, vector<8x128xf32>
    tpu.vector_store %arg12[%c0_177, %c0_178], %361 {strides = array<i32>} : memref<8x128xf32, #tpu.memory_space<vmem>>, vector<8x128xf32>,
    return
  }
  func.func @transform_0(%arg0: i32) -> (i32, i32) {
    %c0_i32 = arith.constant 0 : i32
    %c0_i32_0 = arith.constant 0 : i32
    return %arg0, %c0_i32 : i32, i32
  }
  func.func @transform_1(%arg0: i32) -> (i32, i32) {
    %c0_i32 = arith.constant 0 : i32
    %c0_i32_0 = arith.constant 0 : i32
    %c0_i32_1 = arith.constant 0 : i32
    return %c0_i32, %c0_i32_0 : i32, i32
  }
  func.func @transform_2(%arg0: i32) -> (i32, i32) {
    %c0_i32 = arith.constant 0 : i32
    %c0_i32_0 = arith.constant 0 : i32
    %c0_i32_1 = arith.constant 0 : i32
    return %c0_i32, %c0_i32_0 : i32, i32
  }
  func.func @transform_3(%arg0: i32) -> (i32, i32) {
    %c0_i32 = arith.constant 0 : i32
    %c0_i32_0 = arith.constant 0 : i32
    %c0_i32_1 = arith.constant 0 : i32
    return %c0_i32, %c0_i32_0 : i32, i32
  }
  func.func @transform_4(%arg0: i32) -> (i32, i32) {
    %c0_i32 = arith.constant 0 : i32
    %c0_i32_0 = arith.constant 0 : i32
    %c0_i32_1 = arith.constant 0 : i32
    return %c0_i32, %c0_i32_0 : i32, i32
  }
  func.func @transform_5(%arg0: i32) -> (i32, i32, i32) {
    %c0_i32 = arith.constant 0 : i32
    %c0_i32_0 = arith.constant 0 : i32
    %c0_i32_1 = arith.constant 0 : i32
    %c0_i32_2 = arith.constant 0 : i32
    return %c0_i32, %c0_i32_0, %c0_i32_1 : i32, i32, i32
  }
  func.func @transform_6(%arg0: i32) -> (i32, i32) {
    %c0_i32 = arith.constant 0 : i32
    %c0_i32_0 = arith.constant 0 : i32
    %c0_i32_1 = arith.constant 0 : i32
    return %c0_i32, %c0_i32_0 : i32, i32
  }
  func.func @transform_7(%arg0: i32) -> (i32, i32) {
    %c0_i32 = arith.constant 0 : i32
    %c0_i32_0 = arith.constant 0 : i32
    %c0_i32_1 = arith.constant 0 : i32
    return %c0_i32, %c0_i32_0 : i32, i32
  }
  func.func @transform_8(%arg0: i32) -> (i32, i32) {
    %c0_i32 = arith.constant 0 : i32
    %c0_i32_0 = arith.constant 0 : i32
    %c0_i32_1 = arith.constant 0 : i32
    return %c0_i32, %c0_i32_0 : i32, i32
  }
  func.func @transform_9(%arg0: i32) -> (i32, i32) {
    %c0_i32 = arith.constant 0 : i32
    %c0_i32_0 = arith.constant 0 : i32
    %c0_i32_1 = arith.constant 0 : i32
    return %c0_i32, %c0_i32_0 : i32, i32
  }
  func.func @transform_10(%arg0: i32) -> (i32, i32) {
    %c0_i32 = arith.constant 0 : i32
    %c0_i32_0 = arith.constant 0 : i32
    %c0_i32_1 = arith.constant 0 : i32
    return %c0_i32, %c0_i32_0 : i32, i32
  }
  func.func @transform_11(%arg0: i32) -> (i32, i32) {
    %c0_i32 = arith.constant 0 : i32
    %c0_i32_0 = arith.constant 0 : i32
    return %arg0, %c0_i32 : i32, i32
  }
}

</mosaic_0001>

<llo_original>
// kernel: lenet_forward.1
$region0: #{lenet_forward.1}
  #allocation0 [shape = 'u32[]', space=smem, size = 0x4, offset = 0x4, fixed_abs, tag = 'smem constant byte address 0x4 - core index']
  #allocation1 [shape = 'u32[144,128]{1,0:T(1,128)}', space=vmem, size = 0x12000, scoped, tag = 'internal scratch']
  #allocation2 [shape = 'bf16[8,1536]{1,0:T(8,128)(2,1)}', space=vmem, size = 0x6000, scoped, tag = 'scratch operand']
  %s0 = inlined_call_operand.vmem [shape: bf16[8,784], index: 0, kind: input, shape index: {}]
  %s1 = inlined_call_operand.vmem [shape: bf16[168,288], index: 1, kind: input, shape index: {}]
  %s2 = inlined_call_operand.vmem [shape: f32[1,72], index: 2, kind: input, shape index: {}]
  %s3 = inlined_call_operand.vmem [shape: bf16[768,256], index: 3, kind: input, shape index: {}]
  %s4 = inlined_call_operand.vmem [shape: f32[1,64], index: 4, kind: input, shape index: {}]
  %s5 = inlined_call_operand.vmem [shape: bf16[4,64,120], index: 5, kind: input, shape index: {}]
  %s6 = inlined_call_operand.vmem [shape: f32[1,120], index: 6, kind: input, shape index: {}]
  %s7 = inlined_call_operand.vmem [shape: bf16[120,84], index: 7, kind: input, shape index: {}]
  %s8 = inlined_call_operand.vmem [shape: f32[1,84], index: 8, kind: input, shape index: {}]
  %s9 = inlined_call_operand.vmem [shape: bf16[84,128], index: 9, kind: input, shape index: {}]
  %s10 = inlined_call_operand.vmem [shape: f32[1,128], index: 10, kind: input, shape index: {}]
  %s11 = inlined_call_operand.vmem [shape: f32[8,128], index: 11, kind: output, shape index: {}]
  %s12 = sld [smem:[#allocation0]]
  $region54: #{lenet_forward.1} parent=0
    _
  %s14 = ssub.s32 1, %s12
  %s15 = scalar_select 0, %s14, %s12
  // Predicated region
  $region2: #{lenet_forward.1} parent=0 // pred_check
    _
  $region3: #{lenet_forward.1} parent=0 // pred_check_branch
    %17 = sbr.rel (0) target = $region5
  $region4: #{lenet_forward.1} parent=0 // pred_region
    _
  $region5: #{lenet_forward.1} parent=0 // pred_fallthru
    _
  // Predicated region
  $region6: #{lenet_forward.1} parent=0 // pred_check
    _
  $region7: #{lenet_forward.1} parent=0 // pred_check_branch
    %19 = sbr.rel (0) target = $region9
  $region8: #{lenet_forward.1} parent=0 // pred_region
    _
  $region9: #{lenet_forward.1} parent=0 // pred_fallthru
    _
  // Predicated region
  $region10: #{lenet_forward.1} parent=0 // pred_check
    _
  $region11: #{lenet_forward.1} parent=0 // pred_check_branch
    %21 = sbr.rel (0) target = $region13
  $region12: #{lenet_forward.1} parent=0 // pred_region
    _
  $region13: #{lenet_forward.1} parent=0 // pred_fallthru
    _
  // Predicated region
  $region14: #{lenet_forward.1} parent=0 // pred_check
    _
  $region15: #{lenet_forward.1} parent=0 // pred_check_branch
    %23 = sbr.rel (0) target = $region17
  $region16: #{lenet_forward.1} parent=0 // pred_region
    _
  $region17: #{lenet_forward.1} parent=0 // pred_fallthru
    _
  // Predicated region
  $region18: #{lenet_forward.1} parent=0 // pred_check
    _
  $region19: #{lenet_forward.1} parent=0 // pred_check_branch
    %25 = sbr.rel (0) target = $region21
  $region20: #{lenet_forward.1} parent=0 // pred_region
    _
  $region21: #{lenet_forward.1} parent=0 // pred_fallthru
    _
  // Predicated region
  $region22: #{lenet_forward.1} parent=0 // pred_check
    _
  $region23: #{lenet_forward.1} parent=0 // pred_check_branch
    %27 = sbr.rel (0) target = $region25
  $region24: #{lenet_forward.1} parent=0 // pred_region
    _
  $region25: #{lenet_forward.1} parent=0 // pred_fallthru
    _
  // Predicated region
  $region26: #{lenet_forward.1} parent=0 // pred_check
    _
  $region27: #{lenet_forward.1} parent=0 // pred_check_branch
    %29 = sbr.rel (0) target = $region29
  $region28: #{lenet_forward.1} parent=0 // pred_region
    _
  $region29: #{lenet_forward.1} parent=0 // pred_fallthru
    _
  // Predicated region
  $region30: #{lenet_forward.1} parent=0 // pred_check
    _
  $region31: #{lenet_forward.1} parent=0 // pred_check_branch
    %31 = sbr.rel (0) target = $region33
  $region32: #{lenet_forward.1} parent=0 // pred_region
    _
  $region33: #{lenet_forward.1} parent=0 // pred_fallthru
    _
  // Predicated region
  $region34: #{lenet_forward.1} parent=0 // pred_check
    _
  $region35: #{lenet_forward.1} parent=0 // pred_check_branch
    %33 = sbr.rel (0) target = $region37
  $region36: #{lenet_forward.1} parent=0 // pred_region
    _
  $region37: #{lenet_forward.1} parent=0 // pred_fallthru
    _
  // Predicated region
  $region38: #{lenet_forward.1} parent=0 // pred_check
    _
  $region39: #{lenet_forward.1} parent=0 // pred_check_branch
    %35 = sbr.rel (0) target = $region41
  $region40: #{lenet_forward.1} parent=0 // pred_region
    _
  $region41: #{lenet_forward.1} parent=0 // pred_fallthru
    _
  // Predicated region
  $region42: #{lenet_forward.1} parent=0 // pred_check
    _
  $region43: #{lenet_forward.1} parent=0 // pred_check_branch
    %37 = sbr.rel (0) target = $region45
  $region44: #{lenet_forward.1} parent=0 // pred_region
    _
  $region45: #{lenet_forward.1} parent=0 // pred_fallthru
    _
  %39 = vst [vmem:[#allocation2] sm:$0xff] 0
  %40 = vst [vmem:[#allocation2 + $0x8] sm:$0xff] 0
  %41 = vst [vmem:[#allocation2 + $0x10] sm:$0xff] 0
  %42 = vst [vmem:[#allocation2 + $0x18] sm:$0xff] 0
  %43 = vst [vmem:[#allocation2 + $0x20] sm:$0xff] 0
  %44 = vst [vmem:[#allocation2 + $0x28] sm:$0xff] 0
  %v45 = vld [vmem:[%s0] sm:$0xff]
  %v46 = vld [vmem:[%s1] sm:$0xff]
  %v47 = vld [vmem:[%s1 + $0x8] sm:$0xf]
  %v48 = vld [vmem:[%s1 + $0xc] sm:$0xff]
  %v49 = vld [vmem:[%s1 + $0x14] sm:$0xf]
  %v50 = vld [vmem:[%s1 + $0x18] sm:$0xff]
  %v51 = vld [vmem:[%s1 + $0x20] sm:$0xf]
  %v52 = vld [vmem:[%s1 + $0x24] sm:$0xff]
  %v53 = vld [vmem:[%s1 + $0x2c] sm:$0xf]
  %v54 = vld [vmem:[%s1 + $0x30] sm:$0xff]
  %v55 = vld [vmem:[%s1 + $0x38] sm:$0xf]
  %v56 = vld [vmem:[%s1 + $0x3c] sm:$0xff]
  %v57 = vld [vmem:[%s1 + $0x44] sm:$0xf]
  %v58 = vld [vmem:[%s1 + $0x48] sm:$0xff]
  %v59 = vld [vmem:[%s1 + $0x50] sm:$0xf]
  %v60 = vld [vmem:[%s1 + $0x54] sm:$0xff]
  %v61 = vld [vmem:[%s1 + $0x5c] sm:$0xf]
  %v62 = vld [vmem:[%s1 + $0x60] sm:$0xff]
  %v63 = vld [vmem:[%s1 + $0x68] sm:$0xf]
  %v64 = vld [vmem:[%s1 + $0x6c] sm:$0xff]
  %v65 = vld [vmem:[%s1 + $0x74] sm:$0xf]
  %v66 = vld [vmem:[%s1 + $0x78] sm:$0xff]
  %v67 = vld [vmem:[%s1 + $0x80] sm:$0xf]
  %v68 = vld [vmem:[%s1 + $0x84] sm:$0xff]
  %v69 = vld [vmem:[%s1 + $0x8c] sm:$0xf]
  %v70 = vld [vmem:[%s1 + $0x90] sm:$0xff]
  %v71 = vld [vmem:[%s1 + $0x98] sm:$0xf]
  %v72 = vld [vmem:[%s1 + $0x9c] sm:$0xff]
  %v73 = vld [vmem:[%s1 + $0xa4] sm:$0xf]
  %v74 = vld [vmem:[%s1 + $0xa8] sm:$0xff]
  %v75 = vld [vmem:[%s1 + $0xb0] sm:$0xf]
  %v76 = vld [vmem:[%s1 + $0xb4] sm:$0xff]
  %v77 = vld [vmem:[%s1 + $0xbc] sm:$0xf]
  %v78 = vld [vmem:[%s1 + $0xc0] sm:$0xff]
  %v79 = vld [vmem:[%s1 + $0xc8] sm:$0xf]
  %v80 = vld [vmem:[%s1 + $0xcc] sm:$0xff]
  %v81 = vld [vmem:[%s1 + $0xd4] sm:$0xf]
  %v82 = vld [vmem:[%s1 + $0xd8] sm:$0xff]
  %v83 = vld [vmem:[%s1 + $0xe0] sm:$0xf]
  %v84 = vld [vmem:[%s1 + $0xe4] sm:$0xff]
  %v85 = vld [vmem:[%s1 + $0xec] sm:$0xf]
  %v86 = vld [vmem:[%s1 + $0xf0] sm:$0xff]
  %v87 = vld [vmem:[%s1 + $0xf8] sm:$0xf]
  %v89 = vunpack.c.l.b16 %v45
  %v90 = vunpack.c.h.b16 %v45
  %v91 = vpack.c.b16 %v89, %v89
  %v92 = vpack.c.b16 %v90, %v90
  %v136 = vunpack.c.l.b16 %v46
  %v137 = vunpack.c.h.b16 %v46
  %v138 = vunpack.c.l.b16 %v47
  %v139 = vunpack.c.l.b16 %v48
  %v140 = vunpack.c.h.b16 %v48
  %v141 = vunpack.c.l.b16 %v49
  %v142 = vunpack.c.l.b16 %v50
  %v143 = vunpack.c.h.b16 %v50
  %v144 = vunpack.c.l.b16 %v51
  %v145 = vunpack.c.l.b16 %v52
  %v146 = vunpack.c.h.b16 %v52
  %v147 = vunpack.c.l.b16 %v53
  %v148 = vunpack.c.l.b16 %v54
  %v149 = vunpack.c.h.b16 %v54
  %v150 = vunpack.c.l.b16 %v55
  %v151 = vunpack.c.l.b16 %v56
  %v152 = vunpack.c.h.b16 %v56
  %v153 = vunpack.c.l.b16 %v57
  %v154 = vunpack.c.l.b16 %v58
  %v155 = vunpack.c.h.b16 %v58
  %v156 = vunpack.c.l.b16 %v59
  %v157 = vunpack.c.l.b16 %v60
  %v158 = vunpack.c.h.b16 %v60
  %v159 = vunpack.c.l.b16 %v61
  %v160 = vunpack.c.l.b16 %v62
  %v161 = vunpack.c.h.b16 %v62
  %v162 = vunpack.c.l.b16 %v63
  %v163 = vunpack.c.l.b16 %v64
  %v164 = vunpack.c.h.b16 %v64
  %v165 = vunpack.c.l.b16 %v65
  %v166 = vunpack.c.l.b16 %v66
  %v167 = vunpack.c.h.b16 %v66
  %v168 = vunpack.c.l.b16 %v67
  %v169 = vunpack.c.l.b16 %v68
  %v170 = vunpack.c.h.b16 %v68
  %v171 = vunpack.c.l.b16 %v69
  %v172 = vunpack.c.l.b16 %v70
  %v173 = vunpack.c.h.b16 %v70
  %v174 = vunpack.c.l.b16 %v71
  %v175 = vunpack.c.l.b16 %v72
  %v176 = vunpack.c.h.b16 %v72
  %v177 = vunpack.c.l.b16 %v73
  %v178 = vunpack.c.l.b16 %v74
  %v179 = vunpack.c.h.b16 %v74
  %v180 = vunpack.c.l.b16 %v75
  %v181 = vunpack.c.l.b16 %v76
  %v182 = vunpack.c.h.b16 %v76
  %v183 = vunpack.c.l.b16 %v77
  %v184 = vunpack.c.l.b16 %v78
  %v185 = vunpack.c.h.b16 %v78
  %v186 = vunpack.c.l.b16 %v79
  %v187 = vunpack.c.l.b16 %v80
  %v188 = vunpack.c.h.b16 %v80
  %v189 = vunpack.c.l.b16 %v81
  %v190 = vunpack.c.l.b16 %v82
  %v191 = vunpack.c.h.b16 %v82
  %v192 = vunpack.c.l.b16 %v83
  %v193 = vunpack.c.l.b16 %v84
  %v194 = vunpack.c.h.b16 %v84
  %v195 = vunpack.c.l.b16 %v85
  %v196 = vunpack.c.l.b16 %v86
  %v197 = vunpack.c.h.b16 %v86
  %v198 = vunpack.c.l.b16 %v87
  %v199 = vpack.c.b16 %v139, %v136
  %v200 = vpack.c.b16 %v140, %v137
  %v201 = vpack.c.b16 %v141, %v138
  %v202 = vpack.c.b16 %v145, %v142
  %v203 = vpack.c.b16 %v146, %v143
  %v204 = vpack.c.b16 %v147, %v144
  %v205 = vpack.c.b16 %v151, %v148
  %v206 = vpack.c.b16 %v152, %v149
  %v207 = vpack.c.b16 %v153, %v150
  %v208 = vpack.c.b16 %v157, %v154
  %v209 = vpack.c.b16 %v158, %v155
  %v210 = vpack.c.b16 %v159, %v156
  %v211 = vpack.c.b16 %v163, %v160
  %v212 = vpack.c.b16 %v164, %v161
  %v213 = vpack.c.b16 %v165, %v162
  %v214 = vpack.c.b16 %v169, %v166
  %v215 = vpack.c.b16 %v170, %v167
  %v216 = vpack.c.b16 %v171, %v168
  %v217 = vpack.c.b16 %v175, %v172
  %v218 = vpack.c.b16 %v176, %v173
  %v219 = vpack.c.b16 %v177, %v174
  %v220 = vpack.c.b16 %v181, %v178
  %v221 = vpack.c.b16 %v182, %v179
  %v222 = vpack.c.b16 %v183, %v180
  %v223 = vpack.c.b16 %v187, %v184
  %v224 = vpack.c.b16 %v188, %v185
  %v225 = vpack.c.b16 %v189, %v186
  %v226 = vpack.c.b16 %v193, %v190
  %v227 = vpack.c.b16 %v194, %v191
  %v228 = vpack.c.b16 %v195, %v192
  %v229 = vpack.c.b16 %v196, %v196
  %v230 = vpack.c.b16 %v197, %v197
  %v231 = vpack.c.b16 %v198, %v198
  %vm262 = vcmask 326656
  %v264 = vsel %vm262, %v92, 0
  %vm266 = vcmask 1043456
  %v268 = vsel %vm266, %v229, 0
  %v271 = vsel %vm266, %v230, 0
  %v274 = vsel %vm266, %v231, 0
  %276 = vmatprep.subr.bf16.mxu0 %v221
  %277 = vmatpush1.bf16.msra.mxu0 %v220
  %278 = vmatprep.subr.bf16.mxu0 %v218
  %279 = vmatpush1.bf16.msra.mxu0 %v217
  %280 = vmatprep.subr.bf16.mxu0 %v215
  %281 = vmatpush1.bf16.msra.mxu0 %v214
  %282 = vmatprep.subr.bf16.mxu0 %v212
  %283 = vmatpush1.bf16.msra.mxu0 %v211
  %284 = vmatprep.subr.bf16.mxu0 %v209
  %285 = vmatpush1.bf16.msra.mxu0 %v208
  %286 = vmatprep.subr.bf16.mxu0 %v206
  %287 = vmatpush1.bf16.msra.mxu0 %v205
  %288 = vmatprep.subr.bf16.mxu0 %v203
  %289 = vmatpush1.bf16.msra.mxu0 %v202
  %290 = vmatprep.subr.bf16.mxu0 %v200
  %291 = vmatpush1.bf16.msra.mxu0 %v199
  %292 = vmatprep.subr.bf16.mxu0 0
  %293 = vmatpush2.bf16.msra.mxu0 0
  %294 = vmatprep.subr.bf16.mxu0 0
  %295 = vmatpush2.bf16.msra.mxu0 0
  %296 = vmatprep.subr.bf16.mxu0 0
  %297 = vmatpush2.bf16.msra.mxu0 0
  %298 = vmatprep.subr.bf16.mxu0 0
  %299 = vmatpush2.bf16.msra.mxu0 0
  %300 = vmatprep.subr.bf16.mxu0 0
  %301 = vmatpush2.bf16.msra.mxu0 0
  %302 = vmatprep.subr.bf16.mxu0 %v271
  %303 = vmatpush2.bf16.msra.mxu0 %v268
  %304 = vmatprep.subr.bf16.mxu0 %v227
  %305 = vmatpush2.bf16.msra.mxu0 %v226
  %306 = vmatprep.subr.bf16.mxu0 %v224
  %307 = vmatpush2.bf16.msra.mxu0 %v223
  %308 = vmatprep.mubr.bf16.mxu0 %v264
  %309 = vmatmul.mubr.bf16.gmra.mxu0 %v91
  %v310 = vpop.f32.mrf.mxu0
  %v311 = vadd.f32 0.0, %v310
  %v312 = vpop.f32.mrf.mxu0
  %v313 = vadd.f32 0.0, %v312
  %v314 = vpop.f32.mrf.mxu0
  %v315 = vpop.f32.mrf.mxu0
  %316 = vdwg.mxu0
  %317 = vmatprep.subr.bf16.mxu0 0
  %318 = vmatpush1.bf16.msra.mxu0 %v222
  %319 = vmatprep.subr.bf16.mxu0 0
  %320 = vmatpush1.bf16.msra.mxu0 %v219
  %321 = vmatprep.subr.bf16.mxu0 0
  %322 = vmatpush1.bf16.msra.mxu0 %v216
  %323 = vmatprep.subr.bf16.mxu0 0
  %324 = vmatpush1.bf16.msra.mxu0 %v213
  %325 = vmatprep.subr.bf16.mxu0 0
  %326 = vmatpush1.bf16.msra.mxu0 %v210
  %327 = vmatprep.subr.bf16.mxu0 0
  %328 = vmatpush1.bf16.msra.mxu0 %v207
  %329 = vmatprep.subr.bf16.mxu0 0
  %330 = vmatpush1.bf16.msra.mxu0 %v204
  %331 = vmatprep.subr.bf16.mxu0 0
  %332 = vmatpush1.bf16.msra.mxu0 %v201
  %333 = vmatprep.subr.bf16.mxu0 0
  %334 = vmatpush2.bf16.msra.mxu0 0
  %335 = vmatprep.subr.bf16.mxu0 0
  %336 = vmatpush2.bf16.msra.mxu0 0
  %337 = vmatprep.subr.bf16.mxu0 0
  %338 = vmatpush2.bf16.msra.mxu0 0
  %339 = vmatprep.subr.bf16.mxu0 0
  %340 = vmatpush2.bf16.msra.mxu0 0
  %341 = vmatprep.subr.bf16.mxu0 0
  %342 = vmatpush2.bf16.msra.mxu0 0
  %343 = vmatprep.subr.bf16.mxu0 0
  %344 = vmatpush2.bf16.msra.mxu0 %v274
  %345 = vmatprep.subr.bf16.mxu0 0
  %346 = vmatpush2.bf16.msra.mxu0 %v228
  %347 = vmatprep.subr.bf16.mxu0 0
  %348 = vmatpush2.bf16.msra.mxu0 %v225
  %349 = vmatprep.mubr.bf16.mxu0 %v264
  %350 = vmatmul.mubr.bf16.gmra.mxu0 %v91
  %v351 = vpop.f32.mrf.mxu0
  %v352 = vadd.f32 0.0, %v351
  %v353 = vpop.f32.mrf.mxu0
  %v354 = vpop.f32.mrf.mxu0
  %v355 = vpop.f32.mrf.mxu0
  %356 = vdwg.mxu0
  %359 = vrot.lane.b32.xlu0 %v313, 112
  %v360 = vpop.permute.xlu0 %359
  %361 = vrot.lane.b32.xlu0 %v352, 112
  %v362 = vpop.permute.xlu0 %361
  %vm363 = vcmask 916480
  %v364 = vsel %vm363, %v360, %v362
  %v367 = vmax.f32 %v311, %v364
  %v368 = vmax.f32 %v313, %v362
  %371 = vrot.lane.b32.xlu0 %v367, 56
  %v372 = vpop.permute.xlu0 %371
  %373 = vrot.lane.b32.xlu0 %v368, 56
  %v374 = vpop.permute.xlu0 %373
  %vm375 = vcmask 457728
  %v376 = vsel %vm375, %v372, %v374
  %v378 = vmax.f32 %v367, %v376
  %v379 = vld [vmem:[%s2] sm:$0x1]
  %v381 = vlaneseq
  %v382 = vshrl.u32 %v381, 7
  %v383 = vsub.s32 0, %v382
  %v384 = vrot.slane %v379, %v383
  %v386 = vadd.f32 %v378, %v384
  %v387 = vsub.f32 0.0, %v386
  %v388 = vmul.f32 %v387, 1.442695
  %v389 = vpow.pop %v388
  %v390 = vadd.f32 %v389, 1.0
  %v391 = vrcp.pop %v390
  %v392 = vpack.c.bf16 %v391, %v391
  %vm393 = vcmask 584704
  %394 = vst.msk [vmem:[#allocation2] sm:$0xf] %vm393, %v392
  %v395 = vld [vmem:[%s0] sm:$0xff]
  %v396 = vld [vmem:[%s1] sm:$0xff]
  %v397 = vld [vmem:[%s1 + $0x8] sm:$0xf]
  %v398 = vld [vmem:[%s1 + $0xc] sm:$0xff]
  %v399 = vld [vmem:[%s1 + $0x14] sm:$0xf]
  %v400 = vld [vmem:[%s1 + $0x18] sm:$0xff]
  %v401 = vld [vmem:[%s1 + $0x20] sm:$0xf]
  %v402 = vld [vmem:[%s1 + $0x24] sm:$0xff]
  %v403 = vld [vmem:[%s1 + $0x2c] sm:$0xf]
  %v404 = vld [vmem:[%s1 + $0x30] sm:$0xff]
  %v405 = vld [vmem:[%s1 + $0x38] sm:$0xf]
  %v406 = vld [vmem:[%s1 + $0x3c] sm:$0xff]
  %v407 = vld [vmem:[%s1 + $0x44] sm:$0xf]
  %v408 = vld [vmem:[%s1 + $0x48] sm:$0xff]
  %v409 = vld [vmem:[%s1 + $0x50] sm:$0xf]
  %v410 = vld [vmem:[%s1 + $0x54] sm:$0xff]
  %v411 = vld [vmem:[%s1 + $0x5c] sm:$0xf]
  %v412 = vld [vmem:[%s1 + $0x60] sm:$0xff]
  %v413 = vld [vmem:[%s1 + $0x68] sm:$0xf]
  %v414 = vld [vmem:[%s1 + $0x6c] sm:$0xff]
  %v415 = vld [vmem:[%s1 + $0x74] sm:$0xf]
  %v416 = vld [vmem:[%s1 + $0x78] sm:$0xff]
  %v417 = vld [vmem:[%s1 + $0x80] sm:$0xf]
  %v418 = vld [vmem:[%s1 + $0x84] sm:$0xff]
  %v419 = vld [vmem:[%s1 + $0x8c] sm:$0xf]
  %v420 = vld [vmem:[%s1 + $0x90] sm:$0xff]
  %v421 = vld [vmem:[%s1 + $0x98] sm:$0xf]
  %v422 = vld [vmem:[%s1 + $0x9c] sm:$0xff]
  %v423 = vld [vmem:[%s1 + $0xa4] sm:$0xf]
  %v424 = vld [vmem:[%s1 + $0xa8] sm:$0xff]
  %v425 = vld [vmem:[%s1 + $0xb0] sm:$0xf]
  %v426 = vld [vmem:[%s1 + $0xb4] sm:$0xff]
  %v427 = vld [vmem:[%s1 + $0xbc] sm:$0xf]
  %v428 = vld [vmem:[%s1 + $0xc0] sm:$0xff]
  %v429 = vld [vmem:[%s1 + $0xc8] sm:$0xf]
  %v430 = vld [vmem:[%s1 + $0xcc] sm:$0xff]
  %v431 = vld [vmem:[%s1 + $0xd4] sm:$0xf]
  %v432 = vld [vmem:[%s1 + $0xd8] sm:$0xff]
  %v433 = vld [vmem:[%s1 + $0xe0] sm:$0xf]
  %v434 = vld [vmem:[%s1 + $0xe4] sm:$0xff]
  %v435 = vld [vmem:[%s1 + $0xec] sm:$0xf]
  %v436 = vld [vmem:[%s1 + $0xf0] sm:$0xff]
  %v437 = vld [vmem:[%s1 + $0xf8] sm:$0xf]
  %v439 = vunpack.c.l.b16 %v395
  %v440 = vunpack.c.h.b16 %v395
  %v441 = vpack.c.b16 %v439, %v439
  %v442 = vpack.c.b16 %v440, %v440
  %443 = vrot.lane.b32.xlu0 %v441, 72
  %v444 = vpop.permute.xlu0 %443
  %445 = vrot.lane.b32.xlu0 %v442, 72
  %v446 = vpop.permute.xlu0 %445
  %vm447 = vcmask 588800
  %v448 = vsel %vm447, %v444, %v446
  %v492 = vunpack.c.l.b16 %v396
  %v493 = vunpack.c.h.b16 %v396
  %v494 = vunpack.c.l.b16 %v397
  %v495 = vunpack.c.l.b16 %v398
  %v496 = vunpack.c.h.b16 %v398
  %v497 = vunpack.c.l.b16 %v399
  %v498 = vunpack.c.l.b16 %v400
  %v499 = vunpack.c.h.b16 %v400
  %v500 = vunpack.c.l.b16 %v401
  %v501 = vunpack.c.l.b16 %v402
  %v502 = vunpack.c.h.b16 %v402
  %v503 = vunpack.c.l.b16 %v403
  %v504 = vunpack.c.l.b16 %v404
  %v505 = vunpack.c.h.b16 %v404
  %v506 = vunpack.c.l.b16 %v405
  %v507 = vunpack.c.l.b16 %v406
  %v508 = vunpack.c.h.b16 %v406
  %v509 = vunpack.c.l.b16 %v407
  %v510 = vunpack.c.l.b16 %v408
  %v511 = vunpack.c.h.b16 %v408
  %v512 = vunpack.c.l.b16 %v409
  %v513 = vunpack.c.l.b16 %v410
  %v514 = vunpack.c.h.b16 %v410
  %v515 = vunpack.c.l.b16 %v411
  %v516 = vunpack.c.l.b16 %v412
  %v517 = vunpack.c.h.b16 %v412
  %v518 = vunpack.c.l.b16 %v413
  %v519 = vunpack.c.l.b16 %v414
  %v520 = vunpack.c.h.b16 %v414
  %v521 = vunpack.c.l.b16 %v415
  %v522 = vunpack.c.l.b16 %v416
  %v523 = vunpack.c.h.b16 %v416
  %v524 = vunpack.c.l.b16 %v417
  %v525 = vunpack.c.l.b16 %v418
  %v526 = vunpack.c.h.b16 %v418
  %v527 = vunpack.c.l.b16 %v419
  %v528 = vunpack.c.l.b16 %v420
  %v529 = vunpack.c.h.b16 %v420
  %v530 = vunpack.c.l.b16 %v421
  %v531 = vunpack.c.l.b16 %v422
  %v532 = vunpack.c.h.b16 %v422
  %v533 = vunpack.c.l.b16 %v423
  %v534 = vunpack.c.l.b16 %v424
  %v535 = vunpack.c.h.b16 %v424
  %v536 = vunpack.c.l.b16 %v425
  %v537 = vunpack.c.l.b16 %v426
  %v538 = vunpack.c.h.b16 %v426
  %v539 = vunpack.c.l.b16 %v427
  %v540 = vunpack.c.l.b16 %v428
  %v541 = vunpack.c.h.b16 %v428
  %v542 = vunpack.c.l.b16 %v429
  %v543 = vunpack.c.l.b16 %v430
  %v544 = vunpack.c.h.b16 %v430
  %v545 = vunpack.c.l.b16 %v431
  %v546 = vunpack.c.l.b16 %v432
  %v547 = vunpack.c.h.b16 %v432
  %v548 = vunpack.c.l.b16 %v433
  %v549 = vunpack.c.l.b16 %v434
  %v550 = vunpack.c.h.b16 %v434
  %v551 = vunpack.c.l.b16 %v435
  %v552 = vunpack.c.l.b16 %v436
  %v553 = vunpack.c.h.b16 %v436
  %v554 = vunpack.c.l.b16 %v437
  %v555 = vpack.c.b16 %v495, %v492
  %v556 = vpack.c.b16 %v496, %v493
  %v557 = vpack.c.b16 %v497, %v494
  %v558 = vpack.c.b16 %v501, %v498
  %v559 = vpack.c.b16 %v502, %v499
  %v560 = vpack.c.b16 %v503, %v500
  %v561 = vpack.c.b16 %v507, %v504
  %v562 = vpack.c.b16 %v508, %v505
  %v563 = vpack.c.b16 %v509, %v506
  %v564 = vpack.c.b16 %v513, %v510
  %v565 = vpack.c.b16 %v514, %v511
  %v566 = vpack.c.b16 %v515, %v512
  %v567 = vpack.c.b16 %v519, %v516
  %v568 = vpack.c.b16 %v520, %v517
  %v569 = vpack.c.b16 %v521, %v518
  %v570 = vpack.c.b16 %v525, %v522
  %v571 = vpack.c.b16 %v526, %v523
  %v572 = vpack.c.b16 %v527, %v524
  %v573 = vpack.c.b16 %v531, %v528
  %v574 = vpack.c.b16 %v532, %v529
  %v575 = vpack.c.b16 %v533, %v530
  %v576 = vpack.c.b16 %v537, %v534
  %v577 = vpack.c.b16 %v538, %v535
  %v578 = vpack.c.b16 %v539, %v536
  %v579 = vpack.c.b16 %v543, %v540
  %v580 = vpack.c.b16 %v544, %v541
  %v581 = vpack.c.b16 %v545, %v542
  %v582 = vpack.c.b16 %v549, %v546
  %v583 = vpack.c.b16 %v550, %v547
  %v584 = vpack.c.b16 %v551, %v548
  %v585 = vpack.c.b16 %v552, %v552
  %v586 = vpack.c.b16 %v553, %v553
  %v587 = vpack.c.b16 %v554, %v554
  %v619 = vsel %vm262, %v446, 0
  %v622 = vsel %vm266, %v585, 0
  %v625 = vsel %vm266, %v586, 0
  %v628 = vsel %vm266, %v587, 0
  %630 = vmatprep.subr.bf16.mxu0 %v577
  %631 = vmatpush1.bf16.msra.mxu0 %v576
  %632 = vmatprep.subr.bf16.mxu0 %v574
  %633 = vmatpush1.bf16.msra.mxu0 %v573
  %634 = vmatprep.subr.bf16.mxu0 %v571
  %635 = vmatpush1.bf16.msra.mxu0 %v570
  %636 = vmatprep.subr.bf16.mxu0 %v568
  %637 = vmatpush1.bf16.msra.mxu0 %v567
  %638 = vmatprep.subr.bf16.mxu0 %v565
  %639 = vmatpush1.bf16.msra.mxu0 %v564
  %640 = vmatprep.subr.bf16.mxu0 %v562
  %641 = vmatpush1.bf16.msra.mxu0 %v561
  %642 = vmatprep.subr.bf16.mxu0 %v559
  %643 = vmatpush1.bf16.msra.mxu0 %v558
  %644 = vmatprep.subr.bf16.mxu0 %v556
  %645 = vmatpush1.bf16.msra.mxu0 %v555
  %646 = vmatprep.subr.bf16.mxu0 0
  %647 = vmatpush2.bf16.msra.mxu0 0
  %648 = vmatprep.subr.bf16.mxu0 0
  %649 = vmatpush2.bf16.msra.mxu0 0
  %650 = vmatprep.subr.bf16.mxu0 0
  %651 = vmatpush2.bf16.msra.mxu0 0
  %652 = vmatprep.subr.bf16.mxu0 0
  %653 = vmatpush2.bf16.msra.mxu0 0
  %654 = vmatprep.subr.bf16.mxu0 0
  %655 = vmatpush2.bf16.msra.mxu0 0
  %656 = vmatprep.subr.bf16.mxu0 %v625
  %657 = vmatpush2.bf16.msra.mxu0 %v622
  %658 = vmatprep.subr.bf16.mxu0 %v583
  %659 = vmatpush2.bf16.msra.mxu0 %v582
  %660 = vmatprep.subr.bf16.mxu0 %v580
  %661 = vmatpush2.bf16.msra.mxu0 %v579
  %662 = vmatprep.mubr.bf16.mxu0 %v619
  %663 = vmatmul.mubr.bf16.gmra.mxu0 %v448
  %v664 = vpop.f32.mrf.mxu0
  %v665 = vadd.f32 0.0, %v664
  %v666 = vpop.f32.mrf.mxu0
  %v667 = vadd.f32 0.0, %v666
  %v668 = vpop.f32.mrf.mxu0
  %v669 = vpop.f32.mrf.mxu0
  %670 = vdwg.mxu0
  %671 = vmatprep.subr.bf16.mxu0 0
  %672 = vmatpush1.bf16.msra.mxu0 %v578
  %673 = vmatprep.subr.bf16.mxu0 0
  %674 = vmatpush1.bf16.msra.mxu0 %v575
  %675 = vmatprep.subr.bf16.mxu0 0
  %676 = vmatpush1.bf16.msra.mxu0 %v572
  %677 = vmatprep.subr.bf16.mxu0 0
  %678 = vmatpush1.bf16.msra.mxu0 %v569
  %679 = vmatprep.subr.bf16.mxu0 0
  %680 = vmatpush1.bf16.msra.mxu0 %v566
  %681 = vmatprep.subr.bf16.mxu0 0
  %682 = vmatpush1.bf16.msra.mxu0 %v563
  %683 = vmatprep.subr.bf16.mxu0 0
  %684 = vmatpush1.bf16.msra.mxu0 %v560
  %685 = vmatprep.subr.bf16.mxu0 0
  %686 = vmatpush1.bf16.msra.mxu0 %v557
  %687 = vmatprep.subr.bf16.mxu0 0
  %688 = vmatpush2.bf16.msra.mxu0 0
  %689 = vmatprep.subr.bf16.mxu0 0
  %690 = vmatpush2.bf16.msra.mxu0 0
  %691 = vmatprep.subr.bf16.mxu0 0
  %692 = vmatpush2.bf16.msra.mxu0 0
  %693 = vmatprep.subr.bf16.mxu0 0
  %694 = vmatpush2.bf16.msra.mxu0 0
  %695 = vmatprep.subr.bf16.mxu0 0
  %696 = vmatpush2.bf16.msra.mxu0 0
  %697 = vmatprep.subr.bf16.mxu0 0
  %698 = vmatpush2.bf16.msra.mxu0 %v628
  %699 = vmatprep.subr.bf16.mxu0 0
  %700 = vmatpush2.bf16.msra.mxu0 %v584
  %701 = vmatprep.subr.bf16.mxu0 0
  %702 = vmatpush2.bf16.msra.mxu0 %v581
  %703 = vmatprep.mubr.bf16.mxu0 %v619
  %704 = vmatmul.mubr.bf16.gmra.mxu0 %v448
  %v705 = vpop.f32.mrf.mxu0
  %v706 = vadd.f32 0.0, %v705
  %v707 = vpop.f32.mrf.mxu0
  %v708 = vpop.f32.mrf.mxu0
  %v709 = vpop.f32.mrf.mxu0
  %710 = vdwg.mxu0
  %713 = vrot.lane.b32.xlu0 %v667, 112
  %v714 = vpop.permute.xlu0 %713
  %715 = vrot.lane.b32.xlu0 %v706, 112
  %v716 = vpop.permute.xlu0 %715
  %v717 = vsel %vm363, %v714, %v716
  %v720 = vmax.f32 %v665, %v717
  %v721 = vmax.f32 %v667, %v716
  %724 = vrot.lane.b32.xlu0 %v720, 56
  %v725 = vpop.permute.xlu0 %724
  %726 = vrot.lane.b32.xlu0 %v721, 56
  %v727 = vpop.permute.xlu0 %726
  %v728 = vsel %vm375, %v725, %v727
  %v730 = vmax.f32 %v720, %v728
  %v731 = vld [vmem:[%s2] sm:$0x1]
  %v733 = vlaneseq
  %v734 = vshrl.u32 %v733, 7
  %v735 = vsub.s32 0, %v734
  %v736 = vrot.slane %v731, %v735
  %v738 = vadd.f32 %v730, %v736
  %v739 = vsub.f32 0.0, %v738
  %v740 = vmul.f32 %v739, 1.442695
  %v741 = vpow.pop %v740
  %v742 = vadd.f32 %v741, 1.0
  %v743 = vrcp.pop %v742
  %v744 = vpack.c.bf16 %v743, %v743
  %745 = vst.msk [vmem:[#allocation2 + $0x4] sm:$0xf] %vm393, %v744
  %v746 = vld [vmem:[%s0] sm:$0xff]
  %v747 = vld [vmem:[%s0 + $0x8] sm:$0xf]
  %v748 = vld [vmem:[%s1] sm:$0xff]
  %v749 = vld [vmem:[%s1 + $0x8] sm:$0xf]
  %v750 = vld [vmem:[%s1 + $0xc] sm:$0xff]
  %v751 = vld [vmem:[%s1 + $0x14] sm:$0xf]
  %v752 = vld [vmem:[%s1 + $0x18] sm:$0xff]
  %v753 = vld [vmem:[%s1 + $0x20] sm:$0xf]
  %v754 = vld [vmem:[%s1 + $0x24] sm:$0xff]
  %v755 = vld [vmem:[%s1 + $0x2c] sm:$0xf]
  %v756 = vld [vmem:[%s1 + $0x30] sm:$0xff]
  %v757 = vld [vmem:[%s1 + $0x38] sm:$0xf]
  %v758 = vld [vmem:[%s1 + $0x3c] sm:$0xff]
  %v759 = vld [vmem:[%s1 + $0x44] sm:$0xf]
  %v760 = vld [vmem:[%s1 + $0x48] sm:$0xff]
  %v761 = vld [vmem:[%s1 + $0x50] sm:$0xf]
  %v762 = vld [vmem:[%s1 + $0x54] sm:$0xff]
  %v763 = vld [vmem:[%s1 + $0x5c] sm:$0xf]
  %v764 = vld [vmem:[%s1 + $0x60] sm:$0xff]
  %v765 = vld [vmem:[%s1 + $0x68] sm:$0xf]
  %v766 = vld [vmem:[%s1 + $0x6c] sm:$0xff]
  %v767 = vld [vmem:[%s1 + $0x74] sm:$0xf]
  %v768 = vld [vmem:[%s1 + $0x78] sm:$0xff]
  %v769 = vld [vmem:[%s1 + $0x80] sm:$0xf]
  %v770 = vld [vmem:[%s1 + $0x84] sm:$0xff]
  %v771 = vld [vmem:[%s1 + $0x8c] sm:$0xf]
  %v772 = vld [vmem:[%s1 + $0x90] sm:$0xff]
  %v773 = vld [vmem:[%s1 + $0x98] sm:$0xf]
  %v774 = vld [vmem:[%s1 + $0x9c] sm:$0xff]
  %v775 = vld [vmem:[%s1 + $0xa4] sm:$0xf]
  %v776 = vld [vmem:[%s1 + $0xa8] sm:$0xff]
  %v777 = vld [vmem:[%s1 + $0xb0] sm:$0xf]
  %v778 = vld [vmem:[%s1 + $0xb4] sm:$0xff]
  %v779 = vld [vmem:[%s1 + $0xbc] sm:$0xf]
  %v780 = vld [vmem:[%s1 + $0xc0] sm:$0xff]
  %v781 = vld [vmem:[%s1 + $0xc8] sm:$0xf]
  %v782 = vld [vmem:[%s1 + $0xcc] sm:$0xff]
  %v783 = vld [vmem:[%s1 + $0xd4] sm:$0xf]
  %v784 = vld [vmem:[%s1 + $0xd8] sm:$0xff]
  %v785 = vld [vmem:[%s1 + $0xe0] sm:$0xf]
  %v786 = vld [vmem:[%s1 + $0xe4] sm:$0xff]
  %v787 = vld [vmem:[%s1 + $0xec] sm:$0xf]
  %v788 = vld [vmem:[%s1 + $0xf0] sm:$0xff]
  %v789 = vld [vmem:[%s1 + $0xf8] sm:$0xf]
  %v792 = vunpack.c.l.b16 %v746
  %v793 = vunpack.c.h.b16 %v746
  %v794 = vunpack.c.l.b16 %v747
  %v795 = vpack.c.b16 %v792, %v792
  %v796 = vpack.c.b16 %v793, %v793
  %v797 = vpack.c.b16 %v794, %v794
  %798 = vrot.lane.b32.xlu0 %v795, 16
  %v799 = vpop.permute.xlu0 %798
  %800 = vrot.lane.b32.xlu0 %v796, 16
  %v801 = vpop.permute.xlu0 %800
  %802 = vrot.lane.b32.xlu0 %v797, 16
  %v803 = vpop.permute.xlu0 %802
  %vm804 = vcmask 130048
  %v805 = vsel %vm804, %v799, %v801
  %v806 = vsel %vm804, %v801, %v803
  %v850 = vunpack.c.l.b16 %v748
  %v851 = vunpack.c.h.b16 %v748
  %v852 = vunpack.c.l.b16 %v749
  %v853 = vunpack.c.l.b16 %v750
  %v854 = vunpack.c.h.b16 %v750
  %v855 = vunpack.c.l.b16 %v751
  %v856 = vunpack.c.l.b16 %v752
  %v857 = vunpack.c.h.b16 %v752
  %v858 = vunpack.c.l.b16 %v753
  %v859 = vunpack.c.l.b16 %v754
  %v860 = vunpack.c.h.b16 %v754
  %v861 = vunpack.c.l.b16 %v755
  %v862 = vunpack.c.l.b16 %v756
  %v863 = vunpack.c.h.b16 %v756
  %v864 = vunpack.c.l.b16 %v757
  %v865 = vunpack.c.l.b16 %v758
  %v866 = vunpack.c.h.b16 %v758
  %v867 = vunpack.c.l.b16 %v759
  %v868 = vunpack.c.l.b16 %v760
  %v869 = vunpack.c.h.b16 %v760
  %v870 = vunpack.c.l.b16 %v761
  %v871 = vunpack.c.l.b16 %v762
  %v872 = vunpack.c.h.b16 %v762
  %v873 = vunpack.c.l.b16 %v763
  %v874 = vunpack.c.l.b16 %v764
  %v875 = vunpack.c.h.b16 %v764
  %v876 = vunpack.c.l.b16 %v765
  %v877 = vunpack.c.l.b16 %v766
  %v878 = vunpack.c.h.b16 %v766
  %v879 = vunpack.c.l.b16 %v767
  %v880 = vunpack.c.l.b16 %v768
  %v881 = vunpack.c.h.b16 %v768
  %v882 = vunpack.c.l.b16 %v769
  %v883 = vunpack.c.l.b16 %v770
  %v884 = vunpack.c.h.b16 %v770
  %v885 = vunpack.c.l.b16 %v771
  %v886 = vunpack.c.l.b16 %v772
  %v887 = vunpack.c.h.b16 %v772
  %v888 = vunpack.c.l.b16 %v773
  %v889 = vunpack.c.l.b16 %v774
  %v890 = vunpack.c.h.b16 %v774
  %v891 = vunpack.c.l.b16 %v775
  %v892 = vunpack.c.l.b16 %v776
  %v893 = vunpack.c.h.b16 %v776
  %v894 = vunpack.c.l.b16 %v777
  %v895 = vunpack.c.l.b16 %v778
  %v896 = vunpack.c.h.b16 %v778
  %v897 = vunpack.c.l.b16 %v779
  %v898 = vunpack.c.l.b16 %v780
  %v899 = vunpack.c.h.b16 %v780
  %v900 = vunpack.c.l.b16 %v781
  %v901 = vunpack.c.l.b16 %v782
  %v902 = vunpack.c.h.b16 %v782
  %v903 = vunpack.c.l.b16 %v783
  %v904 = vunpack.c.l.b16 %v784
  %v905 = vunpack.c.h.b16 %v784
  %v906 = vunpack.c.l.b16 %v785
  %v907 = vunpack.c.l.b16 %v786
  %v908 = vunpack.c.h.b16 %v786
  %v909 = vunpack.c.l.b16 %v787
  %v910 = vunpack.c.l.b16 %v788
  %v911 = vunpack.c.h.b16 %v788
  %v912 = vunpack.c.l.b16 %v789
  %v913 = vpack.c.b16 %v853, %v850
  %v914 = vpack.c.b16 %v854, %v851
  %v915 = vpack.c.b16 %v855, %v852
  %v916 = vpack.c.b16 %v859, %v856
  %v917 = vpack.c.b16 %v860, %v857
  %v918 = vpack.c.b16 %v861, %v858
  %v919 = vpack.c.b16 %v865, %v862
  %v920 = vpack.c.b16 %v866, %v863
  %v921 = vpack.c.b16 %v867, %v864
  %v922 = vpack.c.b16 %v871, %v868
  %v923 = vpack.c.b16 %v872, %v869
  %v924 = vpack.c.b16 %v873, %v870
  %v925 = vpack.c.b16 %v877, %v874
  %v926 = vpack.c.b16 %v878, %v875
  %v927 = vpack.c.b16 %v879, %v876
  %v928 = vpack.c.b16 %v883, %v880
  %v929 = vpack.c.b16 %v884, %v881
  %v930 = vpack.c.b16 %v885, %v882
  %v931 = vpack.c.b16 %v889, %v886
  %v932 = vpack.c.b16 %v890, %v887
  %v933 = vpack.c.b16 %v891, %v888
  %v934 = vpack.c.b16 %v895, %v892
  %v935 = vpack.c.b16 %v896, %v893
  %v936 = vpack.c.b16 %v897, %v894
  %v937 = vpack.c.b16 %v901, %v898
  %v938 = vpack.c.b16 %v902, %v899
  %v939 = vpack.c.b16 %v903, %v900
  %v940 = vpack.c.b16 %v907, %v904
  %v941 = vpack.c.b16 %v908, %v905
  %v942 = vpack.c.b16 %v909, %v906
  %v943 = vpack.c.b16 %v910, %v910
  %v944 = vpack.c.b16 %v911, %v911
  %v945 = vpack.c.b16 %v912, %v912
  %v977 = vsel %vm262, %v806, 0
  %v980 = vsel %vm266, %v943, 0
  %v983 = vsel %vm266, %v944, 0
  %v986 = vsel %vm266, %v945, 0
  %988 = vmatprep.subr.bf16.mxu0 %v935
  %989 = vmatpush1.bf16.msra.mxu0 %v934
  %990 = vmatprep.subr.bf16.mxu0 %v932
  %991 = vmatpush1.bf16.msra.mxu0 %v931
  %992 = vmatprep.subr.bf16.mxu0 %v929
  %993 = vmatpush1.bf16.msra.mxu0 %v928
  %994 = vmatprep.subr.bf16.mxu0 %v926
  %995 = vmatpush1.bf16.msra.mxu0 %v925
  %996 = vmatprep.subr.bf16.mxu0 %v923
  %997 = vmatpush1.bf16.msra.mxu0 %v922
  %998 = vmatprep.subr.bf16.mxu0 %v920
  %999 = vmatpush1.bf16.msra.mxu0 %v919
  %1000 = vmatprep.subr.bf16.mxu0 %v917
  %1001 = vmatpush1.bf16.msra.mxu0 %v916
  %1002 = vmatprep.subr.bf16.mxu0 %v914
  %1003 = vmatpush1.bf16.msra.mxu0 %v913
  %1004 = vmatprep.subr.bf16.mxu0 0
  %1005 = vmatpush2.bf16.msra.mxu0 0
  %1006 = vmatprep.subr.bf16.mxu0 0
  %1007 = vmatpush2.bf16.msra.mxu0 0
  %1008 = vmatprep.subr.bf16.mxu0 0
  %1009 = vmatpush2.bf16.msra.mxu0 0
  %1010 = vmatprep.subr.bf16.mxu0 0
  %1011 = vmatpush2.bf16.msra.mxu0 0
  %1012 = vmatprep.subr.bf16.mxu0 0
  %1013 = vmatpush2.bf16.msra.mxu0 0
  %1014 = vmatprep.subr.bf16.mxu0 %v983
  %1015 = vmatpush2.bf16.msra.mxu0 %v980
  %1016 = vmatprep.subr.bf16.mxu0 %v941
  %1017 = vmatpush2.bf16.msra.mxu0 %v940
  %1018 = vmatprep.subr.bf16.mxu0 %v938
  %1019 = vmatpush2.bf16.msra.mxu0 %v937
  %1020 = vmatprep.mubr.bf16.mxu0 %v977
  %1021 = vmatmul.mubr.bf16.gmra.mxu0 %v805
  %v1022 = vpop.f32.mrf.mxu0
  %v1023 = vadd.f32 0.0, %v1022
  %v1024 = vpop.f32.mrf.mxu0
  %v1025 = vadd.f32 0.0, %v1024
  %v1026 = vpop.f32.mrf.mxu0
  %v1027 = vpop.f32.mrf.mxu0
  %1028 = vdwg.mxu0
  %1029 = vmatprep.subr.bf16.mxu0 0
  %1030 = vmatpush1.bf16.msra.mxu0 %v936
  %1031 = vmatprep.subr.bf16.mxu0 0
  %1032 = vmatpush1.bf16.msra.mxu0 %v933
  %1033 = vmatprep.subr.bf16.mxu0 0
  %1034 = vmatpush1.bf16.msra.mxu0 %v930
  %1035 = vmatprep.subr.bf16.mxu0 0
  %1036 = vmatpush1.bf16.msra.mxu0 %v927
  %1037 = vmatprep.subr.bf16.mxu0 0
  %1038 = vmatpush1.bf16.msra.mxu0 %v924
  %1039 = vmatprep.subr.bf16.mxu0 0
  %1040 = vmatpush1.bf16.msra.mxu0 %v921
  %1041 = vmatprep.subr.bf16.mxu0 0
  %1042 = vmatpush1.bf16.msra.mxu0 %v918
  %1043 = vmatprep.subr.bf16.mxu0 0
  %1044 = vmatpush1.bf16.msra.mxu0 %v915
  %1045 = vmatprep.subr.bf16.mxu0 0
  %1046 = vmatpush2.bf16.msra.mxu0 0
  %1047 = vmatprep.subr.bf16.mxu0 0
  %1048 = vmatpush2.bf16.msra.mxu0 0
  %1049 = vmatprep.subr.bf16.mxu0 0
  %1050 = vmatpush2.bf16.msra.mxu0 0
  %1051 = vmatprep.subr.bf16.mxu0 0
  %1052 = vmatpush2.bf16.msra.mxu0 0
  %1053 = vmatprep.subr.bf16.mxu0 0
  %1054 = vmatpush2.bf16.msra.mxu0 0
  %1055 = vmatprep.subr.bf16.mxu0 0
  %1056 = vmatpush2.bf16.msra.mxu0 %v986
  %1057 = vmatprep.subr.bf16.mxu0 0
  %1058 = vmatpush2.bf16.msra.mxu0 %v942
  %1059 = vmatprep.subr.bf16.mxu0 0
  %1060 = vmatpush2.bf16.msra.mxu0 %v939
  %1061 = vmatprep.mubr.bf16.mxu0 %v977
  %1062 = vmatmul.mubr.bf16.gmra.mxu0 %v805
  %v1063 = vpop.f32.mrf.mxu0
  %v1064 = vadd.f32 0.0, %v1063
  %v1065 = vpop.f32.mrf.mxu0
  %v1066 = vpop.f32.mrf.mxu0
  %v1067 = vpop.f32.mrf.mxu0
  %1068 = vdwg.mxu0
  %1071 = vrot.lane.b32.xlu0 %v1025, 112
  %v1072 = vpop.permute.xlu0 %1071
  %1073 = vrot.lane.b32.xlu0 %v1064, 112
  %v1074 = vpop.permute.xlu0 %1073
  %v1075 = vsel %vm363, %v1072, %v1074
  %v1078 = vmax.f32 %v1023, %v1075
  %v1079 = vmax.f32 %v1025, %v1074
  %1082 = vrot.lane.b32.xlu0 %v1078, 56
  %v1083 = vpop.permute.xlu0 %1082
  %1084 = vrot.lane.b32.xlu0 %v1079, 56
  %v1085 = vpop.permute.xlu0 %1084
  %v1086 = vsel %vm375, %v1083, %v1085
  %v1088 = vmax.f32 %v1078, %v1086
  %v1089 = vld [vmem:[%s2] sm:$0x1]
  %v1091 = vlaneseq
  %v1092 = vshrl.u32 %v1091, 7
  %v1093 = vsub.s32 0, %v1092
  %v1094 = vrot.slane %v1089, %v1093
  %v1096 = vadd.f32 %v1088, %v1094
  %v1097 = vsub.f32 0.0, %v1096
  %v1098 = vmul.f32 %v1097, 1.442695
  %v1099 = vpow.pop %v1098
  %v1100 = vadd.f32 %v1099, 1.0
  %v1101 = vrcp.pop %v1100
  %v1102 = vpack.c.bf16 %v1101, %v1101
  %1103 = vst.msk [vmem:[#allocation2 + $0x8] sm:$0xf] %vm393, %v1102
  %v1104 = vld [vmem:[%s0 + $0x4] sm:$0xff]
  %v1105 = vld [vmem:[%s1] sm:$0xff]
  %v1106 = vld [vmem:[%s1 + $0x8] sm:$0xf]
  %v1107 = vld [vmem:[%s1 + $0xc] sm:$0xff]
  %v1108 = vld [vmem:[%s1 + $0x14] sm:$0xf]
  %v1109 = vld [vmem:[%s1 + $0x18] sm:$0xff]
  %v1110 = vld [vmem:[%s1 + $0x20] sm:$0xf]
  %v1111 = vld [vmem:[%s1 + $0x24] sm:$0xff]
  %v1112 = vld [vmem:[%s1 + $0x2c] sm:$0xf]
  %v1113 = vld [vmem:[%s1 + $0x30] sm:$0xff]
  %v1114 = vld [vmem:[%s1 + $0x38] sm:$0xf]
  %v1115 = vld [vmem:[%s1 + $0x3c] sm:$0xff]
  %v1116 = vld [vmem:[%s1 + $0x44] sm:$0xf]
  %v1117 = vld [vmem:[%s1 + $0x48] sm:$0xff]
  %v1118 = vld [vmem:[%s1 + $0x50] sm:$0xf]
  %v1119 = vld [vmem:[%s1 + $0x54] sm:$0xff]
  %v1120 = vld [vmem:[%s1 + $0x5c] sm:$0xf]
  %v1121 = vld [vmem:[%s1 + $0x60] sm:$0xff]
  %v1122 = vld [vmem:[%s1 + $0x68] sm:$0xf]
  %v1123 = vld [vmem:[%s1 + $0x6c] sm:$0xff]
  %v1124 = vld [vmem:[%s1 + $0x74] sm:$0xf]
  %v1125 = vld [vmem:[%s1 + $0x78] sm:$0xff]
  %v1126 = vld [vmem:[%s1 + $0x80] sm:$0xf]
  %v1127 = vld [vmem:[%s1 + $0x84] sm:$0xff]
  %v1128 = vld [vmem:[%s1 + $0x8c] sm:$0xf]
  %v1129 = vld [vmem:[%s1 + $0x90] sm:$0xff]
  %v1130 = vld [vmem:[%s1 + $0x98] sm:$0xf]
  %v1131 = vld [vmem:[%s1 + $0x9c] sm:$0xff]
  %v1132 = vld [vmem:[%s1 + $0xa4] sm:$0xf]
  %v1133 = vld [vmem:[%s1 + $0xa8] sm:$0xff]
  %v1134 = vld [vmem:[%s1 + $0xb0] sm:$0xf]
  %v1135 = vld [vmem:[%s1 + $0xb4] sm:$0xff]
  %v1136 = vld [vmem:[%s1 + $0xbc] sm:$0xf]
  %v1137 = vld [vmem:[%s1 + $0xc0] sm:$0xff]
  %v1138 = vld [vmem:[%s1 + $0xc8] sm:$0xf]
  %v1139 = vld [vmem:[%s1 + $0xcc] sm:$0xff]
  %v1140 = vld [vmem:[%s1 + $0xd4] sm:$0xf]
  %v1141 = vld [vmem:[%s1 + $0xd8] sm:$0xff]
  %v1142 = vld [vmem:[%s1 + $0xe0] sm:$0xf]
  %v1143 = vld [vmem:[%s1 + $0xe4] sm:$0xff]
  %v1144 = vld [vmem:[%s1 + $0xec] sm:$0xf]
  %v1145 = vld [vmem:[%s1 + $0xf0] sm:$0xff]
  %v1146 = vld [vmem:[%s1 + $0xf8] sm:$0xf]
  %v1148 = vunpack.c.l.b16 %v1104
  %v1149 = vunpack.c.h.b16 %v1104
  %v1150 = vpack.c.b16 %v1148, %v1148
  %v1151 = vpack.c.b16 %v1149, %v1149
  %1152 = vrot.lane.b32.xlu0 %v1150, 88
  %v1153 = vpop.permute.xlu0 %1152
  %1154 = vrot.lane.b32.xlu0 %v1151, 88
  %v1155 = vpop.permute.xlu0 %1154
  %vm1156 = vcmask 719872
  %v1157 = vsel %vm1156, %v1153, %v1155
  %v1201 = vunpack.c.l.b16 %v1105
  %v1202 = vunpack.c.h.b16 %v1105
  %v1203 = vunpack.c.l.b16 %v1106
  %v1204 = vunpack.c.l.b16 %v1107
  %v1205 = vunpack.c.h.b16 %v1107
  %v1206 = vunpack.c.l.b16 %v1108
  %v1207 = vunpack.c.l.b16 %v1109
  %v1208 = vunpack.c.h.b16 %v1109
  %v1209 = vunpack.c.l.b16 %v1110
  %v1210 = vunpack.c.l.b16 %v1111
  %v1211 = vunpack.c.h.b16 %v1111
  %v1212 = vunpack.c.l.b16 %v1112
  %v1213 = vunpack.c.l.b16 %v1113
  %v1214 = vunpack.c.h.b16 %v1113
  %v1215 = vunpack.c.l.b16 %v1114
  %v1216 = vunpack.c.l.b16 %v1115
  %v1217 = vunpack.c.h.b16 %v1115
  %v1218 = vunpack.c.l.b16 %v1116
  %v1219 = vunpack.c.l.b16 %v1117
  %v1220 = vunpack.c.h.b16 %v1117
  %v1221 = vunpack.c.l.b16 %v1118
  %v1222 = vunpack.c.l.b16 %v1119
  %v1223 = vunpack.c.h.b16 %v1119
  %v1224 = vunpack.c.l.b16 %v1120
  %v1225 = vunpack.c.l.b16 %v1121
  %v1226 = vunpack.c.h.b16 %v1121
  %v1227 = vunpack.c.l.b16 %v1122
  %v1228 = vunpack.c.l.b16 %v1123
  %v1229 = vunpack.c.h.b16 %v1123
  %v1230 = vunpack.c.l.b16 %v1124
  %v1231 = vunpack.c.l.b16 %v1125
  %v1232 = vunpack.c.h.b16 %v1125
  %v1233 = vunpack.c.l.b16 %v1126
  %v1234 = vunpack.c.l.b16 %v1127
  %v1235 = vunpack.c.h.b16 %v1127
  %v1236 = vunpack.c.l.b16 %v1128
  %v1237 = vunpack.c.l.b16 %v1129
  %v1238 = vunpack.c.h.b16 %v1129
  %v1239 = vunpack.c.l.b16 %v1130
  %v1240 = vunpack.c.l.b16 %v1131
  %v1241 = vunpack.c.h.b16 %v1131
  %v1242 = vunpack.c.l.b16 %v1132
  %v1243 = vunpack.c.l.b16 %v1133
  %v1244 = vunpack.c.h.b16 %v1133
  %v1245 = vunpack.c.l.b16 %v1134
  %v1246 = vunpack.c.l.b16 %v1135
  %v1247 = vunpack.c.h.b16 %v1135
  %v1248 = vunpack.c.l.b16 %v1136
  %v1249 = vunpack.c.l.b16 %v1137
  %v1250 = vunpack.c.h.b16 %v1137
  %v1251 = vunpack.c.l.b16 %v1138
  %v1252 = vunpack.c.l.b16 %v1139
  %v1253 = vunpack.c.h.b16 %v1139
  %v1254 = vunpack.c.l.b16 %v1140
  %v1255 = vunpack.c.l.b16 %v1141
  %v1256 = vunpack.c.h.b16 %v1141
  %v1257 = vunpack.c.l.b16 %v1142
  %v1258 = vunpack.c.l.b16 %v1143
  %v1259 = vunpack.c.h.b16 %v1143
  %v1260 = vunpack.c.l.b16 %v1144
  %v1261 = vunpack.c.l.b16 %v1145
  %v1262 = vunpack.c.h.b16 %v1145
  %v1263 = vunpack.c.l.b16 %v1146
  %v1264 = vpack.c.b16 %v1204, %v1201
  %v1265 = vpack.c.b16 %v1205, %v1202
  %v1266 = vpack.c.b16 %v1206, %v1203
  %v1267 = vpack.c.b16 %v1210, %v1207
  %v1268 = vpack.c.b16 %v1211, %v1208
  %v1269 = vpack.c.b16 %v1212, %v1209
  %v1270 = vpack.c.b16 %v1216, %v1213
  %v1271 = vpack.c.b16 %v1217, %v1214
  %v1272 = vpack.c.b16 %v1218, %v1215
  %v1273 = vpack.c.b16 %v1222, %v1219
  %v1274 = vpack.c.b16 %v1223, %v1220
  %v1275 = vpack.c.b16 %v1224, %v1221
  %v1276 = vpack.c.b16 %v1228, %v1225
  %v1277 = vpack.c.b16 %v1229, %v1226
  %v1278 = vpack.c.b16 %v1230, %v1227
  %v1279 = vpack.c.b16 %v1234, %v1231
  %v1280 = vpack.c.b16 %v1235, %v1232
  %v1281 = vpack.c.b16 %v1236, %v1233
  %v1282 = vpack.c.b16 %v1240, %v1237
  %v1283 = vpack.c.b16 %v1241, %v1238
  %v1284 = vpack.c.b16 %v1242, %v1239
  %v1285 = vpack.c.b16 %v1246, %v1243
  %v1286 = vpack.c.b16 %v1247, %v1244
  %v1287 = vpack.c.b16 %v1248, %v1245
  %v1288 = vpack.c.b16 %v1252, %v1249
  %v1289 = vpack.c.b16 %v1253, %v1250
  %v1290 = vpack.c.b16 %v1254, %v1251
  %v1291 = vpack.c.b16 %v1258, %v1255
  %v1292 = vpack.c.b16 %v1259, %v1256
  %v1293 = vpack.c.b16 %v1260, %v1257
  %v1294 = vpack.c.b16 %v1261, %v1261
  %v1295 = vpack.c.b16 %v1262, %v1262
  %v1296 = vpack.c.b16 %v1263, %v1263
  %v1328 = vsel %vm262, %v1155, 0
  %v1331 = vsel %vm266, %v1294, 0
  %v1334 = vsel %vm266, %v1295, 0
  %v1337 = vsel %vm266, %v1296, 0
  %1339 = vmatprep.subr.bf16.mxu0 %v1286
  %1340 = vmatpush1.bf16.msra.mxu0 %v1285
  %1341 = vmatprep.subr.bf16.mxu0 %v1283
  %1342 = vmatpush1.bf16.msra.mxu0 %v1282
  %1343 = vmatprep.subr.bf16.mxu0 %v1280
  %1344 = vmatpush1.bf16.msra.mxu0 %v1279
  %1345 = vmatprep.subr.bf16.mxu0 %v1277
  %1346 = vmatpush1.bf16.msra.mxu0 %v1276
  %1347 = vmatprep.subr.bf16.mxu0 %v1274
  %1348 = vmatpush1.bf16.msra.mxu0 %v1273
  %1349 = vmatprep.subr.bf16.mxu0 %v1271
  %1350 = vmatpush1.bf16.msra.mxu0 %v1270
  %1351 = vmatprep.subr.bf16.mxu0 %v1268
  %1352 = vmatpush1.bf16.msra.mxu0 %v1267
  %1353 = vmatprep.subr.bf16.mxu0 %v1265
  %1354 = vmatpush1.bf16.msra.mxu0 %v1264
  %1355 = vmatprep.subr.bf16.mxu0 0
  %1356 = vmatpush2.bf16.msra.mxu0 0
  %1357 = vmatprep.subr.bf16.mxu0 0
  %1358 = vmatpush2.bf16.msra.mxu0 0
  %1359 = vmatprep.subr.bf16.mxu0 0
  %1360 = vmatpush2.bf16.msra.mxu0 0
  %1361 = vmatprep.subr.bf16.mxu0 0
  %1362 = vmatpush2.bf16.msra.mxu0 0
  %1363 = vmatprep.subr.bf16.mxu0 0
  %1364 = vmatpush2.bf16.msra.mxu0 0
  %1365 = vmatprep.subr.bf16.mxu0 %v1334
  %1366 = vmatpush2.bf16.msra.mxu0 %v1331
  %1367 = vmatprep.subr.bf16.mxu0 %v1292
  %1368 = vmatpush2.bf16.msra.mxu0 %v1291
  %1369 = vmatprep.subr.bf16.mxu0 %v1289
  %1370 = vmatpush2.bf16.msra.mxu0 %v1288
  %1371 = vmatprep.mubr.bf16.mxu0 %v1328
  %1372 = vmatmul.mubr.bf16.gmra.mxu0 %v1157
  %v1373 = vpop.f32.mrf.mxu0
  %v1374 = vadd.f32 0.0, %v1373
  %v1375 = vpop.f32.mrf.mxu0
  %v1376 = vadd.f32 0.0, %v1375
  %v1377 = vpop.f32.mrf.mxu0
  %v1378 = vpop.f32.mrf.mxu0
  %1379 = vdwg.mxu0
  %1380 = vmatprep.subr.bf16.mxu0 0
  %1381 = vmatpush1.bf16.msra.mxu0 %v1287
  %1382 = vmatprep.subr.bf16.mxu0 0
  %1383 = vmatpush1.bf16.msra.mxu0 %v1284
  %1384 = vmatprep.subr.bf16.mxu0 0
  %1385 = vmatpush1.bf16.msra.mxu0 %v1281
  %1386 = vmatprep.subr.bf16.mxu0 0
  %1387 = vmatpush1.bf16.msra.mxu0 %v1278
  %1388 = vmatprep.subr.bf16.mxu0 0
  %1389 = vmatpush1.bf16.msra.mxu0 %v1275
  %1390 = vmatprep.subr.bf16.mxu0 0
  %1391 = vmatpush1.bf16.msra.mxu0 %v1272
  %1392 = vmatprep.subr.bf16.mxu0 0
  %1393 = vmatpush1.bf16.msra.mxu0 %v1269
  %1394 = vmatprep.subr.bf16.mxu0 0
  %1395 = vmatpush1.bf16.msra.mxu0 %v1266
  %1396 = vmatprep.subr.bf16.mxu0 0
  %1397 = vmatpush2.bf16.msra.mxu0 0
  %1398 = vmatprep.subr.bf16.mxu0 0
  %1399 = vmatpush2.bf16.msra.mxu0 0
  %1400 = vmatprep.subr.bf16.mxu0 0
  %1401 = vmatpush2.bf16.msra.mxu0 0
  %1402 = vmatprep.subr.bf16.mxu0 0
  %1403 = vmatpush2.bf16.msra.mxu0 0
  %1404 = vmatprep.subr.bf16.mxu0 0
  %1405 = vmatpush2.bf16.msra.mxu0 0
  %1406 = vmatprep.subr.bf16.mxu0 0
  %1407 = vmatpush2.bf16.msra.mxu0 %v1337
  %1408 = vmatprep.subr.bf16.mxu0 0
  %1409 = vmatpush2.bf16.msra.mxu0 %v1293
  %1410 = vmatprep.subr.bf16.mxu0 0
  %1411 = vmatpush2.bf16.msra.mxu0 %v1290
  %1412 = vmatprep.mubr.bf16.mxu0 %v1328
  %1413 = vmatmul.mubr.bf16.gmra.mxu0 %v1157
  %v1414 = vpop.f32.mrf.mxu0
  %v1415 = vadd.f32 0.0, %v1414
  %v1416 = vpop.f32.mrf.mxu0
  %v1417 = vpop.f32.mrf.mxu0
  %v1418 = vpop.f32.mrf.mxu0
  %1419 = vdwg.mxu0
  %1422 = vrot.lane.b32.xlu0 %v1376, 112
  %v1423 = vpop.permute.xlu0 %1422
  %1424 = vrot.lane.b32.xlu0 %v1415, 112
  %v1425 = vpop.permute.xlu0 %1424
  %v1426 = vsel %vm363, %v1423, %v1425
  %v1429 = vmax.f32 %v1374, %v1426
  %v1430 = vmax.f32 %v1376, %v1425
  %1433 = vrot.lane.b32.xlu0 %v1429, 56
  %v1434 = vpop.permute.xlu0 %1433
  %1435 = vrot.lane.b32.xlu0 %v1430, 56
  %v1436 = vpop.permute.xlu0 %1435
  %v1437 = vsel %vm375, %v1434, %v1436
  %v1439 = vmax.f32 %v1429, %v1437
  %v1440 = vld [vmem:[%s2] sm:$0x1]
  %v1442 = vlaneseq
  %v1443 = vshrl.u32 %v1442, 7
  %v1444 = vsub.s32 0, %v1443
  %v1445 = vrot.slane %v1440, %v1444
  %v1447 = vadd.f32 %v1439, %v1445
  %v1448 = vsub.f32 0.0, %v1447
  %v1449 = vmul.f32 %v1448, 1.442695
  %v1450 = vpow.pop %v1449
  %v1451 = vadd.f32 %v1450, 1.0
  %v1452 = vrcp.pop %v1451
  %v1453 = vpack.c.bf16 %v1452, %v1452
  %1454 = vst.msk [vmem:[#allocation2 + $0xc] sm:$0xf] %vm393, %v1453
  %v1455 = vld [vmem:[%s0 + $0x4] sm:$0xff]
  %v1456 = vld [vmem:[%s0 + $0xc] sm:$0xf]
  %v1457 = vld [vmem:[%s1] sm:$0xff]
  %v1458 = vld [vmem:[%s1 + $0x8] sm:$0xf]
  %v1459 = vld [vmem:[%s1 + $0xc] sm:$0xff]
  %v1460 = vld [vmem:[%s1 + $0x14] sm:$0xf]
  %v1461 = vld [vmem:[%s1 + $0x18] sm:$0xff]
  %v1462 = vld [vmem:[%s1 + $0x20] sm:$0xf]
  %v1463 = vld [vmem:[%s1 + $0x24] sm:$0xff]
  %v1464 = vld [vmem:[%s1 + $0x2c] sm:$0xf]
  %v1465 = vld [vmem:[%s1 + $0x30] sm:$0xff]
  %v1466 = vld [vmem:[%s1 + $0x38] sm:$0xf]
  %v1467 = vld [vmem:[%s1 + $0x3c] sm:$0xff]
  %v1468 = vld [vmem:[%s1 + $0x44] sm:$0xf]
  %v1469 = vld [vmem:[%s1 + $0x48] sm:$0xff]
  %v1470 = vld [vmem:[%s1 + $0x50] sm:$0xf]
  %v1471 = vld [vmem:[%s1 + $0x54] sm:$0xff]
  %v1472 = vld [vmem:[%s1 + $0x5c] sm:$0xf]
  %v1473 = vld [vmem:[%s1 + $0x60] sm:$0xff]
  %v1474 = vld [vmem:[%s1 + $0x68] sm:$0xf]
  %v1475 = vld [vmem:[%s1 + $0x6c] sm:$0xff]
  %v1476 = vld [vmem:[%s1 + $0x74] sm:$0xf]
  %v1477 = vld [vmem:[%s1 + $0x78] sm:$0xff]
  %v1478 = vld [vmem:[%s1 + $0x80] sm:$0xf]
  %v1479 = vld [vmem:[%s1 + $0x84] sm:$0xff]
  %v1480 = vld [vmem:[%s1 + $0x8c] sm:$0xf]
  %v1481 = vld [vmem:[%s1 + $0x90] sm:$0xff]
  %v1482 = vld [vmem:[%s1 + $0x98] sm:$0xf]
  %v1483 = vld [vmem:[%s1 + $0x9c] sm:$0xff]
  %v1484 = vld [vmem:[%s1 + $0xa4] sm:$0xf]
  %v1485 = vld [vmem:[%s1 + $0xa8] sm:$0xff]
  %v1486 = vld [vmem:[%s1 + $0xb0] sm:$0xf]
  %v1487 = vld [vmem:[%s1 + $0xb4] sm:$0xff]
  %v1488 = vld [vmem:[%s1 + $0xbc] sm:$0xf]
  %v1489 = vld [vmem:[%s1 + $0xc0] sm:$0xff]
  %v1490 = vld [vmem:[%s1 + $0xc8] sm:$0xf]
  %v1491 = vld [vmem:[%s1 + $0xcc] sm:$0xff]
  %v1492 = vld [vmem:[%s1 + $0xd4] sm:$0xf]
  %v1493 = vld [vmem:[%s1 + $0xd8] sm:$0xff]
  %v1494 = vld [vmem:[%s1 + $0xe0] sm:$0xf]
  %v1495 = vld [vmem:[%s1 + $0xe4] sm:$0xff]
  %v1496 = vld [vmem:[%s1 + $0xec] sm:$0xf]
  %v1497 = vld [vmem:[%s1 + $0xf0] sm:$0xff]
  %v1498 = vld [vmem:[%s1 + $0xf8] sm:$0xf]
  %v1501 = vunpack.c.l.b16 %v1455
  %v1502 = vunpack.c.h.b16 %v1455
  %v1503 = vunpack.c.l.b16 %v1456
  %v1504 = vpack.c.b16 %v1501, %v1501
  %v1505 = vpack.c.b16 %v1502, %v1502
  %v1506 = vpack.c.b16 %v1503, %v1503
  %1507 = vrot.lane.b32.xlu0 %v1504, 32
  %v1508 = vpop.permute.xlu0 %1507
  %1509 = vrot.lane.b32.xlu0 %v1505, 32
  %v1510 = vpop.permute.xlu0 %1509
  %1511 = vrot.lane.b32.xlu0 %v1506, 32
  %v1512 = vpop.permute.xlu0 %1511
  %vm1513 = vcmask 261120
  %v1514 = vsel %vm1513, %v1508, %v1510
  %v1515 = vsel %vm1513, %v1510, %v1512
  %v1559 = vunpack.c.l.b16 %v1457
  %v1560 = vunpack.c.h.b16 %v1457
  %v1561 = vunpack.c.l.b16 %v1458
  %v1562 = vunpack.c.l.b16 %v1459
  %v1563 = vunpack.c.h.b16 %v1459
  %v1564 = vunpack.c.l.b16 %v1460
  %v1565 = vunpack.c.l.b16 %v1461
  %v1566 = vunpack.c.h.b16 %v1461
  %v1567 = vunpack.c.l.b16 %v1462
  %v1568 = vunpack.c.l.b16 %v1463
  %v1569 = vunpack.c.h.b16 %v1463
  %v1570 = vunpack.c.l.b16 %v1464
  %v1571 = vunpack.c.l.b16 %v1465
  %v1572 = vunpack.c.h.b16 %v1465
  %v1573 = vunpack.c.l.b16 %v1466
  %v1574 = vunpack.c.l.b16 %v1467
  %v1575 = vunpack.c.h.b16 %v1467
  %v1576 = vunpack.c.l.b16 %v1468
  %v1577 = vunpack.c.l.b16 %v1469
  %v1578 = vunpack.c.h.b16 %v1469
  %v1579 = vunpack.c.l.b16 %v1470
  %v1580 = vunpack.c.l.b16 %v1471
  %v1581 = vunpack.c.h.b16 %v1471
  %v1582 = vunpack.c.l.b16 %v1472
  %v1583 = vunpack.c.l.b16 %v1473
  %v1584 = vunpack.c.h.b16 %v1473
  %v1585 = vunpack.c.l.b16 %v1474
  %v1586 = vunpack.c.l.b16 %v1475
  %v1587 = vunpack.c.h.b16 %v1475
  %v1588 = vunpack.c.l.b16 %v1476
  %v1589 = vunpack.c.l.b16 %v1477
  %v1590 = vunpack.c.h.b16 %v1477
  %v1591 = vunpack.c.l.b16 %v1478
  %v1592 = vunpack.c.l.b16 %v1479
  %v1593 = vunpack.c.h.b16 %v1479
  %v1594 = vunpack.c.l.b16 %v1480
  %v1595 = vunpack.c.l.b16 %v1481
  %v1596 = vunpack.c.h.b16 %v1481
  %v1597 = vunpack.c.l.b16 %v1482
  %v1598 = vunpack.c.l.b16 %v1483
  %v1599 = vunpack.c.h.b16 %v1483
  %v1600 = vunpack.c.l.b16 %v1484
  %v1601 = vunpack.c.l.b16 %v1485
  %v1602 = vunpack.c.h.b16 %v1485
  %v1603 = vunpack.c.l.b16 %v1486
  %v1604 = vunpack.c.l.b16 %v1487
  %v1605 = vunpack.c.h.b16 %v1487
  %v1606 = vunpack.c.l.b16 %v1488
  %v1607 = vunpack.c.l.b16 %v1489
  %v1608 = vunpack.c.h.b16 %v1489
  %v1609 = vunpack.c.l.b16 %v1490
  %v1610 = vunpack.c.l.b16 %v1491
  %v1611 = vunpack.c.h.b16 %v1491
  %v1612 = vunpack.c.l.b16 %v1492
  %v1613 = vunpack.c.l.b16 %v1493
  %v1614 = vunpack.c.h.b16 %v1493
  %v1615 = vunpack.c.l.b16 %v1494
  %v1616 = vunpack.c.l.b16 %v1495
  %v1617 = vunpack.c.h.b16 %v1495
  %v1618 = vunpack.c.l.b16 %v1496
  %v1619 = vunpack.c.l.b16 %v1497
  %v1620 = vunpack.c.h.b16 %v1497
  %v1621 = vunpack.c.l.b16 %v1498
  %v1622 = vpack.c.b16 %v1562, %v1559
  %v1623 = vpack.c.b16 %v1563, %v1560
  %v1624 = vpack.c.b16 %v1564, %v1561
  %v1625 = vpack.c.b16 %v1568, %v1565
  %v1626 = vpack.c.b16 %v1569, %v1566
  %v1627 = vpack.c.b16 %v1570, %v1567
  %v1628 = vpack.c.b16 %v1574, %v1571
  %v1629 = vpack.c.b16 %v1575, %v1572
  %v1630 = vpack.c.b16 %v1576, %v1573
  %v1631 = vpack.c.b16 %v1580, %v1577
  %v1632 = vpack.c.b16 %v1581, %v1578
  %v1633 = vpack.c.b16 %v1582, %v1579
  %v1634 = vpack.c.b16 %v1586, %v1583
  %v1635 = vpack.c.b16 %v1587, %v1584
  %v1636 = vpack.c.b16 %v1588, %v1585
  %v1637 = vpack.c.b16 %v1592, %v1589
  %v1638 = vpack.c.b16 %v1593, %v1590
  %v1639 = vpack.c.b16 %v1594, %v1591
  %v1640 = vpack.c.b16 %v1598, %v1595
  %v1641 = vpack.c.b16 %v1599, %v1596
  %v1642 = vpack.c.b16 %v1600, %v1597
  %v1643 = vpack.c.b16 %v1604, %v1601
  %v1644 = vpack.c.b16 %v1605, %v1602
  %v1645 = vpack.c.b16 %v1606, %v1603
  %v1646 = vpack.c.b16 %v1610, %v1607
  %v1647 = vpack.c.b16 %v1611, %v1608
  %v1648 = vpack.c.b16 %v1612, %v1609
  %v1649 = vpack.c.b16 %v1616, %v1613
  %v1650 = vpack.c.b16 %v1617, %v1614
  %v1651 = vpack.c.b16 %v1618, %v1615
  %v1652 = vpack.c.b16 %v1619, %v1619
  %v1653 = vpack.c.b16 %v1620, %v1620
  %v1654 = vpack.c.b16 %v1621, %v1621
  %v1686 = vsel %vm262, %v1515, 0
  %v1689 = vsel %vm266, %v1652, 0
  %v1692 = vsel %vm266, %v1653, 0
  %v1695 = vsel %vm266, %v1654, 0
  %1697 = vmatprep.subr.bf16.mxu0 %v1644
  %1698 = vmatpush1.bf16.msra.mxu0 %v1643
  %1699 = vmatprep.subr.bf16.mxu0 %v1641
  %1700 = vmatpush1.bf16.msra.mxu0 %v1640
  %1701 = vmatprep.subr.bf16.mxu0 %v1638
  %1702 = vmatpush1.bf16.msra.mxu0 %v1637
  %1703 = vmatprep.subr.bf16.mxu0 %v1635
  %1704 = vmatpush1.bf16.msra.mxu0 %v1634
  %1705 = vmatprep.subr.bf16.mxu0 %v1632
  %1706 = vmatpush1.bf16.msra.mxu0 %v1631
  %1707 = vmatprep.subr.bf16.mxu0 %v1629
  %1708 = vmatpush1.bf16.msra.mxu0 %v1628
  %1709 = vmatprep.subr.bf16.mxu0 %v1626
  %1710 = vmatpush1.bf16.msra.mxu0 %v1625
  %1711 = vmatprep.subr.bf16.mxu0 %v1623
  %1712 = vmatpush1.bf16.msra.mxu0 %v1622
  %1713 = vmatprep.subr.bf16.mxu0 0
  %1714 = vmatpush2.bf16.msra.mxu0 0
  %1715 = vmatprep.subr.bf16.mxu0 0
  %1716 = vmatpush2.bf16.msra.mxu0 0
  %1717 = vmatprep.subr.bf16.mxu0 0
  %1718 = vmatpush2.bf16.msra.mxu0 0
  %1719 = vmatprep.subr.bf16.mxu0 0
  %1720 = vmatpush2.bf16.msra.mxu0 0
  %1721 = vmatprep.subr.bf16.mxu0 0
  %1722 = vmatpush2.bf16.msra.mxu0 0
  %1723 = vmatprep.subr.bf16.mxu0 %v1692
  %1724 = vmatpush2.bf16.msra.mxu0 %v1689
  %1725 = vmatprep.subr.bf16.mxu0 %v1650
  %1726 = vmatpush2.bf16.msra.mxu0 %v1649
  %1727 = vmatprep.subr.bf16.mxu0 %v1647
  %1728 = vmatpush2.bf16.msra.mxu0 %v1646
  %1729 = vmatprep.mubr.bf16.mxu0 %v1686
  %1730 = vmatmul.mubr.bf16.gmra.mxu0 %v1514
  %v1731 = vpop.f32.mrf.mxu0
  %v1732 = vadd.f32 0.0, %v1731
  %v1733 = vpop.f32.mrf.mxu0
  %v1734 = vadd.f32 0.0, %v1733
  %v1735 = vpop.f32.mrf.mxu0
  %v1736 = vpop.f32.mrf.mxu0
  %1737 = vdwg.mxu0
  %1738 = vmatprep.subr.bf16.mxu0 0
  %1739 = vmatpush1.bf16.msra.mxu0 %v1645
  %1740 = vmatprep.subr.bf16.mxu0 0
  %1741 = vmatpush1.bf16.msra.mxu0 %v1642
  %1742 = vmatprep.subr.bf16.mxu0 0
  %1743 = vmatpush1.bf16.msra.mxu0 %v1639
  %1744 = vmatprep.subr.bf16.mxu0 0
  %1745 = vmatpush1.bf16.msra.mxu0 %v1636
  %1746 = vmatprep.subr.bf16.mxu0 0
  %1747 = vmatpush1.bf16.msra.mxu0 %v1633
  %1748 = vmatprep.subr.bf16.mxu0 0
  %1749 = vmatpush1.bf16.msra.mxu0 %v1630
  %1750 = vmatprep.subr.bf16.mxu0 0
  %1751 = vmatpush1.bf16.msra.mxu0 %v1627
  %1752 = vmatprep.subr.bf16.mxu0 0
  %1753 = vmatpush1.bf16.msra.mxu0 %v1624
  %1754 = vmatprep.subr.bf16.mxu0 0
  %1755 = vmatpush2.bf16.msra.mxu0 0
  %1756 = vmatprep.subr.bf16.mxu0 0
  %1757 = vmatpush2.bf16.msra.mxu0 0
  %1758 = vmatprep.subr.bf16.mxu0 0
  %1759 = vmatpush2.bf16.msra.mxu0 0
  %1760 = vmatprep.subr.bf16.mxu0 0
  %1761 = vmatpush2.bf16.msra.mxu0 0
  %1762 = vmatprep.subr.bf16.mxu0 0
  %1763 = vmatpush2.bf16.msra.mxu0 0
  %1764 = vmatprep.subr.bf16.mxu0 0
  %1765 = vmatpush2.bf16.msra.mxu0 %v1695
  %1766 = vmatprep.subr.bf16.mxu0 0
  %1767 = vmatpush2.bf16.msra.mxu0 %v1651
  %1768 = vmatprep.subr.bf16.mxu0 0
  %1769 = vmatpush2.bf16.msra.mxu0 %v1648
  %1770 = vmatprep.mubr.bf16.mxu0 %v1686
  %1771 = vmatmul.mubr.bf16.gmra.mxu0 %v1514
  %v1772 = vpop.f32.mrf.mxu0
  %v1773 = vadd.f32 0.0, %v1772
  %v1774 = vpop.f32.mrf.mxu0
  %v1775 = vpop.f32.mrf.mxu0
  %v1776 = vpop.f32.mrf.mxu0
  %1777 = vdwg.mxu0
  %1780 = vrot.lane.b32.xlu0 %v1734, 112
  %v1781 = vpop.permute.xlu0 %1780
  %1782 = vrot.lane.b32.xlu0 %v1773, 112
  %v1783 = vpop.permute.xlu0 %1782
  %v1784 = vsel %vm363, %v1781, %v1783
  %v1787 = vmax.f32 %v1732, %v1784
  %v1788 = vmax.f32 %v1734, %v1783
  %1791 = vrot.lane.b32.xlu0 %v1787, 56
  %v1792 = vpop.permute.xlu0 %1791
  %1793 = vrot.lane.b32.xlu0 %v1788, 56
  %v1794 = vpop.permute.xlu0 %1793
  %v1795 = vsel %vm375, %v1792, %v1794
  %v1797 = vmax.f32 %v1787, %v1795
  %v1798 = vld [vmem:[%s2] sm:$0x1]
  %v1800 = vlaneseq
  %v1801 = vshrl.u32 %v1800, 7
  %v1802 = vsub.s32 0, %v1801
  %v1803 = vrot.slane %v1798, %v1802
  %v1805 = vadd.f32 %v1797, %v1803
  %v1806 = vsub.f32 0.0, %v1805
  %v1807 = vmul.f32 %v1806, 1.442695
  %v1808 = vpow.pop %v1807
  %v1809 = vadd.f32 %v1808, 1.0
  %v1810 = vrcp.pop %v1809
  %v1811 = vpack.c.bf16 %v1810, %v1810
  %1812 = vst.msk [vmem:[#allocation2 + $0x10] sm:$0xf] %vm393, %v1811
  %v1813 = vld [vmem:[%s0 + $0x8] sm:$0xff]
  %v1814 = vld [vmem:[%s1] sm:$0xff]
  %v1815 = vld [vmem:[%s1 + $0x8] sm:$0xf]
  %v1816 = vld [vmem:[%s1 + $0xc] sm:$0xff]
  %v1817 = vld [vmem:[%s1 + $0x14] sm:$0xf]
  %v1818 = vld [vmem:[%s1 + $0x18] sm:$0xff]
  %v1819 = vld [vmem:[%s1 + $0x20] sm:$0xf]
  %v1820 = vld [vmem:[%s1 + $0x24] sm:$0xff]
  %v1821 = vld [vmem:[%s1 + $0x2c] sm:$0xf]
  %v1822 = vld [vmem:[%s1 + $0x30] sm:$0xff]
  %v1823 = vld [vmem:[%s1 + $0x38] sm:$0xf]
  %v1824 = vld [vmem:[%s1 + $0x3c] sm:$0xff]
  %v1825 = vld [vmem:[%s1 + $0x44] sm:$0xf]
  %v1826 = vld [vmem:[%s1 + $0x48] sm:$0xff]
  %v1827 = vld [vmem:[%s1 + $0x50] sm:$0xf]
  %v1828 = vld [vmem:[%s1 + $0x54] sm:$0xff]
  %v1829 = vld [vmem:[%s1 + $0x5c] sm:$0xf]
  %v1830 = vld [vmem:[%s1 + $0x60] sm:$0xff]
  %v1831 = vld [vmem:[%s1 + $0x68] sm:$0xf]
  %v1832 = vld [vmem:[%s1 + $0x6c] sm:$0xff]
  %v1833 = vld [vmem:[%s1 + $0x74] sm:$0xf]
  %v1834 = vld [vmem:[%s1 + $0x78] sm:$0xff]
  %v1835 = vld [vmem:[%s1 + $0x80] sm:$0xf]
  %v1836 = vld [vmem:[%s1 + $0x84] sm:$0xff]
  %v1837 = vld [vmem:[%s1 + $0x8c] sm:$0xf]
  %v1838 = vld [vmem:[%s1 + $0x90] sm:$0xff]
  %v1839 = vld [vmem:[%s1 + $0x98] sm:$0xf]
  %v1840 = vld [vmem:[%s1 + $0x9c] sm:$0xff]
  %v1841 = vld [vmem:[%s1 + $0xa4] sm:$0xf]
  %v1842 = vld [vmem:[%s1 + $0xa8] sm:$0xff]
  %v1843 = vld [vmem:[%s1 + $0xb0] sm:$0xf]
  %v1844 = vld [vmem:[%s1 + $0xb4] sm:$0xff]
  %v1845 = vld [vmem:[%s1 + $0xbc] sm:$0xf]
  %v1846 = vld [vmem:[%s1 + $0xc0] sm:$0xff]
  %v1847 = vld [vmem:[%s1 + $0xc8] sm:$0xf]
  %v1848 = vld [vmem:[%s1 + $0xcc] sm:$0xff]
  %v1849 = vld [vmem:[%s1 + $0xd4] sm:$0xf]
  %v1850 = vld [vmem:[%s1 + $0xd8] sm:$0xff]
  %v1851 = vld [vmem:[%s1 + $0xe0] sm:$0xf]
  %v1852 = vld [vmem:[%s1 + $0xe4] sm:$0xff]
  %v1853 = vld [vmem:[%s1 + $0xec] sm:$0xf]
  %v1854 = vld [vmem:[%s1 + $0xf0] sm:$0xff]
  %v1855 = vld [vmem:[%s1 + $0xf8] sm:$0xf]
  %v1857 = vunpack.c.l.b16 %v1813
  %v1858 = vunpack.c.h.b16 %v1813
  %v1859 = vpack.c.b16 %v1857, %v1857
  %v1860 = vpack.c.b16 %v1858, %v1858
  %1861 = vrot.lane.b32.xlu0 %v1859, 104
  %v1862 = vpop.permute.xlu0 %1861
  %1863 = vrot.lane.b32.xlu0 %v1860, 104
  %v1864 = vpop.permute.xlu0 %1863
  %vm1865 = vcmask 850944
  %v1866 = vsel %vm1865, %v1862, %v1864
  %v1910 = vunpack.c.l.b16 %v1814
  %v1911 = vunpack.c.h.b16 %v1814
  %v1912 = vunpack.c.l.b16 %v1815
  %v1913 = vunpack.c.l.b16 %v1816
  %v1914 = vunpack.c.h.b16 %v1816
  %v1915 = vunpack.c.l.b16 %v1817
  %v1916 = vunpack.c.l.b16 %v1818
  %v1917 = vunpack.c.h.b16 %v1818
  %v1918 = vunpack.c.l.b16 %v1819
  %v1919 = vunpack.c.l.b16 %v1820
  %v1920 = vunpack.c.h.b16 %v1820
  %v1921 = vunpack.c.l.b16 %v1821
  %v1922 = vunpack.c.l.b16 %v1822
  %v1923 = vunpack.c.h.b16 %v1822
  %v1924 = vunpack.c.l.b16 %v1823
  %v1925 = vunpack.c.l.b16 %v1824
  %v1926 = vunpack.c.h.b16 %v1824
  %v1927 = vunpack.c.l.b16 %v1825
  %v1928 = vunpack.c.l.b16 %v1826
  %v1929 = vunpack.c.h.b16 %v1826
  %v1930 = vunpack.c.l.b16 %v1827
  %v1931 = vunpack.c.l.b16 %v1828
  %v1932 = vunpack.c.h.b16 %v1828
  %v1933 = vunpack.c.l.b16 %v1829
  %v1934 = vunpack.c.l.b16 %v1830
  %v1935 = vunpack.c.h.b16 %v1830
  %v1936 = vunpack.c.l.b16 %v1831
  %v1937 = vunpack.c.l.b16 %v1832
  %v1938 = vunpack.c.h.b16 %v1832
  %v1939 = vunpack.c.l.b16 %v1833
  %v1940 = vunpack.c.l.b16 %v1834
  %v1941 = vunpack.c.h.b16 %v1834
  %v1942 = vunpack.c.l.b16 %v1835
  %v1943 = vunpack.c.l.b16 %v1836
  %v1944 = vunpack.c.h.b16 %v1836
  %v1945 = vunpack.c.l.b16 %v1837
  %v1946 = vunpack.c.l.b16 %v1838
  %v1947 = vunpack.c.h.b16 %v1838
  %v1948 = vunpack.c.l.b16 %v1839
  %v1949 = vunpack.c.l.b16 %v1840
  %v1950 = vunpack.c.h.b16 %v1840
  %v1951 = vunpack.c.l.b16 %v1841
  %v1952 = vunpack.c.l.b16 %v1842
  %v1953 = vunpack.c.h.b16 %v1842
  %v1954 = vunpack.c.l.b16 %v1843
  %v1955 = vunpack.c.l.b16 %v1844
  %v1956 = vunpack.c.h.b16 %v1844
  %v1957 = vunpack.c.l.b16 %v1845
  %v1958 = vunpack.c.l.b16 %v1846
  %v1959 = vunpack.c.h.b16 %v1846
  %v1960 = vunpack.c.l.b16 %v1847
  %v1961 = vunpack.c.l.b16 %v1848
  %v1962 = vunpack.c.h.b16 %v1848
  %v1963 = vunpack.c.l.b16 %v1849
  %v1964 = vunpack.c.l.b16 %v1850
  %v1965 = vunpack.c.h.b16 %v1850
  %v1966 = vunpack.c.l.b16 %v1851
  %v1967 = vunpack.c.l.b16 %v1852
  %v1968 = vunpack.c.h.b16 %v1852
  %v1969 = vunpack.c.l.b16 %v1853
  %v1970 = vunpack.c.l.b16 %v1854
  %v1971 = vunpack.c.h.b16 %v1854
  %v1972 = vunpack.c.l.b16 %v1855
  %v1973 = vpack.c.b16 %v1913, %v1910
  %v1974 = vpack.c.b16 %v1914, %v1911
  %v1975 = vpack.c.b16 %v1915, %v1912
  %v1976 = vpack.c.b16 %v1919, %v1916
  %v1977 = vpack.c.b16 %v1920, %v1917
  %v1978 = vpack.c.b16 %v1921, %v1918
  %v1979 = vpack.c.b16 %v1925, %v1922
  %v1980 = vpack.c.b16 %v1926, %v1923
  %v1981 = vpack.c.b16 %v1927, %v1924
  %v1982 = vpack.c.b16 %v1931, %v1928
  %v1983 = vpack.c.b16 %v1932, %v1929
  %v1984 = vpack.c.b16 %v1933, %v1930
  %v1985 = vpack.c.b16 %v1937, %v1934
  %v1986 = vpack.c.b16 %v1938, %v1935
  %v1987 = vpack.c.b16 %v1939, %v1936
  %v1988 = vpack.c.b16 %v1943, %v1940
  %v1989 = vpack.c.b16 %v1944, %v1941
  %v1990 = vpack.c.b16 %v1945, %v1942
  %v1991 = vpack.c.b16 %v1949, %v1946
  %v1992 = vpack.c.b16 %v1950, %v1947
  %v1993 = vpack.c.b16 %v1951, %v1948
  %v1994 = vpack.c.b16 %v1955, %v1952
  %v1995 = vpack.c.b16 %v1956, %v1953
  %v1996 = vpack.c.b16 %v1957, %v1954
  %v1997 = vpack.c.b16 %v1961, %v1958
  %v1998 = vpack.c.b16 %v1962, %v1959
  %v1999 = vpack.c.b16 %v1963, %v1960
  %v2000 = vpack.c.b16 %v1967, %v1964
  %v2001 = vpack.c.b16 %v1968, %v1965
  %v2002 = vpack.c.b16 %v1969, %v1966
  %v2003 = vpack.c.b16 %v1970, %v1970
  %v2004 = vpack.c.b16 %v1971, %v1971
  %v2005 = vpack.c.b16 %v1972, %v1972
  %v2037 = vsel %vm262, %v1864, 0
  %v2040 = vsel %vm266, %v2003, 0
  %v2043 = vsel %vm266, %v2004, 0
  %v2046 = vsel %vm266, %v2005, 0
  %2048 = vmatprep.subr.bf16.mxu0 %v1995
  %2049 = vmatpush1.bf16.msra.mxu0 %v1994
  %2050 = vmatprep.subr.bf16.mxu0 %v1992
  %2051 = vmatpush1.bf16.msra.mxu0 %v1991
  %2052 = vmatprep.subr.bf16.mxu0 %v1989
  %2053 = vmatpush1.bf16.msra.mxu0 %v1988
  %2054 = vmatprep.subr.bf16.mxu0 %v1986
  %2055 = vmatpush1.bf16.msra.mxu0 %v1985
  %2056 = vmatprep.subr.bf16.mxu0 %v1983
  %2057 = vmatpush1.bf16.msra.mxu0 %v1982
  %2058 = vmatprep.subr.bf16.mxu0 %v1980
  %2059 = vmatpush1.bf16.msra.mxu0 %v1979
  %2060 = vmatprep.subr.bf16.mxu0 %v1977
  %2061 = vmatpush1.bf16.msra.mxu0 %v1976
  %2062 = vmatprep.subr.bf16.mxu0 %v1974
  %2063 = vmatpush1.bf16.msra.mxu0 %v1973
  %2064 = vmatprep.subr.bf16.mxu0 0
  %2065 = vmatpush2.bf16.msra.mxu0 0
  %2066 = vmatprep.subr.bf16.mxu0 0
  %2067 = vmatpush2.bf16.msra.mxu0 0
  %2068 = vmatprep.subr.bf16.mxu0 0
  %2069 = vmatpush2.bf16.msra.mxu0 0
  %2070 = vmatprep.subr.bf16.mxu0 0
  %2071 = vmatpush2.bf16.msra.mxu0 0
  %2072 = vmatprep.subr.bf16.mxu0 0
  %2073 = vmatpush2.bf16.msra.mxu0 0
  %2074 = vmatprep.subr.bf16.mxu0 %v2043
  %2075 = vmatpush2.bf16.msra.mxu0 %v2040
  %2076 = vmatprep.subr.bf16.mxu0 %v2001
  %2077 = vmatpush2.bf16.msra.mxu0 %v2000
  %2078 = vmatprep.subr.bf16.mxu0 %v1998
  %2079 = vmatpush2.bf16.msra.mxu0 %v1997
  %2080 = vmatprep.mubr.bf16.mxu0 %v2037
  %2081 = vmatmul.mubr.bf16.gmra.mxu0 %v1866
  %v2082 = vpop.f32.mrf.mxu0
  %v2083 = vadd.f32 0.0, %v2082
  %v2084 = vpop.f32.mrf.mxu0
  %v2085 = vadd.f32 0.0, %v2084
  %v2086 = vpop.f32.mrf.mxu0
  %v2087 = vpop.f32.mrf.mxu0
  %2088 = vdwg.mxu0
  %2089 = vmatprep.subr.bf16.mxu0 0
  %2090 = vmatpush1.bf16.msra.mxu0 %v1996
  %2091 = vmatprep.subr.bf16.mxu0 0
  %2092 = vmatpush1.bf16.msra.mxu0 %v1993
  %2093 = vmatprep.subr.bf16.mxu0 0
  %2094 = vmatpush1.bf16.msra.mxu0 %v1990
  %2095 = vmatprep.subr.bf16.mxu0 0
  %2096 = vmatpush1.bf16.msra.mxu0 %v1987
  %2097 = vmatprep.subr.bf16.mxu0 0
  %2098 = vmatpush1.bf16.msra.mxu0 %v1984
  %2099 = vmatprep.subr.bf16.mxu0 0
  %2100 = vmatpush1.bf16.msra.mxu0 %v1981
  %2101 = vmatprep.subr.bf16.mxu0 0
  %2102 = vmatpush1.bf16.msra.mxu0 %v1978
  %2103 = vmatprep.subr.bf16.mxu0 0
  %2104 = vmatpush1.bf16.msra.mxu0 %v1975
  %2105 = vmatprep.subr.bf16.mxu0 0
  %2106 = vmatpush2.bf16.msra.mxu0 0
  %2107 = vmatprep.subr.bf16.mxu0 0
  %2108 = vmatpush2.bf16.msra.mxu0 0
  %2109 = vmatprep.subr.bf16.mxu0 0
  %2110 = vmatpush2.bf16.msra.mxu0 0
  %2111 = vmatprep.subr.bf16.mxu0 0
  %2112 = vmatpush2.bf16.msra.mxu0 0
  %2113 = vmatprep.subr.bf16.mxu0 0
  %2114 = vmatpush2.bf16.msra.mxu0 0
  %2115 = vmatprep.subr.bf16.mxu0 0
  %2116 = vmatpush2.bf16.msra.mxu0 %v2046
  %2117 = vmatprep.subr.bf16.mxu0 0
  %2118 = vmatpush2.bf16.msra.mxu0 %v2002
  %2119 = vmatprep.subr.bf16.mxu0 0
  %2120 = vmatpush2.bf16.msra.mxu0 %v1999
  %2121 = vmatprep.mubr.bf16.mxu0 %v2037
  %2122 = vmatmul.mubr.bf16.gmra.mxu0 %v1866
  %v2123 = vpop.f32.mrf.mxu0
  %v2124 = vadd.f32 0.0, %v2123
  %v2125 = vpop.f32.mrf.mxu0
  %v2126 = vpop.f32.mrf.mxu0
  %v2127 = vpop.f32.mrf.mxu0
  %2128 = vdwg.mxu0
  %2131 = vrot.lane.b32.xlu0 %v2085, 112
  %v2132 = vpop.permute.xlu0 %2131
  %2133 = vrot.lane.b32.xlu0 %v2124, 112
  %v2134 = vpop.permute.xlu0 %2133
  %v2135 = vsel %vm363, %v2132, %v2134
  %v2138 = vmax.f32 %v2083, %v2135
  %v2139 = vmax.f32 %v2085, %v2134
  %2142 = vrot.lane.b32.xlu0 %v2138, 56
  %v2143 = vpop.permute.xlu0 %2142
  %2144 = vrot.lane.b32.xlu0 %v2139, 56
  %v2145 = vpop.permute.xlu0 %2144
  %v2146 = vsel %vm375, %v2143, %v2145
  %v2148 = vmax.f32 %v2138, %v2146
  %v2149 = vld [vmem:[%s2] sm:$0x1]
  %v2151 = vlaneseq
  %v2152 = vshrl.u32 %v2151, 7
  %v2153 = vsub.s32 0, %v2152
  %v2154 = vrot.slane %v2149, %v2153
  %v2156 = vadd.f32 %v2148, %v2154
  %v2157 = vsub.f32 0.0, %v2156
  %v2158 = vmul.f32 %v2157, 1.442695
  %v2159 = vpow.pop %v2158
  %v2160 = vadd.f32 %v2159, 1.0
  %v2161 = vrcp.pop %v2160
  %v2162 = vpack.c.bf16 %v2161, %v2161
  %2163 = vst.msk [vmem:[#allocation2 + $0x14] sm:$0xf] %vm393, %v2162
  %v2164 = vld [vmem:[%s0 + $0x8] sm:$0xff]
  %v2165 = vld [vmem:[%s1] sm:$0xff]
  %v2166 = vld [vmem:[%s1 + $0x8] sm:$0xf]
  %v2167 = vld [vmem:[%s1 + $0xc] sm:$0xff]
  %v2168 = vld [vmem:[%s1 + $0x14] sm:$0xf]
  %v2169 = vld [vmem:[%s1 + $0x18] sm:$0xff]
  %v2170 = vld [vmem:[%s1 + $0x20] sm:$0xf]
  %v2171 = vld [vmem:[%s1 + $0x24] sm:$0xff]
  %v2172 = vld [vmem:[%s1 + $0x2c] sm:$0xf]
  %v2173 = vld [vmem:[%s1 + $0x30] sm:$0xff]
  %v2174 = vld [vmem:[%s1 + $0x38] sm:$0xf]
  %v2175 = vld [vmem:[%s1 + $0x3c] sm:$0xff]
  %v2176 = vld [vmem:[%s1 + $0x44] sm:$0xf]
  %v2177 = vld [vmem:[%s1 + $0x48] sm:$0xff]
  %v2178 = vld [vmem:[%s1 + $0x50] sm:$0xf]
  %v2179 = vld [vmem:[%s1 + $0x54] sm:$0xff]
  %v2180 = vld [vmem:[%s1 + $0x5c] sm:$0xf]
  %v2181 = vld [vmem:[%s1 + $0x60] sm:$0xff]
  %v2182 = vld [vmem:[%s1 + $0x68] sm:$0xf]
  %v2183 = vld [vmem:[%s1 + $0x6c] sm:$0xff]
  %v2184 = vld [vmem:[%s1 + $0x74] sm:$0xf]
  %v2185 = vld [vmem:[%s1 + $0x78] sm:$0xff]
  %v2186 = vld [vmem:[%s1 + $0x80] sm:$0xf]
  %v2187 = vld [vmem:[%s1 + $0x84] sm:$0xff]
  %v2188 = vld [vmem:[%s1 + $0x8c] sm:$0xf]
  %v2189 = vld [vmem:[%s1 + $0x90] sm:$0xff]
  %v2190 = vld [vmem:[%s1 + $0x98] sm:$0xf]
  %v2191 = vld [vmem:[%s1 + $0x9c] sm:$0xff]
  %v2192 = vld [vmem:[%s1 + $0xa4] sm:$0xf]
  %v2193 = vld [vmem:[%s1 + $0xa8] sm:$0xff]
  %v2194 = vld [vmem:[%s1 + $0xb0] sm:$0xf]
  %v2195 = vld [vmem:[%s1 + $0xb4] sm:$0xff]
  %v2196 = vld [vmem:[%s1 + $0xbc] sm:$0xf]
  %v2197 = vld [vmem:[%s1 + $0xc0] sm:$0xff]
  %v2198 = vld [vmem:[%s1 + $0xc8] sm:$0xf]
  %v2199 = vld [vmem:[%s1 + $0xcc] sm:$0xff]
  %v2200 = vld [vmem:[%s1 + $0xd4] sm:$0xf]
  %v2201 = vld [vmem:[%s1 + $0xd8] sm:$0xff]
  %v2202 = vld [vmem:[%s1 + $0xe0] sm:$0xf]
  %v2203 = vld [vmem:[%s1 + $0xe4] sm:$0xff]
  %v2204 = vld [vmem:[%s1 + $0xec] sm:$0xf]
  %v2205 = vld [vmem:[%s1 + $0xf0] sm:$0xff]
  %v2206 = vld [vmem:[%s1 + $0xf8] sm:$0xf]
  %v2208 = vunpack.c.l.b16 %v2164
  %v2209 = vunpack.c.h.b16 %v2164
  %v2210 = vpack.c.b16 %v2208, %v2208
  %v2211 = vpack.c.b16 %v2209, %v2209
  %2212 = vrot.lane.b32.xlu0 %v2210, 48
  %v2213 = vpop.permute.xlu0 %2212
  %2214 = vrot.lane.b32.xlu0 %v2211, 48
  %v2215 = vpop.permute.xlu0 %2214
  %vm2216 = vcmask 392192
  %v2217 = vsel %vm2216, %v2213, %v2215
  %v2261 = vunpack.c.l.b16 %v2165
  %v2262 = vunpack.c.h.b16 %v2165
  %v2263 = vunpack.c.l.b16 %v2166
  %v2264 = vunpack.c.l.b16 %v2167
  %v2265 = vunpack.c.h.b16 %v2167
  %v2266 = vunpack.c.l.b16 %v2168
  %v2267 = vunpack.c.l.b16 %v2169
  %v2268 = vunpack.c.h.b16 %v2169
  %v2269 = vunpack.c.l.b16 %v2170
  %v2270 = vunpack.c.l.b16 %v2171
  %v2271 = vunpack.c.h.b16 %v2171
  %v2272 = vunpack.c.l.b16 %v2172
  %v2273 = vunpack.c.l.b16 %v2173
  %v2274 = vunpack.c.h.b16 %v2173
  %v2275 = vunpack.c.l.b16 %v2174
  %v2276 = vunpack.c.l.b16 %v2175
  %v2277 = vunpack.c.h.b16 %v2175
  %v2278 = vunpack.c.l.b16 %v2176
  %v2279 = vunpack.c.l.b16 %v2177
  %v2280 = vunpack.c.h.b16 %v2177
  %v2281 = vunpack.c.l.b16 %v2178
  %v2282 = vunpack.c.l.b16 %v2179
  %v2283 = vunpack.c.h.b16 %v2179
  %v2284 = vunpack.c.l.b16 %v2180
  %v2285 = vunpack.c.l.b16 %v2181
  %v2286 = vunpack.c.h.b16 %v2181
  %v2287 = vunpack.c.l.b16 %v2182
  %v2288 = vunpack.c.l.b16 %v2183
  %v2289 = vunpack.c.h.b16 %v2183
  %v2290 = vunpack.c.l.b16 %v2184
  %v2291 = vunpack.c.l.b16 %v2185
  %v2292 = vunpack.c.h.b16 %v2185
  %v2293 = vunpack.c.l.b16 %v2186
  %v2294 = vunpack.c.l.b16 %v2187
  %v2295 = vunpack.c.h.b16 %v2187
  %v2296 = vunpack.c.l.b16 %v2188
  %v2297 = vunpack.c.l.b16 %v2189
  %v2298 = vunpack.c.h.b16 %v2189
  %v2299 = vunpack.c.l.b16 %v2190
  %v2300 = vunpack.c.l.b16 %v2191
  %v2301 = vunpack.c.h.b16 %v2191
  %v2302 = vunpack.c.l.b16 %v2192
  %v2303 = vunpack.c.l.b16 %v2193
  %v2304 = vunpack.c.h.b16 %v2193
  %v2305 = vunpack.c.l.b16 %v2194
  %v2306 = vunpack.c.l.b16 %v2195
  %v2307 = vunpack.c.h.b16 %v2195
  %v2308 = vunpack.c.l.b16 %v2196
  %v2309 = vunpack.c.l.b16 %v2197
  %v2310 = vunpack.c.h.b16 %v2197
  %v2311 = vunpack.c.l.b16 %v2198
  %v2312 = vunpack.c.l.b16 %v2199
  %v2313 = vunpack.c.h.b16 %v2199
  %v2314 = vunpack.c.l.b16 %v2200
  %v2315 = vunpack.c.l.b16 %v2201
  %v2316 = vunpack.c.h.b16 %v2201
  %v2317 = vunpack.c.l.b16 %v2202
  %v2318 = vunpack.c.l.b16 %v2203
  %v2319 = vunpack.c.h.b16 %v2203
  %v2320 = vunpack.c.l.b16 %v2204
  %v2321 = vunpack.c.l.b16 %v2205
  %v2322 = vunpack.c.h.b16 %v2205
  %v2323 = vunpack.c.l.b16 %v2206
  %v2324 = vpack.c.b16 %v2264, %v2261
  %v2325 = vpack.c.b16 %v2265, %v2262
  %v2326 = vpack.c.b16 %v2266, %v2263
  %v2327 = vpack.c.b16 %v2270, %v2267
  %v2328 = vpack.c.b16 %v2271, %v2268
  %v2329 = vpack.c.b16 %v2272, %v2269
  %v2330 = vpack.c.b16 %v2276, %v2273
  %v2331 = vpack.c.b16 %v2277, %v2274
  %v2332 = vpack.c.b16 %v2278, %v2275
  %v2333 = vpack.c.b16 %v2282, %v2279
  %v2334 = vpack.c.b16 %v2283, %v2280
  %v2335 = vpack.c.b16 %v2284, %v2281
  %v2336 = vpack.c.b16 %v2288, %v2285
  %v2337 = vpack.c.b16 %v2289, %v2286
  %v2338 = vpack.c.b16 %v2290, %v2287
  %v2339 = vpack.c.b16 %v2294, %v2291
  %v2340 = vpack.c.b16 %v2295, %v2292
  %v2341 = vpack.c.b16 %v2296, %v2293
  %v2342 = vpack.c.b16 %v2300, %v2297
  %v2343 = vpack.c.b16 %v2301, %v2298
  %v2344 = vpack.c.b16 %v2302, %v2299
  %v2345 = vpack.c.b16 %v2306, %v2303
  %v2346 = vpack.c.b16 %v2307, %v2304
  %v2347 = vpack.c.b16 %v2308, %v2305
  %v2348 = vpack.c.b16 %v2312, %v2309
  %v2349 = vpack.c.b16 %v2313, %v2310
  %v2350 = vpack.c.b16 %v2314, %v2311
  %v2351 = vpack.c.b16 %v2318, %v2315
  %v2352 = vpack.c.b16 %v2319, %v2316
  %v2353 = vpack.c.b16 %v2320, %v2317
  %v2354 = vpack.c.b16 %v2321, %v2321
  %v2355 = vpack.c.b16 %v2322, %v2322
  %v2356 = vpack.c.b16 %v2323, %v2323
  %v2388 = vsel %vm262, %v2215, 0
  %v2391 = vsel %vm266, %v2354, 0
  %v2394 = vsel %vm266, %v2355, 0
  %v2397 = vsel %vm266, %v2356, 0
  %2399 = vmatprep.subr.bf16.mxu0 %v2346
  %2400 = vmatpush1.bf16.msra.mxu0 %v2345
  %2401 = vmatprep.subr.bf16.mxu0 %v2343
  %2402 = vmatpush1.bf16.msra.mxu0 %v2342
  %2403 = vmatprep.subr.bf16.mxu0 %v2340
  %2404 = vmatpush1.bf16.msra.mxu0 %v2339
  %2405 = vmatprep.subr.bf16.mxu0 %v2337
  %2406 = vmatpush1.bf16.msra.mxu0 %v2336
  %2407 = vmatprep.subr.bf16.mxu0 %v2334
  %2408 = vmatpush1.bf16.msra.mxu0 %v2333
  %2409 = vmatprep.subr.bf16.mxu0 %v2331
  %2410 = vmatpush1.bf16.msra.mxu0 %v2330
  %2411 = vmatprep.subr.bf16.mxu0 %v2328
  %2412 = vmatpush1.bf16.msra.mxu0 %v2327
  %2413 = vmatprep.subr.bf16.mxu0 %v2325
  %2414 = vmatpush1.bf16.msra.mxu0 %v2324
  %2415 = vmatprep.subr.bf16.mxu0 0
  %2416 = vmatpush2.bf16.msra.mxu0 0
  %2417 = vmatprep.subr.bf16.mxu0 0
  %2418 = vmatpush2.bf16.msra.mxu0 0
  %2419 = vmatprep.subr.bf16.mxu0 0
  %2420 = vmatpush2.bf16.msra.mxu0 0
  %2421 = vmatprep.subr.bf16.mxu0 0
  %2422 = vmatpush2.bf16.msra.mxu0 0
  %2423 = vmatprep.subr.bf16.mxu0 0
  %2424 = vmatpush2.bf16.msra.mxu0 0
  %2425 = vmatprep.subr.bf16.mxu0 %v2394
  %2426 = vmatpush2.bf16.msra.mxu0 %v2391
  %2427 = vmatprep.subr.bf16.mxu0 %v2352
  %2428 = vmatpush2.bf16.msra.mxu0 %v2351
  %2429 = vmatprep.subr.bf16.mxu0 %v2349
  %2430 = vmatpush2.bf16.msra.mxu0 %v2348
  %2431 = vmatprep.mubr.bf16.mxu0 %v2388
  %2432 = vmatmul.mubr.bf16.gmra.mxu0 %v2217
  %v2433 = vpop.f32.mrf.mxu0
  %v2434 = vadd.f32 0.0, %v2433
  %v2435 = vpop.f32.mrf.mxu0
  %v2436 = vadd.f32 0.0, %v2435
  %v2437 = vpop.f32.mrf.mxu0
  %v2438 = vpop.f32.mrf.mxu0
  %2439 = vdwg.mxu0
  %2440 = vmatprep.subr.bf16.mxu0 0
  %2441 = vmatpush1.bf16.msra.mxu0 %v2347
  %2442 = vmatprep.subr.bf16.mxu0 0
  %2443 = vmatpush1.bf16.msra.mxu0 %v2344
  %2444 = vmatprep.subr.bf16.mxu0 0
  %2445 = vmatpush1.bf16.msra.mxu0 %v2341
  %2446 = vmatprep.subr.bf16.mxu0 0
  %2447 = vmatpush1.bf16.msra.mxu0 %v2338
  %2448 = vmatprep.subr.bf16.mxu0 0
  %2449 = vmatpush1.bf16.msra.mxu0 %v2335
  %2450 = vmatprep.subr.bf16.mxu0 0
  %2451 = vmatpush1.bf16.msra.mxu0 %v2332
  %2452 = vmatprep.subr.bf16.mxu0 0
  %2453 = vmatpush1.bf16.msra.mxu0 %v2329
  %2454 = vmatprep.subr.bf16.mxu0 0
  %2455 = vmatpush1.bf16.msra.mxu0 %v2326
  %2456 = vmatprep.subr.bf16.mxu0 0
  %2457 = vmatpush2.bf16.msra.mxu0 0
  %2458 = vmatprep.subr.bf16.mxu0 0
  %2459 = vmatpush2.bf16.msra.mxu0 0
  %2460 = vmatprep.subr.bf16.mxu0 0
  %2461 = vmatpush2.bf16.msra.mxu0 0
  %2462 = vmatprep.subr.bf16.mxu0 0
  %2463 = vmatpush2.bf16.msra.mxu0 0
  %2464 = vmatprep.subr.bf16.mxu0 0
  %2465 = vmatpush2.bf16.msra.mxu0 0
  %2466 = vmatprep.subr.bf16.mxu0 0
  %2467 = vmatpush2.bf16.msra.mxu0 %v2397
  %2468 = vmatprep.subr.bf16.mxu0 0
  %2469 = vmatpush2.bf16.msra.mxu0 %v2353
  %2470 = vmatprep.subr.bf16.mxu0 0
  %2471 = vmatpush2.bf16.msra.mxu0 %v2350
  %2472 = vmatprep.mubr.bf16.mxu0 %v2388
  %2473 = vmatmul.mubr.bf16.gmra.mxu0 %v2217
  %v2474 = vpop.f32.mrf.mxu0
  %v2475 = vadd.f32 0.0, %v2474
  %v2476 = vpop.f32.mrf.mxu0
  %v2477 = vpop.f32.mrf.mxu0
  %v2478 = vpop.f32.mrf.mxu0
  %2479 = vdwg.mxu0
  %2482 = vrot.lane.b32.xlu0 %v2436, 112
  %v2483 = vpop.permute.xlu0 %2482
  %2484 = vrot.lane.b32.xlu0 %v2475, 112
  %v2485 = vpop.permute.xlu0 %2484
  %v2486 = vsel %vm363, %v2483, %v2485
  %v2489 = vmax.f32 %v2434, %v2486
  %v2490 = vmax.f32 %v2436, %v2485
  %2493 = vrot.lane.b32.xlu0 %v2489, 56
  %v2494 = vpop.permute.xlu0 %2493
  %2495 = vrot.lane.b32.xlu0 %v2490, 56
  %v2496 = vpop.permute.xlu0 %2495
  %v2497 = vsel %vm375, %v2494, %v2496
  %v2499 = vmax.f32 %v2489, %v2497
  %v2500 = vld [vmem:[%s2] sm:$0x1]
  %v2502 = vlaneseq
  %v2503 = vshrl.u32 %v2502, 7
  %v2504 = vsub.s32 0, %v2503
  %v2505 = vrot.slane %v2500, %v2504
  %v2507 = vadd.f32 %v2499, %v2505
  %v2508 = vsub.f32 0.0, %v2507
  %v2509 = vmul.f32 %v2508, 1.442695
  %v2510 = vpow.pop %v2509
  %v2511 = vadd.f32 %v2510, 1.0
  %v2512 = vrcp.pop %v2511
  %v2513 = vpack.c.bf16 %v2512, %v2512
  %2514 = vst.msk [vmem:[#allocation2 + $0x18] sm:$0xf] %vm393, %v2513
  %v2515 = vld [vmem:[%s0 + $0xc] sm:$0xff]
  %v2516 = vld [vmem:[%s1] sm:$0xff]
  %v2517 = vld [vmem:[%s1 + $0x8] sm:$0xf]
  %v2518 = vld [vmem:[%s1 + $0xc] sm:$0xff]
  %v2519 = vld [vmem:[%s1 + $0x14] sm:$0xf]
  %v2520 = vld [vmem:[%s1 + $0x18] sm:$0xff]
  %v2521 = vld [vmem:[%s1 + $0x20] sm:$0xf]
  %v2522 = vld [vmem:[%s1 + $0x24] sm:$0xff]
  %v2523 = vld [vmem:[%s1 + $0x2c] sm:$0xf]
  %v2524 = vld [vmem:[%s1 + $0x30] sm:$0xff]
  %v2525 = vld [vmem:[%s1 + $0x38] sm:$0xf]
  %v2526 = vld [vmem:[%s1 + $0x3c] sm:$0xff]
  %v2527 = vld [vmem:[%s1 + $0x44] sm:$0xf]
  %v2528 = vld [vmem:[%s1 + $0x48] sm:$0xff]
  %v2529 = vld [vmem:[%s1 + $0x50] sm:$0xf]
  %v2530 = vld [vmem:[%s1 + $0x54] sm:$0xff]
  %v2531 = vld [vmem:[%s1 + $0x5c] sm:$0xf]
  %v2532 = vld [vmem:[%s1 + $0x60] sm:$0xff]
  %v2533 = vld [vmem:[%s1 + $0x68] sm:$0xf]
  %v2534 = vld [vmem:[%s1 + $0x6c] sm:$0xff]
  %v2535 = vld [vmem:[%s1 + $0x74] sm:$0xf]
  %v2536 = vld [vmem:[%s1 + $0x78] sm:$0xff]
  %v2537 = vld [vmem:[%s1 + $0x80] sm:$0xf]
  %v2538 = vld [vmem:[%s1 + $0x84] sm:$0xff]
  %v2539 = vld [vmem:[%s1 + $0x8c] sm:$0xf]
  %v2540 = vld [vmem:[%s1 + $0x90] sm:$0xff]
  %v2541 = vld [vmem:[%s1 + $0x98] sm:$0xf]
  %v2542 = vld [vmem:[%s1 + $0x9c] sm:$0xff]
  %v2543 = vld [vmem:[%s1 + $0xa4] sm:$0xf]
  %v2544 = vld [vmem:[%s1 + $0xa8] sm:$0xff]
  %v2545 = vld [vmem:[%s1 + $0xb0] sm:$0xf]
  %v2546 = vld [vmem:[%s1 + $0xb4] sm:$0xff]
  %v2547 = vld [vmem:[%s1 + $0xbc] sm:$0xf]
  %v2548 = vld [vmem:[%s1 + $0xc0] sm:$0xff]
  %v2549 = vld [vmem:[%s1 + $0xc8] sm:$0xf]
  %v2550 = vld [vmem:[%s1 + $0xcc] sm:$0xff]
  %v2551 = vld [vmem:[%s1 + $0xd4] sm:$0xf]
  %v2552 = vld [vmem:[%s1 + $0xd8] sm:$0xff]
  %v2553 = vld [vmem:[%s1 + $0xe0] sm:$0xf]
  %v2554 = vld [vmem:[%s1 + $0xe4] sm:$0xff]
  %v2555 = vld [vmem:[%s1 + $0xec] sm:$0xf]
  %v2556 = vld [vmem:[%s1 + $0xf0] sm:$0xff]
  %v2557 = vld [vmem:[%s1 + $0xf8] sm:$0xf]
  %v2559 = vunpack.c.l.b16 %v2515
  %v2560 = vunpack.c.h.b16 %v2515
  %v2561 = vpack.c.b16 %v2559, %v2559
  %v2562 = vpack.c.b16 %v2560, %v2560
  %2563 = vrot.lane.b32.xlu0 %v2561, 120
  %v2564 = vpop.permute.xlu0 %2563
  %2565 = vrot.lane.b32.xlu0 %v2562, 120
  %v2566 = vpop.permute.xlu0 %2565
  %vm2567 = vcmask 982016
  %v2568 = vsel %vm2567, %v2564, %v2566
  %v2612 = vunpack.c.l.b16 %v2516
  %v2613 = vunpack.c.h.b16 %v2516
  %v2614 = vunpack.c.l.b16 %v2517
  %v2615 = vunpack.c.l.b16 %v2518
  %v2616 = vunpack.c.h.b16 %v2518
  %v2617 = vunpack.c.l.b16 %v2519
  %v2618 = vunpack.c.l.b16 %v2520
  %v2619 = vunpack.c.h.b16 %v2520
  %v2620 = vunpack.c.l.b16 %v2521
  %v2621 = vunpack.c.l.b16 %v2522
  %v2622 = vunpack.c.h.b16 %v2522
  %v2623 = vunpack.c.l.b16 %v2523
  %v2624 = vunpack.c.l.b16 %v2524
  %v2625 = vunpack.c.h.b16 %v2524
  %v2626 = vunpack.c.l.b16 %v2525
  %v2627 = vunpack.c.l.b16 %v2526
  %v2628 = vunpack.c.h.b16 %v2526
  %v2629 = vunpack.c.l.b16 %v2527
  %v2630 = vunpack.c.l.b16 %v2528
  %v2631 = vunpack.c.h.b16 %v2528
  %v2632 = vunpack.c.l.b16 %v2529
  %v2633 = vunpack.c.l.b16 %v2530
  %v2634 = vunpack.c.h.b16 %v2530
  %v2635 = vunpack.c.l.b16 %v2531
  %v2636 = vunpack.c.l.b16 %v2532
  %v2637 = vunpack.c.h.b16 %v2532
  %v2638 = vunpack.c.l.b16 %v2533
  %v2639 = vunpack.c.l.b16 %v2534
  %v2640 = vunpack.c.h.b16 %v2534
  %v2641 = vunpack.c.l.b16 %v2535
  %v2642 = vunpack.c.l.b16 %v2536
  %v2643 = vunpack.c.h.b16 %v2536
  %v2644 = vunpack.c.l.b16 %v2537
  %v2645 = vunpack.c.l.b16 %v2538
  %v2646 = vunpack.c.h.b16 %v2538
  %v2647 = vunpack.c.l.b16 %v2539
  %v2648 = vunpack.c.l.b16 %v2540
  %v2649 = vunpack.c.h.b16 %v2540
  %v2650 = vunpack.c.l.b16 %v2541
  %v2651 = vunpack.c.l.b16 %v2542
  %v2652 = vunpack.c.h.b16 %v2542
  %v2653 = vunpack.c.l.b16 %v2543
  %v2654 = vunpack.c.l.b16 %v2544
  %v2655 = vunpack.c.h.b16 %v2544
  %v2656 = vunpack.c.l.b16 %v2545
  %v2657 = vunpack.c.l.b16 %v2546
  %v2658 = vunpack.c.h.b16 %v2546
  %v2659 = vunpack.c.l.b16 %v2547
  %v2660 = vunpack.c.l.b16 %v2548
  %v2661 = vunpack.c.h.b16 %v2548
  %v2662 = vunpack.c.l.b16 %v2549
  %v2663 = vunpack.c.l.b16 %v2550
  %v2664 = vunpack.c.h.b16 %v2550
  %v2665 = vunpack.c.l.b16 %v2551
  %v2666 = vunpack.c.l.b16 %v2552
  %v2667 = vunpack.c.h.b16 %v2552
  %v2668 = vunpack.c.l.b16 %v2553
  %v2669 = vunpack.c.l.b16 %v2554
  %v2670 = vunpack.c.h.b16 %v2554
  %v2671 = vunpack.c.l.b16 %v2555
  %v2672 = vunpack.c.l.b16 %v2556
  %v2673 = vunpack.c.h.b16 %v2556
  %v2674 = vunpack.c.l.b16 %v2557
  %v2675 = vpack.c.b16 %v2615, %v2612
  %v2676 = vpack.c.b16 %v2616, %v2613
  %v2677 = vpack.c.b16 %v2617, %v2614
  %v2678 = vpack.c.b16 %v2621, %v2618
  %v2679 = vpack.c.b16 %v2622, %v2619
  %v2680 = vpack.c.b16 %v2623, %v2620
  %v2681 = vpack.c.b16 %v2627, %v2624
  %v2682 = vpack.c.b16 %v2628, %v2625
  %v2683 = vpack.c.b16 %v2629, %v2626
  %v2684 = vpack.c.b16 %v2633, %v2630
  %v2685 = vpack.c.b16 %v2634, %v2631
  %v2686 = vpack.c.b16 %v2635, %v2632
  %v2687 = vpack.c.b16 %v2639, %v2636
  %v2688 = vpack.c.b16 %v2640, %v2637
  %v2689 = vpack.c.b16 %v2641, %v2638
  %v2690 = vpack.c.b16 %v2645, %v2642
  %v2691 = vpack.c.b16 %v2646, %v2643
  %v2692 = vpack.c.b16 %v2647, %v2644
  %v2693 = vpack.c.b16 %v2651, %v2648
  %v2694 = vpack.c.b16 %v2652, %v2649
  %v2695 = vpack.c.b16 %v2653, %v2650
  %v2696 = vpack.c.b16 %v2657, %v2654
  %v2697 = vpack.c.b16 %v2658, %v2655
  %v2698 = vpack.c.b16 %v2659, %v2656
  %v2699 = vpack.c.b16 %v2663, %v2660
  %v2700 = vpack.c.b16 %v2664, %v2661
  %v2701 = vpack.c.b16 %v2665, %v2662
  %v2702 = vpack.c.b16 %v2669, %v2666
  %v2703 = vpack.c.b16 %v2670, %v2667
  %v2704 = vpack.c.b16 %v2671, %v2668
  %v2705 = vpack.c.b16 %v2672, %v2672
  %v2706 = vpack.c.b16 %v2673, %v2673
  %v2707 = vpack.c.b16 %v2674, %v2674
  %v2739 = vsel %vm262, %v2566, 0
  %v2742 = vsel %vm266, %v2705, 0
  %v2745 = vsel %vm266, %v2706, 0
  %v2748 = vsel %vm266, %v2707, 0
  %2750 = vmatprep.subr.bf16.mxu0 %v2697
  %2751 = vmatpush1.bf16.msra.mxu0 %v2696
  %2752 = vmatprep.subr.bf16.mxu0 %v2694
  %2753 = vmatpush1.bf16.msra.mxu0 %v2693
  %2754 = vmatprep.subr.bf16.mxu0 %v2691
  %2755 = vmatpush1.bf16.msra.mxu0 %v2690
  %2756 = vmatprep.subr.bf16.mxu0 %v2688
  %2757 = vmatpush1.bf16.msra.mxu0 %v2687
  %2758 = vmatprep.subr.bf16.mxu0 %v2685
  %2759 = vmatpush1.bf16.msra.mxu0 %v2684
  %2760 = vmatprep.subr.bf16.mxu0 %v2682
  %2761 = vmatpush1.bf16.msra.mxu0 %v2681
  %2762 = vmatprep.subr.bf16.mxu0 %v2679
  %2763 = vmatpush1.bf16.msra.mxu0 %v2678
  %2764 = vmatprep.subr.bf16.mxu0 %v2676
  %2765 = vmatpush1.bf16.msra.mxu0 %v2675
  %2766 = vmatprep.subr.bf16.mxu0 0
  %2767 = vmatpush2.bf16.msra.mxu0 0
  %2768 = vmatprep.subr.bf16.mxu0 0
  %2769 = vmatpush2.bf16.msra.mxu0 0
  %2770 = vmatprep.subr.bf16.mxu0 0
  %2771 = vmatpush2.bf16.msra.mxu0 0
  %2772 = vmatprep.subr.bf16.mxu0 0
  %2773 = vmatpush2.bf16.msra.mxu0 0
  %2774 = vmatprep.subr.bf16.mxu0 0
  %2775 = vmatpush2.bf16.msra.mxu0 0
  %2776 = vmatprep.subr.bf16.mxu0 %v2745
  %2777 = vmatpush2.bf16.msra.mxu0 %v2742
  %2778 = vmatprep.subr.bf16.mxu0 %v2703
  %2779 = vmatpush2.bf16.msra.mxu0 %v2702
  %2780 = vmatprep.subr.bf16.mxu0 %v2700
  %2781 = vmatpush2.bf16.msra.mxu0 %v2699
  %2782 = vmatprep.mubr.bf16.mxu0 %v2739
  %2783 = vmatmul.mubr.bf16.gmra.mxu0 %v2568
  %v2784 = vpop.f32.mrf.mxu0
  %v2785 = vadd.f32 0.0, %v2784
  %v2786 = vpop.f32.mrf.mxu0
  %v2787 = vadd.f32 0.0, %v2786
  %v2788 = vpop.f32.mrf.mxu0
  %v2789 = vpop.f32.mrf.mxu0
  %2790 = vdwg.mxu0
  %2791 = vmatprep.subr.bf16.mxu0 0
  %2792 = vmatpush1.bf16.msra.mxu0 %v2698
  %2793 = vmatprep.subr.bf16.mxu0 0
  %2794 = vmatpush1.bf16.msra.mxu0 %v2695
  %2795 = vmatprep.subr.bf16.mxu0 0
  %2796 = vmatpush1.bf16.msra.mxu0 %v2692
  %2797 = vmatprep.subr.bf16.mxu0 0
  %2798 = vmatpush1.bf16.msra.mxu0 %v2689
  %2799 = vmatprep.subr.bf16.mxu0 0
  %2800 = vmatpush1.bf16.msra.mxu0 %v2686
  %2801 = vmatprep.subr.bf16.mxu0 0
  %2802 = vmatpush1.bf16.msra.mxu0 %v2683
  %2803 = vmatprep.subr.bf16.mxu0 0
  %2804 = vmatpush1.bf16.msra.mxu0 %v2680
  %2805 = vmatprep.subr.bf16.mxu0 0
  %2806 = vmatpush1.bf16.msra.mxu0 %v2677
  %2807 = vmatprep.subr.bf16.mxu0 0
  %2808 = vmatpush2.bf16.msra.mxu0 0
  %2809 = vmatprep.subr.bf16.mxu0 0
  %2810 = vmatpush2.bf16.msra.mxu0 0
  %2811 = vmatprep.subr.bf16.mxu0 0
  %2812 = vmatpush2.bf16.msra.mxu0 0
  %2813 = vmatprep.subr.bf16.mxu0 0
  %2814 = vmatpush2.bf16.msra.mxu0 0
  %2815 = vmatprep.subr.bf16.mxu0 0
  %2816 = vmatpush2.bf16.msra.mxu0 0
  %2817 = vmatprep.subr.bf16.mxu0 0
  %2818 = vmatpush2.bf16.msra.mxu0 %v2748
  %2819 = vmatprep.subr.bf16.mxu0 0
  %2820 = vmatpush2.bf16.msra.mxu0 %v2704
  %2821 = vmatprep.subr.bf16.mxu0 0
  %2822 = vmatpush2.bf16.msra.mxu0 %v2701
  %2823 = vmatprep.mubr.bf16.mxu0 %v2739
  %2824 = vmatmul.mubr.bf16.gmra.mxu0 %v2568
  %v2825 = vpop.f32.mrf.mxu0
  %v2826 = vadd.f32 0.0, %v2825
  %v2827 = vpop.f32.mrf.mxu0
  %v2828 = vpop.f32.mrf.mxu0
  %v2829 = vpop.f32.mrf.mxu0
  %2830 = vdwg.mxu0
  %2833 = vrot.lane.b32.xlu0 %v2787, 112
  %v2834 = vpop.permute.xlu0 %2833
  %2835 = vrot.lane.b32.xlu0 %v2826, 112
  %v2836 = vpop.permute.xlu0 %2835
  %v2837 = vsel %vm363, %v2834, %v2836
  %v2840 = vmax.f32 %v2785, %v2837
  %v2841 = vmax.f32 %v2787, %v2836
  %2844 = vrot.lane.b32.xlu0 %v2840, 56
  %v2845 = vpop.permute.xlu0 %2844
  %2846 = vrot.lane.b32.xlu0 %v2841, 56
  %v2847 = vpop.permute.xlu0 %2846
  %v2848 = vsel %vm375, %v2845, %v2847
  %v2850 = vmax.f32 %v2840, %v2848
  %v2851 = vld [vmem:[%s2] sm:$0x1]
  %v2853 = vlaneseq
  %v2854 = vshrl.u32 %v2853, 7
  %v2855 = vsub.s32 0, %v2854
  %v2856 = vrot.slane %v2851, %v2855
  %v2858 = vadd.f32 %v2850, %v2856
  %v2859 = vsub.f32 0.0, %v2858
  %v2860 = vmul.f32 %v2859, 1.442695
  %v2861 = vpow.pop %v2860
  %v2862 = vadd.f32 %v2861, 1.0
  %v2863 = vrcp.pop %v2862
  %v2864 = vpack.c.bf16 %v2863, %v2863
  %2865 = vst.msk [vmem:[#allocation2 + $0x1c] sm:$0xf] %vm393, %v2864
  %v2866 = vld [vmem:[%s0 + $0xc] sm:$0xff]
  %v2867 = vld [vmem:[%s1] sm:$0xff]
  %v2868 = vld [vmem:[%s1 + $0x8] sm:$0xf]
  %v2869 = vld [vmem:[%s1 + $0xc] sm:$0xff]
  %v2870 = vld [vmem:[%s1 + $0x14] sm:$0xf]
  %v2871 = vld [vmem:[%s1 + $0x18] sm:$0xff]
  %v2872 = vld [vmem:[%s1 + $0x20] sm:$0xf]
  %v2873 = vld [vmem:[%s1 + $0x24] sm:$0xff]
  %v2874 = vld [vmem:[%s1 + $0x2c] sm:$0xf]
  %v2875 = vld [vmem:[%s1 + $0x30] sm:$0xff]
  %v2876 = vld [vmem:[%s1 + $0x38] sm:$0xf]
  %v2877 = vld [vmem:[%s1 + $0x3c] sm:$0xff]
  %v2878 = vld [vmem:[%s1 + $0x44] sm:$0xf]
  %v2879 = vld [vmem:[%s1 + $0x48] sm:$0xff]
  %v2880 = vld [vmem:[%s1 + $0x50] sm:$0xf]
  %v2881 = vld [vmem:[%s1 + $0x54] sm:$0xff]
  %v2882 = vld [vmem:[%s1 + $0x5c] sm:$0xf]
  %v2883 = vld [vmem:[%s1 + $0x60] sm:$0xff]
  %v2884 = vld [vmem:[%s1 + $0x68] sm:$0xf]
  %v2885 = vld [vmem:[%s1 + $0x6c] sm:$0xff]
  %v2886 = vld [vmem:[%s1 + $0x74] sm:$0xf]
  %v2887 = vld [vmem:[%s1 + $0x78] sm:$0xff]
  %v2888 = vld [vmem:[%s1 + $0x80] sm:$0xf]
  %v2889 = vld [vmem:[%s1 + $0x84] sm:$0xff]
  %v2890 = vld [vmem:[%s1 + $0x8c] sm:$0xf]
  %v2891 = vld [vmem:[%s1 + $0x90] sm:$0xff]
  %v2892 = vld [vmem:[%s1 + $0x98] sm:$0xf]
  %v2893 = vld [vmem:[%s1 + $0x9c] sm:$0xff]
  %v2894 = vld [vmem:[%s1 + $0xa4] sm:$0xf]
  %v2895 = vld [vmem:[%s1 + $0xa8] sm:$0xff]
  %v2896 = vld [vmem:[%s1 + $0xb0] sm:$0xf]
  %v2897 = vld [vmem:[%s1 + $0xb4] sm:$0xff]
  %v2898 = vld [vmem:[%s1 + $0xbc] sm:$0xf]
  %v2899 = vld [vmem:[%s1 + $0xc0] sm:$0xff]
  %v2900 = vld [vmem:[%s1 + $0xc8] sm:$0xf]
  %v2901 = vld [vmem:[%s1 + $0xcc] sm:$0xff]
  %v2902 = vld [vmem:[%s1 + $0xd4] sm:$0xf]
  %v2903 = vld [vmem:[%s1 + $0xd8] sm:$0xff]
  %v2904 = vld [vmem:[%s1 + $0xe0] sm:$0xf]
  %v2905 = vld [vmem:[%s1 + $0xe4] sm:$0xff]
  %v2906 = vld [vmem:[%s1 + $0xec] sm:$0xf]
  %v2907 = vld [vmem:[%s1 + $0xf0] sm:$0xff]
  %v2908 = vld [vmem:[%s1 + $0xf8] sm:$0xf]
  %v2910 = vunpack.c.l.b16 %v2866
  %v2911 = vunpack.c.h.b16 %v2866
  %v2912 = vpack.c.b16 %v2910, %v2910
  %v2913 = vpack.c.b16 %v2911, %v2911
  %2914 = vrot.lane.b32.xlu0 %v2912, 64
  %v2915 = vpop.permute.xlu0 %2914
  %2916 = vrot.lane.b32.xlu0 %v2913, 64
  %v2917 = vpop.permute.xlu0 %2916
  %vm2918 = vcmask 523264
  %v2919 = vsel %vm2918, %v2915, %v2917
  %v2963 = vunpack.c.l.b16 %v2867
  %v2964 = vunpack.c.h.b16 %v2867
  %v2965 = vunpack.c.l.b16 %v2868
  %v2966 = vunpack.c.l.b16 %v2869
  %v2967 = vunpack.c.h.b16 %v2869
  %v2968 = vunpack.c.l.b16 %v2870
  %v2969 = vunpack.c.l.b16 %v2871
  %v2970 = vunpack.c.h.b16 %v2871
  %v2971 = vunpack.c.l.b16 %v2872
  %v2972 = vunpack.c.l.b16 %v2873
  %v2973 = vunpack.c.h.b16 %v2873
  %v2974 = vunpack.c.l.b16 %v2874
  %v2975 = vunpack.c.l.b16 %v2875
  %v2976 = vunpack.c.h.b16 %v2875
  %v2977 = vunpack.c.l.b16 %v2876
  %v2978 = vunpack.c.l.b16 %v2877
  %v2979 = vunpack.c.h.b16 %v2877
  %v2980 = vunpack.c.l.b16 %v2878
  %v2981 = vunpack.c.l.b16 %v2879
  %v2982 = vunpack.c.h.b16 %v2879
  %v2983 = vunpack.c.l.b16 %v2880
  %v2984 = vunpack.c.l.b16 %v2881
  %v2985 = vunpack.c.h.b16 %v2881
  %v2986 = vunpack.c.l.b16 %v2882
  %v2987 = vunpack.c.l.b16 %v2883
  %v2988 = vunpack.c.h.b16 %v2883
  %v2989 = vunpack.c.l.b16 %v2884
  %v2990 = vunpack.c.l.b16 %v2885
  %v2991 = vunpack.c.h.b16 %v2885
  %v2992 = vunpack.c.l.b16 %v2886
  %v2993 = vunpack.c.l.b16 %v2887
  %v2994 = vunpack.c.h.b16 %v2887
  %v2995 = vunpack.c.l.b16 %v2888
  %v2996 = vunpack.c.l.b16 %v2889
  %v2997 = vunpack.c.h.b16 %v2889
  %v2998 = vunpack.c.l.b16 %v2890
  %v2999 = vunpack.c.l.b16 %v2891
  %v3000 = vunpack.c.h.b16 %v2891
  %v3001 = vunpack.c.l.b16 %v2892
  %v3002 = vunpack.c.l.b16 %v2893
  %v3003 = vunpack.c.h.b16 %v2893
  %v3004 = vunpack.c.l.b16 %v2894
  %v3005 = vunpack.c.l.b16 %v2895
  %v3006 = vunpack.c.h.b16 %v2895
  %v3007 = vunpack.c.l.b16 %v2896
  %v3008 = vunpack.c.l.b16 %v2897
  %v3009 = vunpack.c.h.b16 %v2897
  %v3010 = vunpack.c.l.b16 %v2898
  %v3011 = vunpack.c.l.b16 %v2899
  %v3012 = vunpack.c.h.b16 %v2899
  %v3013 = vunpack.c.l.b16 %v2900
  %v3014 = vunpack.c.l.b16 %v2901
  %v3015 = vunpack.c.h.b16 %v2901
  %v3016 = vunpack.c.l.b16 %v2902
  %v3017 = vunpack.c.l.b16 %v2903
  %v3018 = vunpack.c.h.b16 %v2903
  %v3019 = vunpack.c.l.b16 %v2904
  %v3020 = vunpack.c.l.b16 %v2905
  %v3021 = vunpack.c.h.b16 %v2905
  %v3022 = vunpack.c.l.b16 %v2906
  %v3023 = vunpack.c.l.b16 %v2907
  %v3024 = vunpack.c.h.b16 %v2907
  %v3025 = vunpack.c.l.b16 %v2908
  %v3026 = vpack.c.b16 %v2966, %v2963
  %v3027 = vpack.c.b16 %v2967, %v2964
  %v3028 = vpack.c.b16 %v2968, %v2965
  %v3029 = vpack.c.b16 %v2972, %v2969
  %v3030 = vpack.c.b16 %v2973, %v2970
  %v3031 = vpack.c.b16 %v2974, %v2971
  %v3032 = vpack.c.b16 %v2978, %v2975
  %v3033 = vpack.c.b16 %v2979, %v2976
  %v3034 = vpack.c.b16 %v2980, %v2977
  %v3035 = vpack.c.b16 %v2984, %v2981
  %v3036 = vpack.c.b16 %v2985, %v2982
  %v3037 = vpack.c.b16 %v2986, %v2983
  %v3038 = vpack.c.b16 %v2990, %v2987
  %v3039 = vpack.c.b16 %v2991, %v2988
  %v3040 = vpack.c.b16 %v2992, %v2989
  %v3041 = vpack.c.b16 %v2996, %v2993
  %v3042 = vpack.c.b16 %v2997, %v2994
  %v3043 = vpack.c.b16 %v2998, %v2995
  %v3044 = vpack.c.b16 %v3002, %v2999
  %v3045 = vpack.c.b16 %v3003, %v3000
  %v3046 = vpack.c.b16 %v3004, %v3001
  %v3047 = vpack.c.b16 %v3008, %v3005
  %v3048 = vpack.c.b16 %v3009, %v3006
  %v3049 = vpack.c.b16 %v3010, %v3007
  %v3050 = vpack.c.b16 %v3014, %v3011
  %v3051 = vpack.c.b16 %v3015, %v3012
  %v3052 = vpack.c.b16 %v3016, %v3013
  %v3053 = vpack.c.b16 %v3020, %v3017
  %v3054 = vpack.c.b16 %v3021, %v3018
  %v3055 = vpack.c.b16 %v3022, %v3019
  %v3056 = vpack.c.b16 %v3023, %v3023
  %v3057 = vpack.c.b16 %v3024, %v3024
  %v3058 = vpack.c.b16 %v3025, %v3025
  %v3090 = vsel %vm262, %v2917, 0
  %v3093 = vsel %vm266, %v3056, 0
  %v3096 = vsel %vm266, %v3057, 0
  %v3099 = vsel %vm266, %v3058, 0
  %3101 = vmatprep.subr.bf16.mxu0 %v3048
  %3102 = vmatpush1.bf16.msra.mxu0 %v3047
  %3103 = vmatprep.subr.bf16.mxu0 %v3045
  %3104 = vmatpush1.bf16.msra.mxu0 %v3044
  %3105 = vmatprep.subr.bf16.mxu0 %v3042
  %3106 = vmatpush1.bf16.msra.mxu0 %v3041
  %3107 = vmatprep.subr.bf16.mxu0 %v3039
  %3108 = vmatpush1.bf16.msra.mxu0 %v3038
  %3109 = vmatprep.subr.bf16.mxu0 %v3036
  %3110 = vmatpush1.bf16.msra.mxu0 %v3035
  %3111 = vmatprep.subr.bf16.mxu0 %v3033
  %3112 = vmatpush1.bf16.msra.mxu0 %v3032
  %3113 = vmatprep.subr.bf16.mxu0 %v3030
  %3114 = vmatpush1.bf16.msra.mxu0 %v3029
  %3115 = vmatprep.subr.bf16.mxu0 %v3027
  %3116 = vmatpush1.bf16.msra.mxu0 %v3026
  %3117 = vmatprep.subr.bf16.mxu0 0
  %3118 = vmatpush2.bf16.msra.mxu0 0
  %3119 = vmatprep.subr.bf16.mxu0 0
  %3120 = vmatpush2.bf16.msra.mxu0 0
  %3121 = vmatprep.subr.bf16.mxu0 0
  %3122 = vmatpush2.bf16.msra.mxu0 0
  %3123 = vmatprep.subr.bf16.mxu0 0
  %3124 = vmatpush2.bf16.msra.mxu0 0
  %3125 = vmatprep.subr.bf16.mxu0 0
  %3126 = vmatpush2.bf16.msra.mxu0 0
  %3127 = vmatprep.subr.bf16.mxu0 %v3096
  %3128 = vmatpush2.bf16.msra.mxu0 %v3093
  %3129 = vmatprep.subr.bf16.mxu0 %v3054
  %3130 = vmatpush2.bf16.msra.mxu0 %v3053
  %3131 = vmatprep.subr.bf16.mxu0 %v3051
  %3132 = vmatpush2.bf16.msra.mxu0 %v3050
  %3133 = vmatprep.mubr.bf16.mxu0 %v3090
  %3134 = vmatmul.mubr.bf16.gmra.mxu0 %v2919
  %v3135 = vpop.f32.mrf.mxu0
  %v3136 = vadd.f32 0.0, %v3135
  %v3137 = vpop.f32.mrf.mxu0
  %v3138 = vadd.f32 0.0, %v3137
  %v3139 = vpop.f32.mrf.mxu0
  %v3140 = vpop.f32.mrf.mxu0
  %3141 = vdwg.mxu0
  %3142 = vmatprep.subr.bf16.mxu0 0
  %3143 = vmatpush1.bf16.msra.mxu0 %v3049
  %3144 = vmatprep.subr.bf16.mxu0 0
  %3145 = vmatpush1.bf16.msra.mxu0 %v3046
  %3146 = vmatprep.subr.bf16.mxu0 0
  %3147 = vmatpush1.bf16.msra.mxu0 %v3043
  %3148 = vmatprep.subr.bf16.mxu0 0
  %3149 = vmatpush1.bf16.msra.mxu0 %v3040
  %3150 = vmatprep.subr.bf16.mxu0 0
  %3151 = vmatpush1.bf16.msra.mxu0 %v3037
  %3152 = vmatprep.subr.bf16.mxu0 0
  %3153 = vmatpush1.bf16.msra.mxu0 %v3034
  %3154 = vmatprep.subr.bf16.mxu0 0
  %3155 = vmatpush1.bf16.msra.mxu0 %v3031
  %3156 = vmatprep.subr.bf16.mxu0 0
  %3157 = vmatpush1.bf16.msra.mxu0 %v3028
  %3158 = vmatprep.subr.bf16.mxu0 0
  %3159 = vmatpush2.bf16.msra.mxu0 0
  %3160 = vmatprep.subr.bf16.mxu0 0
  %3161 = vmatpush2.bf16.msra.mxu0 0
  %3162 = vmatprep.subr.bf16.mxu0 0
  %3163 = vmatpush2.bf16.msra.mxu0 0
  %3164 = vmatprep.subr.bf16.mxu0 0
  %3165 = vmatpush2.bf16.msra.mxu0 0
  %3166 = vmatprep.subr.bf16.mxu0 0
  %3167 = vmatpush2.bf16.msra.mxu0 0
  %3168 = vmatprep.subr.bf16.mxu0 0
  %3169 = vmatpush2.bf16.msra.mxu0 %v3099
  %3170 = vmatprep.subr.bf16.mxu0 0
  %3171 = vmatpush2.bf16.msra.mxu0 %v3055
  %3172 = vmatprep.subr.bf16.mxu0 0
  %3173 = vmatpush2.bf16.msra.mxu0 %v3052
  %3174 = vmatprep.mubr.bf16.mxu0 %v3090
  %3175 = vmatmul.mubr.bf16.gmra.mxu0 %v2919
  %v3176 = vpop.f32.mrf.mxu0
  %v3177 = vadd.f32 0.0, %v3176
  %v3178 = vpop.f32.mrf.mxu0
  %v3179 = vpop.f32.mrf.mxu0
  %v3180 = vpop.f32.mrf.mxu0
  %3181 = vdwg.mxu0
  %3184 = vrot.lane.b32.xlu0 %v3138, 112
  %v3185 = vpop.permute.xlu0 %3184
  %3186 = vrot.lane.b32.xlu0 %v3177, 112
  %v3187 = vpop.permute.xlu0 %3186
  %v3188 = vsel %vm363, %v3185, %v3187
  %v3191 = vmax.f32 %v3136, %v3188
  %v3192 = vmax.f32 %v3138, %v3187
  %3195 = vrot.lane.b32.xlu0 %v3191, 56
  %v3196 = vpop.permute.xlu0 %3195
  %3197 = vrot.lane.b32.xlu0 %v3192, 56
  %v3198 = vpop.permute.xlu0 %3197
  %v3199 = vsel %vm375, %v3196, %v3198
  %v3201 = vmax.f32 %v3191, %v3199
  %v3202 = vld [vmem:[%s2] sm:$0x1]
  %v3204 = vlaneseq
  %v3205 = vshrl.u32 %v3204, 7
  %v3206 = vsub.s32 0, %v3205
  %v3207 = vrot.slane %v3202, %v3206
  %v3209 = vadd.f32 %v3201, %v3207
  %v3210 = vsub.f32 0.0, %v3209
  %v3211 = vmul.f32 %v3210, 1.442695
  %v3212 = vpow.pop %v3211
  %v3213 = vadd.f32 %v3212, 1.0
  %v3214 = vrcp.pop %v3213
  %v3215 = vpack.c.bf16 %v3214, %v3214
  %3216 = vst.msk [vmem:[#allocation2 + $0x20] sm:$0xf] %vm393, %v3215
  %v3217 = vld [vmem:[%s0 + $0xc] sm:$0xff]
  %v3218 = vld [vmem:[%s0 + $0x14] sm:$0xf]
  %v3219 = vld [vmem:[%s1] sm:$0xff]
  %v3220 = vld [vmem:[%s1 + $0x8] sm:$0xf]
  %v3221 = vld [vmem:[%s1 + $0xc] sm:$0xff]
  %v3222 = vld [vmem:[%s1 + $0x14] sm:$0xf]
  %v3223 = vld [vmem:[%s1 + $0x18] sm:$0xff]
  %v3224 = vld [vmem:[%s1 + $0x20] sm:$0xf]
  %v3225 = vld [vmem:[%s1 + $0x24] sm:$0xff]
  %v3226 = vld [vmem:[%s1 + $0x2c] sm:$0xf]
  %v3227 = vld [vmem:[%s1 + $0x30] sm:$0xff]
  %v3228 = vld [vmem:[%s1 + $0x38] sm:$0xf]
  %v3229 = vld [vmem:[%s1 + $0x3c] sm:$0xff]
  %v3230 = vld [vmem:[%s1 + $0x44] sm:$0xf]
  %v3231 = vld [vmem:[%s1 + $0x48] sm:$0xff]
  %v3232 = vld [vmem:[%s1 + $0x50] sm:$0xf]
  %v3233 = vld [vmem:[%s1 + $0x54] sm:$0xff]
  %v3234 = vld [vmem:[%s1 + $0x5c] sm:$0xf]
  %v3235 = vld [vmem:[%s1 + $0x60] sm:$0xff]
  %v3236 = vld [vmem:[%s1 + $0x68] sm:$0xf]
  %v3237 = vld [vmem:[%s1 + $0x6c] sm:$0xff]
  %v3238 = vld [vmem:[%s1 + $0x74] sm:$0xf]
  %v3239 = vld [vmem:[%s1 + $0x78] sm:$0xff]
  %v3240 = vld [vmem:[%s1 + $0x80] sm:$0xf]
  %v3241 = vld [vmem:[%s1 + $0x84] sm:$0xff]
  %v3242 = vld [vmem:[%s1 + $0x8c] sm:$0xf]
  %v3243 = vld [vmem:[%s1 + $0x90] sm:$0xff]
  %v3244 = vld [vmem:[%s1 + $0x98] sm:$0xf]
  %v3245 = vld [vmem:[%s1 + $0x9c] sm:$0xff]
  %v3246 = vld [vmem:[%s1 + $0xa4] sm:$0xf]
  %v3247 = vld [vmem:[%s1 + $0xa8] sm:$0xff]
  %v3248 = vld [vmem:[%s1 + $0xb0] sm:$0xf]
  %v3249 = vld [vmem:[%s1 + $0xb4] sm:$0xff]
  %v3250 = vld [vmem:[%s1 + $0xbc] sm:$0xf]
  %v3251 = vld [vmem:[%s1 + $0xc0] sm:$0xff]
  %v3252 = vld [vmem:[%s1 + $0xc8] sm:$0xf]
  %v3253 = vld [vmem:[%s1 + $0xcc] sm:$0xff]
  %v3254 = vld [vmem:[%s1 + $0xd4] sm:$0xf]
  %v3255 = vld [vmem:[%s1 + $0xd8] sm:$0xff]
  %v3256 = vld [vmem:[%s1 + $0xe0] sm:$0xf]
  %v3257 = vld [vmem:[%s1 + $0xe4] sm:$0xff]
  %v3258 = vld [vmem:[%s1 + $0xec] sm:$0xf]
  %v3259 = vld [vmem:[%s1 + $0xf0] sm:$0xff]
  %v3260 = vld [vmem:[%s1 + $0xf8] sm:$0xf]
  %v3263 = vunpack.c.l.b16 %v3217
  %v3264 = vunpack.c.h.b16 %v3217
  %v3265 = vunpack.c.l.b16 %v3218
  %v3266 = vpack.c.b16 %v3263, %v3263
  %v3267 = vpack.c.b16 %v3264, %v3264
  %v3268 = vpack.c.b16 %v3265, %v3265
  %3269 = vrot.lane.b32.xlu0 %v3266, 8
  %v3270 = vpop.permute.xlu0 %3269
  %3271 = vrot.lane.b32.xlu0 %v3267, 8
  %v3272 = vpop.permute.xlu0 %3271
  %3273 = vrot.lane.b32.xlu0 %v3268, 8
  %v3274 = vpop.permute.xlu0 %3273
  %vm3275 = vcmask 64512
  %v3276 = vsel %vm3275, %v3270, %v3272
  %v3277 = vsel %vm3275, %v3272, %v3274
  %v3321 = vunpack.c.l.b16 %v3219
  %v3322 = vunpack.c.h.b16 %v3219
  %v3323 = vunpack.c.l.b16 %v3220
  %v3324 = vunpack.c.l.b16 %v3221
  %v3325 = vunpack.c.h.b16 %v3221
  %v3326 = vunpack.c.l.b16 %v3222
  %v3327 = vunpack.c.l.b16 %v3223
  %v3328 = vunpack.c.h.b16 %v3223
  %v3329 = vunpack.c.l.b16 %v3224
  %v3330 = vunpack.c.l.b16 %v3225
  %v3331 = vunpack.c.h.b16 %v3225
  %v3332 = vunpack.c.l.b16 %v3226
  %v3333 = vunpack.c.l.b16 %v3227
  %v3334 = vunpack.c.h.b16 %v3227
  %v3335 = vunpack.c.l.b16 %v3228
  %v3336 = vunpack.c.l.b16 %v3229
  %v3337 = vunpack.c.h.b16 %v3229
  %v3338 = vunpack.c.l.b16 %v3230
  %v3339 = vunpack.c.l.b16 %v3231
  %v3340 = vunpack.c.h.b16 %v3231
  %v3341 = vunpack.c.l.b16 %v3232
  %v3342 = vunpack.c.l.b16 %v3233
  %v3343 = vunpack.c.h.b16 %v3233
  %v3344 = vunpack.c.l.b16 %v3234
  %v3345 = vunpack.c.l.b16 %v3235
  %v3346 = vunpack.c.h.b16 %v3235
  %v3347 = vunpack.c.l.b16 %v3236
  %v3348 = vunpack.c.l.b16 %v3237
  %v3349 = vunpack.c.h.b16 %v3237
  %v3350 = vunpack.c.l.b16 %v3238
  %v3351 = vunpack.c.l.b16 %v3239
  %v3352 = vunpack.c.h.b16 %v3239
  %v3353 = vunpack.c.l.b16 %v3240
  %v3354 = vunpack.c.l.b16 %v3241
  %v3355 = vunpack.c.h.b16 %v3241
  %v3356 = vunpack.c.l.b16 %v3242
  %v3357 = vunpack.c.l.b16 %v3243
  %v3358 = vunpack.c.h.b16 %v3243
  %v3359 = vunpack.c.l.b16 %v3244
  %v3360 = vunpack.c.l.b16 %v3245
  %v3361 = vunpack.c.h.b16 %v3245
  %v3362 = vunpack.c.l.b16 %v3246
  %v3363 = vunpack.c.l.b16 %v3247
  %v3364 = vunpack.c.h.b16 %v3247
  %v3365 = vunpack.c.l.b16 %v3248
  %v3366 = vunpack.c.l.b16 %v3249
  %v3367 = vunpack.c.h.b16 %v3249
  %v3368 = vunpack.c.l.b16 %v3250
  %v3369 = vunpack.c.l.b16 %v3251
  %v3370 = vunpack.c.h.b16 %v3251
  %v3371 = vunpack.c.l.b16 %v3252
  %v3372 = vunpack.c.l.b16 %v3253
  %v3373 = vunpack.c.h.b16 %v3253
  %v3374 = vunpack.c.l.b16 %v3254
  %v3375 = vunpack.c.l.b16 %v3255
  %v3376 = vunpack.c.h.b16 %v3255
  %v3377 = vunpack.c.l.b16 %v3256
  %v3378 = vunpack.c.l.b16 %v3257
  %v3379 = vunpack.c.h.b16 %v3257
  %v3380 = vunpack.c.l.b16 %v3258
  %v3381 = vunpack.c.l.b16 %v3259
  %v3382 = vunpack.c.h.b16 %v3259
  %v3383 = vunpack.c.l.b16 %v3260
  %v3384 = vpack.c.b16 %v3324, %v3321
  %v3385 = vpack.c.b16 %v3325, %v3322
  %v3386 = vpack.c.b16 %v3326, %v3323
  %v3387 = vpack.c.b16 %v3330, %v3327
  %v3388 = vpack.c.b16 %v3331, %v3328
  %v3389 = vpack.c.b16 %v3332, %v3329
  %v3390 = vpack.c.b16 %v3336, %v3333
  %v3391 = vpack.c.b16 %v3337, %v3334
  %v3392 = vpack.c.b16 %v3338, %v3335
  %v3393 = vpack.c.b16 %v3342, %v3339
  %v3394 = vpack.c.b16 %v3343, %v3340
  %v3395 = vpack.c.b16 %v3344, %v3341
  %v3396 = vpack.c.b16 %v3348, %v3345
  %v3397 = vpack.c.b16 %v3349, %v3346
  %v3398 = vpack.c.b16 %v3350, %v3347
  %v3399 = vpack.c.b16 %v3354, %v3351
  %v3400 = vpack.c.b16 %v3355, %v3352
  %v3401 = vpack.c.b16 %v3356, %v3353
  %v3402 = vpack.c.b16 %v3360, %v3357
  %v3403 = vpack.c.b16 %v3361, %v3358
  %v3404 = vpack.c.b16 %v3362, %v3359
  %v3405 = vpack.c.b16 %v3366, %v3363
  %v3406 = vpack.c.b16 %v3367, %v3364
  %v3407 = vpack.c.b16 %v3368, %v3365
  %v3408 = vpack.c.b16 %v3372, %v3369
  %v3409 = vpack.c.b16 %v3373, %v3370
  %v3410 = vpack.c.b16 %v3374, %v3371
  %v3411 = vpack.c.b16 %v3378, %v3375
  %v3412 = vpack.c.b16 %v3379, %v3376
  %v3413 = vpack.c.b16 %v3380, %v3377
  %v3414 = vpack.c.b16 %v3381, %v3381
  %v3415 = vpack.c.b16 %v3382, %v3382
  %v3416 = vpack.c.b16 %v3383, %v3383
  %v3448 = vsel %vm262, %v3277, 0
  %v3451 = vsel %vm266, %v3414, 0
  %v3454 = vsel %vm266, %v3415, 0
  %v3457 = vsel %vm266, %v3416, 0
  %3459 = vmatprep.subr.bf16.mxu0 %v3406
  %3460 = vmatpush1.bf16.msra.mxu0 %v3405
  %3461 = vmatprep.subr.bf16.mxu0 %v3403
  %3462 = vmatpush1.bf16.msra.mxu0 %v3402
  %3463 = vmatprep.subr.bf16.mxu0 %v3400
  %3464 = vmatpush1.bf16.msra.mxu0 %v3399
  %3465 = vmatprep.subr.bf16.mxu0 %v3397
  %3466 = vmatpush1.bf16.msra.mxu0 %v3396
  %3467 = vmatprep.subr.bf16.mxu0 %v3394
  %3468 = vmatpush1.bf16.msra.mxu0 %v3393
  %3469 = vmatprep.subr.bf16.mxu0 %v3391
  %3470 = vmatpush1.bf16.msra.mxu0 %v3390
  %3471 = vmatprep.subr.bf16.mxu0 %v3388
  %3472 = vmatpush1.bf16.msra.mxu0 %v3387
  %3473 = vmatprep.subr.bf16.mxu0 %v3385
  %3474 = vmatpush1.bf16.msra.mxu0 %v3384
  %3475 = vmatprep.subr.bf16.mxu0 0
  %3476 = vmatpush2.bf16.msra.mxu0 0
  %3477 = vmatprep.subr.bf16.mxu0 0
  %3478 = vmatpush2.bf16.msra.mxu0 0
  %3479 = vmatprep.subr.bf16.mxu0 0
  %3480 = vmatpush2.bf16.msra.mxu0 0
  %3481 = vmatprep.subr.bf16.mxu0 0
  %3482 = vmatpush2.bf16.msra.mxu0 0
  %3483 = vmatprep.subr.bf16.mxu0 0
  %3484 = vmatpush2.bf16.msra.mxu0 0
  %3485 = vmatprep.subr.bf16.mxu0 %v3454
  %3486 = vmatpush2.bf16.msra.mxu0 %v3451
  %3487 = vmatprep.subr.bf16.mxu0 %v3412
  %3488 = vmatpush2.bf16.msra.mxu0 %v3411
  %3489 = vmatprep.subr.bf16.mxu0 %v3409
  %3490 = vmatpush2.bf16.msra.mxu0 %v3408
  %3491 = vmatprep.mubr.bf16.mxu0 %v3448
  %3492 = vmatmul.mubr.bf16.gmra.mxu0 %v3276
  %v3493 = vpop.f32.mrf.mxu0
  %v3494 = vadd.f32 0.0, %v3493
  %v3495 = vpop.f32.mrf.mxu0
  %v3496 = vadd.f32 0.0, %v3495
  %v3497 = vpop.f32.mrf.mxu0
  %v3498 = vpop.f32.mrf.mxu0
  %3499 = vdwg.mxu0
  %3500 = vmatprep.subr.bf16.mxu0 0
  %3501 = vmatpush1.bf16.msra.mxu0 %v3407
  %3502 = vmatprep.subr.bf16.mxu0 0
  %3503 = vmatpush1.bf16.msra.mxu0 %v3404
  %3504 = vmatprep.subr.bf16.mxu0 0
  %3505 = vmatpush1.bf16.msra.mxu0 %v3401
  %3506 = vmatprep.subr.bf16.mxu0 0
  %3507 = vmatpush1.bf16.msra.mxu0 %v3398
  %3508 = vmatprep.subr.bf16.mxu0 0
  %3509 = vmatpush1.bf16.msra.mxu0 %v3395
  %3510 = vmatprep.subr.bf16.mxu0 0
  %3511 = vmatpush1.bf16.msra.mxu0 %v3392
  %3512 = vmatprep.subr.bf16.mxu0 0
  %3513 = vmatpush1.bf16.msra.mxu0 %v3389
  %3514 = vmatprep.subr.bf16.mxu0 0
  %3515 = vmatpush1.bf16.msra.mxu0 %v3386
  %3516 = vmatprep.subr.bf16.mxu0 0
  %3517 = vmatpush2.bf16.msra.mxu0 0
  %3518 = vmatprep.subr.bf16.mxu0 0
  %3519 = vmatpush2.bf16.msra.mxu0 0
  %3520 = vmatprep.subr.bf16.mxu0 0
  %3521 = vmatpush2.bf16.msra.mxu0 0
  %3522 = vmatprep.subr.bf16.mxu0 0
  %3523 = vmatpush2.bf16.msra.mxu0 0
  %3524 = vmatprep.subr.bf16.mxu0 0
  %3525 = vmatpush2.bf16.msra.mxu0 0
  %3526 = vmatprep.subr.bf16.mxu0 0
  %3527 = vmatpush2.bf16.msra.mxu0 %v3457
  %3528 = vmatprep.subr.bf16.mxu0 0
  %3529 = vmatpush2.bf16.msra.mxu0 %v3413
  %3530 = vmatprep.subr.bf16.mxu0 0
  %3531 = vmatpush2.bf16.msra.mxu0 %v3410
  %3532 = vmatprep.mubr.bf16.mxu0 %v3448
  %3533 = vmatmul.mubr.bf16.gmra.mxu0 %v3276
  %v3534 = vpop.f32.mrf.mxu0
  %v3535 = vadd.f32 0.0, %v3534
  %v3536 = vpop.f32.mrf.mxu0
  %v3537 = vpop.f32.mrf.mxu0
  %v3538 = vpop.f32.mrf.mxu0
  %3539 = vdwg.mxu0
  %3542 = vrot.lane.b32.xlu0 %v3496, 112
  %v3543 = vpop.permute.xlu0 %3542
  %3544 = vrot.lane.b32.xlu0 %v3535, 112
  %v3545 = vpop.permute.xlu0 %3544
  %v3546 = vsel %vm363, %v3543, %v3545
  %v3549 = vmax.f32 %v3494, %v3546
  %v3550 = vmax.f32 %v3496, %v3545
  %3553 = vrot.lane.b32.xlu0 %v3549, 56
  %v3554 = vpop.permute.xlu0 %3553
  %3555 = vrot.lane.b32.xlu0 %v3550, 56
  %v3556 = vpop.permute.xlu0 %3555
  %v3557 = vsel %vm375, %v3554, %v3556
  %v3559 = vmax.f32 %v3549, %v3557
  %v3560 = vld [vmem:[%s2] sm:$0x1]
  %v3562 = vlaneseq
  %v3563 = vshrl.u32 %v3562, 7
  %v3564 = vsub.s32 0, %v3563
  %v3565 = vrot.slane %v3560, %v3564
  %v3567 = vadd.f32 %v3559, %v3565
  %v3568 = vsub.f32 0.0, %v3567
  %v3569 = vmul.f32 %v3568, 1.442695
  %v3570 = vpow.pop %v3569
  %v3571 = vadd.f32 %v3570, 1.0
  %v3572 = vrcp.pop %v3571
  %v3573 = vpack.c.bf16 %v3572, %v3572
  %3574 = vst.msk [vmem:[#allocation2 + $0x24] sm:$0xf] %vm393, %v3573
  %v3575 = vld [vmem:[%s0 + $0x10] sm:$0xff]
  %v3576 = vld [vmem:[%s1] sm:$0xff]
  %v3577 = vld [vmem:[%s1 + $0x8] sm:$0xf]
  %v3578 = vld [vmem:[%s1 + $0xc] sm:$0xff]
  %v3579 = vld [vmem:[%s1 + $0x14] sm:$0xf]
  %v3580 = vld [vmem:[%s1 + $0x18] sm:$0xff]
  %v3581 = vld [vmem:[%s1 + $0x20] sm:$0xf]
  %v3582 = vld [vmem:[%s1 + $0x24] sm:$0xff]
  %v3583 = vld [vmem:[%s1 + $0x2c] sm:$0xf]
  %v3584 = vld [vmem:[%s1 + $0x30] sm:$0xff]
  %v3585 = vld [vmem:[%s1 + $0x38] sm:$0xf]
  %v3586 = vld [vmem:[%s1 + $0x3c] sm:$0xff]
  %v3587 = vld [vmem:[%s1 + $0x44] sm:$0xf]
  %v3588 = vld [vmem:[%s1 + $0x48] sm:$0xff]
  %v3589 = vld [vmem:[%s1 + $0x50] sm:$0xf]
  %v3590 = vld [vmem:[%s1 + $0x54] sm:$0xff]
  %v3591 = vld [vmem:[%s1 + $0x5c] sm:$0xf]
  %v3592 = vld [vmem:[%s1 + $0x60] sm:$0xff]
  %v3593 = vld [vmem:[%s1 + $0x68] sm:$0xf]
  %v3594 = vld [vmem:[%s1 + $0x6c] sm:$0xff]
  %v3595 = vld [vmem:[%s1 + $0x74] sm:$0xf]
  %v3596 = vld [vmem:[%s1 + $0x78] sm:$0xff]
  %v3597 = vld [vmem:[%s1 + $0x80] sm:$0xf]
  %v3598 = vld [vmem:[%s1 + $0x84] sm:$0xff]
  %v3599 = vld [vmem:[%s1 + $0x8c] sm:$0xf]
  %v3600 = vld [vmem:[%s1 + $0x90] sm:$0xff]
  %v3601 = vld [vmem:[%s1 + $0x98] sm:$0xf]
  %v3602 = vld [vmem:[%s1 + $0x9c] sm:$0xff]
  %v3603 = vld [vmem:[%s1 + $0xa4] sm:$0xf]
  %v3604 = vld [vmem:[%s1 + $0xa8] sm:$0xff]
  %v3605 = vld [vmem:[%s1 + $0xb0] sm:$0xf]
  %v3606 = vld [vmem:[%s1 + $0xb4] sm:$0xff]
  %v3607 = vld [vmem:[%s1 + $0xbc] sm:$0xf]
  %v3608 = vld [vmem:[%s1 + $0xc0] sm:$0xff]
  %v3609 = vld [vmem:[%s1 + $0xc8] sm:$0xf]
  %v3610 = vld [vmem:[%s1 + $0xcc] sm:$0xff]
  %v3611 = vld [vmem:[%s1 + $0xd4] sm:$0xf]
  %v3612 = vld [vmem:[%s1 + $0xd8] sm:$0xff]
  %v3613 = vld [vmem:[%s1 + $0xe0] sm:$0xf]
  %v3614 = vld [vmem:[%s1 + $0xe4] sm:$0xff]
  %v3615 = vld [vmem:[%s1 + $0xec] sm:$0xf]
  %v3616 = vld [vmem:[%s1 + $0xf0] sm:$0xff]
  %v3617 = vld [vmem:[%s1 + $0xf8] sm:$0xf]
  %v3619 = vunpack.c.l.b16 %v3575
  %v3620 = vunpack.c.h.b16 %v3575
  %v3621 = vpack.c.b16 %v3619, %v3619
  %v3622 = vpack.c.b16 %v3620, %v3620
  %3623 = vrot.lane.b32.xlu0 %v3621, 80
  %v3624 = vpop.permute.xlu0 %3623
  %3625 = vrot.lane.b32.xlu0 %v3622, 80
  %v3626 = vpop.permute.xlu0 %3625
  %vm3627 = vcmask 654336
  %v3628 = vsel %vm3627, %v3624, %v3626
  %v3672 = vunpack.c.l.b16 %v3576
  %v3673 = vunpack.c.h.b16 %v3576
  %v3674 = vunpack.c.l.b16 %v3577
  %v3675 = vunpack.c.l.b16 %v3578
  %v3676 = vunpack.c.h.b16 %v3578
  %v3677 = vunpack.c.l.b16 %v3579
  %v3678 = vunpack.c.l.b16 %v3580
  %v3679 = vunpack.c.h.b16 %v3580
  %v3680 = vunpack.c.l.b16 %v3581
  %v3681 = vunpack.c.l.b16 %v3582
  %v3682 = vunpack.c.h.b16 %v3582
  %v3683 = vunpack.c.l.b16 %v3583
  %v3684 = vunpack.c.l.b16 %v3584
  %v3685 = vunpack.c.h.b16 %v3584
  %v3686 = vunpack.c.l.b16 %v3585
  %v3687 = vunpack.c.l.b16 %v3586
  %v3688 = vunpack.c.h.b16 %v3586
  %v3689 = vunpack.c.l.b16 %v3587
  %v3690 = vunpack.c.l.b16 %v3588
  %v3691 = vunpack.c.h.b16 %v3588
  %v3692 = vunpack.c.l.b16 %v3589
  %v3693 = vunpack.c.l.b16 %v3590
  %v3694 = vunpack.c.h.b16 %v3590
  %v3695 = vunpack.c.l.b16 %v3591
  %v3696 = vunpack.c.l.b16 %v3592
  %v3697 = vunpack.c.h.b16 %v3592
  %v3698 = vunpack.c.l.b16 %v3593
  %v3699 = vunpack.c.l.b16 %v3594
  %v3700 = vunpack.c.h.b16 %v3594
  %v3701 = vunpack.c.l.b16 %v3595
  %v3702 = vunpack.c.l.b16 %v3596
  %v3703 = vunpack.c.h.b16 %v3596
  %v3704 = vunpack.c.l.b16 %v3597
  %v3705 = vunpack.c.l.b16 %v3598
  %v3706 = vunpack.c.h.b16 %v3598
  %v3707 = vunpack.c.l.b16 %v3599
  %v3708 = vunpack.c.l.b16 %v3600
  %v3709 = vunpack.c.h.b16 %v3600
  %v3710 = vunpack.c.l.b16 %v3601
  %v3711 = vunpack.c.l.b16 %v3602
  %v3712 = vunpack.c.h.b16 %v3602
  %v3713 = vunpack.c.l.b16 %v3603
  %v3714 = vunpack.c.l.b16 %v3604
  %v3715 = vunpack.c.h.b16 %v3604
  %v3716 = vunpack.c.l.b16 %v3605
  %v3717 = vunpack.c.l.b16 %v3606
  %v3718 = vunpack.c.h.b16 %v3606
  %v3719 = vunpack.c.l.b16 %v3607
  %v3720 = vunpack.c.l.b16 %v3608
  %v3721 = vunpack.c.h.b16 %v3608
  %v3722 = vunpack.c.l.b16 %v3609
  %v3723 = vunpack.c.l.b16 %v3610
  %v3724 = vunpack.c.h.b16 %v3610
  %v3725 = vunpack.c.l.b16 %v3611
  %v3726 = vunpack.c.l.b16 %v3612
  %v3727 = vunpack.c.h.b16 %v3612
  %v3728 = vunpack.c.l.b16 %v3613
  %v3729 = vunpack.c.l.b16 %v3614
  %v3730 = vunpack.c.h.b16 %v3614
  %v3731 = vunpack.c.l.b16 %v3615
  %v3732 = vunpack.c.l.b16 %v3616
  %v3733 = vunpack.c.h.b16 %v3616
  %v3734 = vunpack.c.l.b16 %v3617
  %v3735 = vpack.c.b16 %v3675, %v3672
  %v3736 = vpack.c.b16 %v3676, %v3673
  %v3737 = vpack.c.b16 %v3677, %v3674
  %v3738 = vpack.c.b16 %v3681, %v3678
  %v3739 = vpack.c.b16 %v3682, %v3679
  %v3740 = vpack.c.b16 %v3683, %v3680
  %v3741 = vpack.c.b16 %v3687, %v3684
  %v3742 = vpack.c.b16 %v3688, %v3685
  %v3743 = vpack.c.b16 %v3689, %v3686
  %v3744 = vpack.c.b16 %v3693, %v3690
  %v3745 = vpack.c.b16 %v3694, %v3691
  %v3746 = vpack.c.b16 %v3695, %v3692
  %v3747 = vpack.c.b16 %v3699, %v3696
  %v3748 = vpack.c.b16 %v3700, %v3697
  %v3749 = vpack.c.b16 %v3701, %v3698
  %v3750 = vpack.c.b16 %v3705, %v3702
  %v3751 = vpack.c.b16 %v3706, %v3703
  %v3752 = vpack.c.b16 %v3707, %v3704
  %v3753 = vpack.c.b16 %v3711, %v3708
  %v3754 = vpack.c.b16 %v3712, %v3709
  %v3755 = vpack.c.b16 %v3713, %v3710
  %v3756 = vpack.c.b16 %v3717, %v3714
  %v3757 = vpack.c.b16 %v3718, %v3715
  %v3758 = vpack.c.b16 %v3719, %v3716
  %v3759 = vpack.c.b16 %v3723, %v3720
  %v3760 = vpack.c.b16 %v3724, %v3721
  %v3761 = vpack.c.b16 %v3725, %v3722
  %v3762 = vpack.c.b16 %v3729, %v3726
  %v3763 = vpack.c.b16 %v3730, %v3727
  %v3764 = vpack.c.b16 %v3731, %v3728
  %v3765 = vpack.c.b16 %v3732, %v3732
  %v3766 = vpack.c.b16 %v3733, %v3733
  %v3767 = vpack.c.b16 %v3734, %v3734
  %v3799 = vsel %vm262, %v3626, 0
  %v3802 = vsel %vm266, %v3765, 0
  %v3805 = vsel %vm266, %v3766, 0
  %v3808 = vsel %vm266, %v3767, 0
  %3810 = vmatprep.subr.bf16.mxu0 %v3757
  %3811 = vmatpush1.bf16.msra.mxu0 %v3756
  %3812 = vmatprep.subr.bf16.mxu0 %v3754
  %3813 = vmatpush1.bf16.msra.mxu0 %v3753
  %3814 = vmatprep.subr.bf16.mxu0 %v3751
  %3815 = vmatpush1.bf16.msra.mxu0 %v3750
  %3816 = vmatprep.subr.bf16.mxu0 %v3748
  %3817 = vmatpush1.bf16.msra.mxu0 %v3747
  %3818 = vmatprep.subr.bf16.mxu0 %v3745
  %3819 = vmatpush1.bf16.msra.mxu0 %v3744
  %3820 = vmatprep.subr.bf16.mxu0 %v3742
  %3821 = vmatpush1.bf16.msra.mxu0 %v3741
  %3822 = vmatprep.subr.bf16.mxu0 %v3739
  %3823 = vmatpush1.bf16.msra.mxu0 %v3738
  %3824 = vmatprep.subr.bf16.mxu0 %v3736
  %3825 = vmatpush1.bf16.msra.mxu0 %v3735
  %3826 = vmatprep.subr.bf16.mxu0 0
  %3827 = vmatpush2.bf16.msra.mxu0 0
  %3828 = vmatprep.subr.bf16.mxu0 0
  %3829 = vmatpush2.bf16.msra.mxu0 0
  %3830 = vmatprep.subr.bf16.mxu0 0
  %3831 = vmatpush2.bf16.msra.mxu0 0
  %3832 = vmatprep.subr.bf16.mxu0 0
  %3833 = vmatpush2.bf16.msra.mxu0 0
  %3834 = vmatprep.subr.bf16.mxu0 0
  %3835 = vmatpush2.bf16.msra.mxu0 0
  %3836 = vmatprep.subr.bf16.mxu0 %v3805
  %3837 = vmatpush2.bf16.msra.mxu0 %v3802
  %3838 = vmatprep.subr.bf16.mxu0 %v3763
  %3839 = vmatpush2.bf16.msra.mxu0 %v3762
  %3840 = vmatprep.subr.bf16.mxu0 %v3760
  %3841 = vmatpush2.bf16.msra.mxu0 %v3759
  %3842 = vmatprep.mubr.bf16.mxu0 %v3799
  %3843 = vmatmul.mubr.bf16.gmra.mxu0 %v3628
  %v3844 = vpop.f32.mrf.mxu0
  %v3845 = vadd.f32 0.0, %v3844
  %v3846 = vpop.f32.mrf.mxu0
  %v3847 = vadd.f32 0.0, %v3846
  %v3848 = vpop.f32.mrf.mxu0
  %v3849 = vpop.f32.mrf.mxu0
  %3850 = vdwg.mxu0
  %3851 = vmatprep.subr.bf16.mxu0 0
  %3852 = vmatpush1.bf16.msra.mxu0 %v3758
  %3853 = vmatprep.subr.bf16.mxu0 0
  %3854 = vmatpush1.bf16.msra.mxu0 %v3755
  %3855 = vmatprep.subr.bf16.mxu0 0
  %3856 = vmatpush1.bf16.msra.mxu0 %v3752
  %3857 = vmatprep.subr.bf16.mxu0 0
  %3858 = vmatpush1.bf16.msra.mxu0 %v3749
  %3859 = vmatprep.subr.bf16.mxu0 0
  %3860 = vmatpush1.bf16.msra.mxu0 %v3746
  %3861 = vmatprep.subr.bf16.mxu0 0
  %3862 = vmatpush1.bf16.msra.mxu0 %v3743
  %3863 = vmatprep.subr.bf16.mxu0 0
  %3864 = vmatpush1.bf16.msra.mxu0 %v3740
  %3865 = vmatprep.subr.bf16.mxu0 0
  %3866 = vmatpush1.bf16.msra.mxu0 %v3737
  %3867 = vmatprep.subr.bf16.mxu0 0
  %3868 = vmatpush2.bf16.msra.mxu0 0
  %3869 = vmatprep.subr.bf16.mxu0 0
  %3870 = vmatpush2.bf16.msra.mxu0 0
  %3871 = vmatprep.subr.bf16.mxu0 0
  %3872 = vmatpush2.bf16.msra.mxu0 0
  %3873 = vmatprep.subr.bf16.mxu0 0
  %3874 = vmatpush2.bf16.msra.mxu0 0
  %3875 = vmatprep.subr.bf16.mxu0 0
  %3876 = vmatpush2.bf16.msra.mxu0 0
  %3877 = vmatprep.subr.bf16.mxu0 0
  %3878 = vmatpush2.bf16.msra.mxu0 %v3808
  %3879 = vmatprep.subr.bf16.mxu0 0
  %3880 = vmatpush2.bf16.msra.mxu0 %v3764
  %3881 = vmatprep.subr.bf16.mxu0 0
  %3882 = vmatpush2.bf16.msra.mxu0 %v3761
  %3883 = vmatprep.mubr.bf16.mxu0 %v3799
  %3884 = vmatmul.mubr.bf16.gmra.mxu0 %v3628
  %v3885 = vpop.f32.mrf.mxu0
  %v3886 = vadd.f32 0.0, %v3885
  %v3887 = vpop.f32.mrf.mxu0
  %v3888 = vpop.f32.mrf.mxu0
  %v3889 = vpop.f32.mrf.mxu0
  %3890 = vdwg.mxu0
  %3893 = vrot.lane.b32.xlu0 %v3847, 112
  %v3894 = vpop.permute.xlu0 %3893
  %3895 = vrot.lane.b32.xlu0 %v3886, 112
  %v3896 = vpop.permute.xlu0 %3895
  %v3897 = vsel %vm363, %v3894, %v3896
  %v3900 = vmax.f32 %v3845, %v3897
  %v3901 = vmax.f32 %v3847, %v3896
  %3904 = vrot.lane.b32.xlu0 %v3900, 56
  %v3905 = vpop.permute.xlu0 %3904
  %3906 = vrot.lane.b32.xlu0 %v3901, 56
  %v3907 = vpop.permute.xlu0 %3906
  %v3908 = vsel %vm375, %v3905, %v3907
  %v3910 = vmax.f32 %v3900, %v3908
  %v3911 = vld [vmem:[%s2] sm:$0x1]
  %v3913 = vlaneseq
  %v3914 = vshrl.u32 %v3913, 7
  %v3915 = vsub.s32 0, %v3914
  %v3916 = vrot.slane %v3911, %v3915
  %v3918 = vadd.f32 %v3910, %v3916
  %v3919 = vsub.f32 0.0, %v3918
  %v3920 = vmul.f32 %v3919, 1.442695
  %v3921 = vpow.pop %v3920
  %v3922 = vadd.f32 %v3921, 1.0
  %v3923 = vrcp.pop %v3922
  %v3924 = vpack.c.bf16 %v3923, %v3923
  %3925 = vst.msk [vmem:[#allocation2 + $0x28] sm:$0xf] %vm393, %v3924
  %v3926 = vld [vmem:[%s0 + $0x10] sm:$0xff]
  %v3927 = vld [vmem:[%s0 + $0x18] sm:$0xf]
  %v3928 = vld [vmem:[%s1] sm:$0xff]
  %v3929 = vld [vmem:[%s1 + $0x8] sm:$0xf]
  %v3930 = vld [vmem:[%s1 + $0xc] sm:$0xff]
  %v3931 = vld [vmem:[%s1 + $0x14] sm:$0xf]
  %v3932 = vld [vmem:[%s1 + $0x18] sm:$0xff]
  %v3933 = vld [vmem:[%s1 + $0x20] sm:$0xf]
  %v3934 = vld [vmem:[%s1 + $0x24] sm:$0xff]
  %v3935 = vld [vmem:[%s1 + $0x2c] sm:$0xf]
  %v3936 = vld [vmem:[%s1 + $0x30] sm:$0xff]
  %v3937 = vld [vmem:[%s1 + $0x38] sm:$0xf]
  %v3938 = vld [vmem:[%s1 + $0x3c] sm:$0xff]
  %v3939 = vld [vmem:[%s1 + $0x44] sm:$0xf]
  %v3940 = vld [vmem:[%s1 + $0x48] sm:$0xff]
  %v3941 = vld [vmem:[%s1 + $0x50] sm:$0xf]
  %v3942 = vld [vmem:[%s1 + $0x54] sm:$0xff]
  %v3943 = vld [vmem:[%s1 + $0x5c] sm:$0xf]
  %v3944 = vld [vmem:[%s1 + $0x60] sm:$0xff]
  %v3945 = vld [vmem:[%s1 + $0x68] sm:$0xf]
  %v3946 = vld [vmem:[%s1 + $0x6c] sm:$0xff]
  %v3947 = vld [vmem:[%s1 + $0x74] sm:$0xf]
  %v3948 = vld [vmem:[%s1 + $0x78] sm:$0xff]
  %v3949 = vld [vmem:[%s1 + $0x80] sm:$0xf]
  %v3950 = vld [vmem:[%s1 + $0x84] sm:$0xff]
  %v3951 = vld [vmem:[%s1 + $0x8c] sm:$0xf]
  %v3952 = vld [vmem:[%s1 + $0x90] sm:$0xff]
  %v3953 = vld [vmem:[%s1 + $0x98] sm:$0xf]
  %v3954 = vld [vmem:[%s1 + $0x9c] sm:$0xff]
  %v3955 = vld [vmem:[%s1 + $0xa4] sm:$0xf]
  %v3956 = vld [vmem:[%s1 + $0xa8] sm:$0xff]
  %v3957 = vld [vmem:[%s1 + $0xb0] sm:$0xf]
  %v3958 = vld [vmem:[%s1 + $0xb4] sm:$0xff]
  %v3959 = vld [vmem:[%s1 + $0xbc] sm:$0xf]
  %v3960 = vld [vmem:[%s1 + $0xc0] sm:$0xff]
  %v3961 = vld [vmem:[%s1 + $0xc8] sm:$0xf]
  %v3962 = vld [vmem:[%s1 + $0xcc] sm:$0xff]
  %v3963 = vld [vmem:[%s1 + $0xd4] sm:$0xf]
  %v3964 = vld [vmem:[%s1 + $0xd8] sm:$0xff]
  %v3965 = vld [vmem:[%s1 + $0xe0] sm:$0xf]
  %v3966 = vld [vmem:[%s1 + $0xe4] sm:$0xff]
  %v3967 = vld [vmem:[%s1 + $0xec] sm:$0xf]
  %v3968 = vld [vmem:[%s1 + $0xf0] sm:$0xff]
  %v3969 = vld [vmem:[%s1 + $0xf8] sm:$0xf]
  %v3972 = vunpack.c.l.b16 %v3926
  %v3973 = vunpack.c.h.b16 %v3926
  %v3974 = vunpack.c.l.b16 %v3927
  %v3975 = vpack.c.b16 %v3972, %v3972
  %v3976 = vpack.c.b16 %v3973, %v3973
  %v3977 = vpack.c.b16 %v3974, %v3974
  %3978 = vrot.lane.b32.xlu0 %v3975, 24
  %v3979 = vpop.permute.xlu0 %3978
  %3980 = vrot.lane.b32.xlu0 %v3976, 24
  %v3981 = vpop.permute.xlu0 %3980
  %3982 = vrot.lane.b32.xlu0 %v3977, 24
  %v3983 = vpop.permute.xlu0 %3982
  %vm3984 = vcmask 195584
  %v3985 = vsel %vm3984, %v3979, %v3981
  %v3986 = vsel %vm3984, %v3981, %v3983
  %v4030 = vunpack.c.l.b16 %v3928
  %v4031 = vunpack.c.h.b16 %v3928
  %v4032 = vunpack.c.l.b16 %v3929
  %v4033 = vunpack.c.l.b16 %v3930
  %v4034 = vunpack.c.h.b16 %v3930
  %v4035 = vunpack.c.l.b16 %v3931
  %v4036 = vunpack.c.l.b16 %v3932
  %v4037 = vunpack.c.h.b16 %v3932
  %v4038 = vunpack.c.l.b16 %v3933
  %v4039 = vunpack.c.l.b16 %v3934
  %v4040 = vunpack.c.h.b16 %v3934
  %v4041 = vunpack.c.l.b16 %v3935
  %v4042 = vunpack.c.l.b16 %v3936
  %v4043 = vunpack.c.h.b16 %v3936
  %v4044 = vunpack.c.l.b16 %v3937
  %v4045 = vunpack.c.l.b16 %v3938
  %v4046 = vunpack.c.h.b16 %v3938
  %v4047 = vunpack.c.l.b16 %v3939
  %v4048 = vunpack.c.l.b16 %v3940
  %v4049 = vunpack.c.h.b16 %v3940
  %v4050 = vunpack.c.l.b16 %v3941
  %v4051 = vunpack.c.l.b16 %v3942
  %v4052 = vunpack.c.h.b16 %v3942
  %v4053 = vunpack.c.l.b16 %v3943
  %v4054 = vunpack.c.l.b16 %v3944
  %v4055 = vunpack.c.h.b16 %v3944
  %v4056 = vunpack.c.l.b16 %v3945
  %v4057 = vunpack.c.l.b16 %v3946
  %v4058 = vunpack.c.h.b16 %v3946
  %v4059 = vunpack.c.l.b16 %v3947
  %v4060 = vunpack.c.l.b16 %v3948
  %v4061 = vunpack.c.h.b16 %v3948
  %v4062 = vunpack.c.l.b16 %v3949
  %v4063 = vunpack.c.l.b16 %v3950
  %v4064 = vunpack.c.h.b16 %v3950
  %v4065 = vunpack.c.l.b16 %v3951
  %v4066 = vunpack.c.l.b16 %v3952
  %v4067 = vunpack.c.h.b16 %v3952
  %v4068 = vunpack.c.l.b16 %v3953
  %v4069 = vunpack.c.l.b16 %v3954
  %v4070 = vunpack.c.h.b16 %v3954
  %v4071 = vunpack.c.l.b16 %v3955
  %v4072 = vunpack.c.l.b16 %v3956
  %v4073 = vunpack.c.h.b16 %v3956
  %v4074 = vunpack.c.l.b16 %v3957
  %v4075 = vunpack.c.l.b16 %v3958
  %v4076 = vunpack.c.h.b16 %v3958
  %v4077 = vunpack.c.l.b16 %v3959
  %v4078 = vunpack.c.l.b16 %v3960
  %v4079 = vunpack.c.h.b16 %v3960
  %v4080 = vunpack.c.l.b16 %v3961
  %v4081 = vunpack.c.l.b16 %v3962
  %v4082 = vunpack.c.h.b16 %v3962
  %v4083 = vunpack.c.l.b16 %v3963
  %v4084 = vunpack.c.l.b16 %v3964
  %v4085 = vunpack.c.h.b16 %v3964
  %v4086 = vunpack.c.l.b16 %v3965
  %v4087 = vunpack.c.l.b16 %v3966
  %v4088 = vunpack.c.h.b16 %v3966
  %v4089 = vunpack.c.l.b16 %v3967
  %v4090 = vunpack.c.l.b16 %v3968
  %v4091 = vunpack.c.h.b16 %v3968
  %v4092 = vunpack.c.l.b16 %v3969
  %v4093 = vpack.c.b16 %v4033, %v4030
  %v4094 = vpack.c.b16 %v4034, %v4031
  %v4095 = vpack.c.b16 %v4035, %v4032
  %v4096 = vpack.c.b16 %v4039, %v4036
  %v4097 = vpack.c.b16 %v4040, %v4037
  %v4098 = vpack.c.b16 %v4041, %v4038
  %v4099 = vpack.c.b16 %v4045, %v4042
  %v4100 = vpack.c.b16 %v4046, %v4043
  %v4101 = vpack.c.b16 %v4047, %v4044
  %v4102 = vpack.c.b16 %v4051, %v4048
  %v4103 = vpack.c.b16 %v4052, %v4049
  %v4104 = vpack.c.b16 %v4053, %v4050
  %v4105 = vpack.c.b16 %v4057, %v4054
  %v4106 = vpack.c.b16 %v4058, %v4055
  %v4107 = vpack.c.b16 %v4059, %v4056
  %v4108 = vpack.c.b16 %v4063, %v4060
  %v4109 = vpack.c.b16 %v4064, %v4061
  %v4110 = vpack.c.b16 %v4065, %v4062
  %v4111 = vpack.c.b16 %v4069, %v4066
  %v4112 = vpack.c.b16 %v4070, %v4067
  %v4113 = vpack.c.b16 %v4071, %v4068
  %v4114 = vpack.c.b16 %v4075, %v4072
  %v4115 = vpack.c.b16 %v4076, %v4073
  %v4116 = vpack.c.b16 %v4077, %v4074
  %v4117 = vpack.c.b16 %v4081, %v4078
  %v4118 = vpack.c.b16 %v4082, %v4079
  %v4119 = vpack.c.b16 %v4083, %v4080
  %v4120 = vpack.c.b16 %v4087, %v4084
  %v4121 = vpack.c.b16 %v4088, %v4085
  %v4122 = vpack.c.b16 %v4089, %v4086
  %v4123 = vpack.c.b16 %v4090, %v4090
  %v4124 = vpack.c.b16 %v4091, %v4091
  %v4125 = vpack.c.b16 %v4092, %v4092
  %v4157 = vsel %vm262, %v3986, 0
  %v4160 = vsel %vm266, %v4123, 0
  %v4163 = vsel %vm266, %v4124, 0
  %v4166 = vsel %vm266, %v4125, 0
  %4168 = vmatprep.subr.bf16.mxu0 %v4115
  %4169 = vmatpush1.bf16.msra.mxu0 %v4114
  %4170 = vmatprep.subr.bf16.mxu0 %v4112
  %4171 = vmatpush1.bf16.msra.mxu0 %v4111
  %4172 = vmatprep.subr.bf16.mxu0 %v4109
  %4173 = vmatpush1.bf16.msra.mxu0 %v4108
  %4174 = vmatprep.subr.bf16.mxu0 %v4106
  %4175 = vmatpush1.bf16.msra.mxu0 %v4105
  %4176 = vmatprep.subr.bf16.mxu0 %v4103
  %4177 = vmatpush1.bf16.msra.mxu0 %v4102
  %4178 = vmatprep.subr.bf16.mxu0 %v4100
  %4179 = vmatpush1.bf16.msra.mxu0 %v4099
  %4180 = vmatprep.subr.bf16.mxu0 %v4097
  %4181 = vmatpush1.bf16.msra.mxu0 %v4096
  %4182 = vmatprep.subr.bf16.mxu0 %v4094
  %4183 = vmatpush1.bf16.msra.mxu0 %v4093
  %4184 = vmatprep.subr.bf16.mxu0 0
  %4185 = vmatpush2.bf16.msra.mxu0 0
  %4186 = vmatprep.subr.bf16.mxu0 0
  %4187 = vmatpush2.bf16.msra.mxu0 0
  %4188 = vmatprep.subr.bf16.mxu0 0
  %4189 = vmatpush2.bf16.msra.mxu0 0
  %4190 = vmatprep.subr.bf16.mxu0 0
  %4191 = vmatpush2.bf16.msra.mxu0 0
  %4192 = vmatprep.subr.bf16.mxu0 0
  %4193 = vmatpush2.bf16.msra.mxu0 0
  %4194 = vmatprep.subr.bf16.mxu0 %v4163
  %4195 = vmatpush2.bf16.msra.mxu0 %v4160
  %4196 = vmatprep.subr.bf16.mxu0 %v4121
  %4197 = vmatpush2.bf16.msra.mxu0 %v4120
  %4198 = vmatprep.subr.bf16.mxu0 %v4118
  %4199 = vmatpush2.bf16.msra.mxu0 %v4117
  %4200 = vmatprep.mubr.bf16.mxu0 %v4157
  %4201 = vmatmul.mubr.bf16.gmra.mxu0 %v3985
  %v4202 = vpop.f32.mrf.mxu0
  %v4203 = vadd.f32 0.0, %v4202
  %v4204 = vpop.f32.mrf.mxu0
  %v4205 = vadd.f32 0.0, %v4204
  %v4206 = vpop.f32.mrf.mxu0
  %v4207 = vpop.f32.mrf.mxu0
  %4208 = vdwg.mxu0
  %4209 = vmatprep.subr.bf16.mxu0 0
  %4210 = vmatpush1.bf16.msra.mxu0 %v4116
  %4211 = vmatprep.subr.bf16.mxu0 0
  %4212 = vmatpush1.bf16.msra.mxu0 %v4113
  %4213 = vmatprep.subr.bf16.mxu0 0
  %4214 = vmatpush1.bf16.msra.mxu0 %v4110
  %4215 = vmatprep.subr.bf16.mxu0 0
  %4216 = vmatpush1.bf16.msra.mxu0 %v4107
  %4217 = vmatprep.subr.bf16.mxu0 0
  %4218 = vmatpush1.bf16.msra.mxu0 %v4104
  %4219 = vmatprep.subr.bf16.mxu0 0
  %4220 = vmatpush1.bf16.msra.mxu0 %v4101
  %4221 = vmatprep.subr.bf16.mxu0 0
  %4222 = vmatpush1.bf16.msra.mxu0 %v4098
  %4223 = vmatprep.subr.bf16.mxu0 0
  %4224 = vmatpush1.bf16.msra.mxu0 %v4095
  %4225 = vmatprep.subr.bf16.mxu0 0
  %4226 = vmatpush2.bf16.msra.mxu0 0
  %4227 = vmatprep.subr.bf16.mxu0 0
  %4228 = vmatpush2.bf16.msra.mxu0 0
  %4229 = vmatprep.subr.bf16.mxu0 0
  %4230 = vmatpush2.bf16.msra.mxu0 0
  %4231 = vmatprep.subr.bf16.mxu0 0
  %4232 = vmatpush2.bf16.msra.mxu0 0
  %4233 = vmatprep.subr.bf16.mxu0 0
  %4234 = vmatpush2.bf16.msra.mxu0 0
  %4235 = vmatprep.subr.bf16.mxu0 0
  %4236 = vmatpush2.bf16.msra.mxu0 %v4166
  %4237 = vmatprep.subr.bf16.mxu0 0
  %4238 = vmatpush2.bf16.msra.mxu0 %v4122
  %4239 = vmatprep.subr.bf16.mxu0 0
  %4240 = vmatpush2.bf16.msra.mxu0 %v4119
  %4241 = vmatprep.mubr.bf16.mxu0 %v4157
  %4242 = vmatmul.mubr.bf16.gmra.mxu0 %v3985
  %v4243 = vpop.f32.mrf.mxu0
  %v4244 = vadd.f32 0.0, %v4243
  %v4245 = vpop.f32.mrf.mxu0
  %v4246 = vpop.f32.mrf.mxu0
  %v4247 = vpop.f32.mrf.mxu0
  %4248 = vdwg.mxu0
  %4251 = vrot.lane.b32.xlu0 %v4205, 112
  %v4252 = vpop.permute.xlu0 %4251
  %4253 = vrot.lane.b32.xlu0 %v4244, 112
  %v4254 = vpop.permute.xlu0 %4253
  %v4255 = vsel %vm363, %v4252, %v4254
  %v4258 = vmax.f32 %v4203, %v4255
  %v4259 = vmax.f32 %v4205, %v4254
  %4262 = vrot.lane.b32.xlu0 %v4258, 56
  %v4263 = vpop.permute.xlu0 %4262
  %4264 = vrot.lane.b32.xlu0 %v4259, 56
  %v4265 = vpop.permute.xlu0 %4264
  %v4266 = vsel %vm375, %v4263, %v4265
  %v4268 = vmax.f32 %v4258, %v4266
  %v4269 = vld [vmem:[%s2] sm:$0x1]
  %v4271 = vlaneseq
  %v4272 = vshrl.u32 %v4271, 7
  %v4273 = vsub.s32 0, %v4272
  %v4274 = vrot.slane %v4269, %v4273
  %v4276 = vadd.f32 %v4268, %v4274
  %v4277 = vsub.f32 0.0, %v4276
  %v4278 = vmul.f32 %v4277, 1.442695
  %v4279 = vpow.pop %v4278
  %v4280 = vadd.f32 %v4279, 1.0
  %v4281 = vrcp.pop %v4280
  %v4282 = vpack.c.bf16 %v4281, %v4281
  %4283 = vst.msk [vmem:[#allocation2 + $0x2c] sm:$0xf] %vm393, %v4282
  %v4284 = vld [vmem:[#allocation2] sm:$0xff]
  %v4285 = vld [vmem:[#allocation2 + $0x8] sm:$0xff]
  %v4286 = vld [vmem:[#allocation2 + $0x10] sm:$0xff]
  %v4287 = vld [vmem:[%s3] sm:$0xff]
  %v4288 = vld [vmem:[%s3 + $0x8] sm:$0xff]
  %v4289 = vld [vmem:[%s3 + $0x10] sm:$0xff]
  %v4290 = vld [vmem:[%s3 + $0x18] sm:$0xff]
  %v4291 = vld [vmem:[%s3 + $0x20] sm:$0xff]
  %v4292 = vld [vmem:[%s3 + $0x28] sm:$0xff]
  %v4293 = vld [vmem:[%s3 + $0x30] sm:$0xff]
  %v4294 = vld [vmem:[%s3 + $0x38] sm:$0xff]
  %v4295 = vld [vmem:[%s3 + $0x40] sm:$0xff]
  %v4296 = vld [vmem:[%s3 + $0x48] sm:$0xff]
  %v4297 = vld [vmem:[%s3 + $0x50] sm:$0xff]
  %v4298 = vld [vmem:[%s3 + $0x58] sm:$0xff]
  %v4299 = vld [vmem:[%s3 + $0x60] sm:$0xff]
  %v4300 = vld [vmem:[%s3 + $0x68] sm:$0xff]
  %v4301 = vld [vmem:[%s3 + $0x70] sm:$0xff]
  %v4302 = vld [vmem:[%s3 + $0x78] sm:$0xff]
  %v4303 = vld [vmem:[%s3 + $0x80] sm:$0xff]
  %v4304 = vld [vmem:[%s3 + $0x88] sm:$0xff]
  %v4305 = vld [vmem:[%s3 + $0x90] sm:$0xff]
  %v4306 = vld [vmem:[%s3 + $0x98] sm:$0xff]
  %v4307 = vld [vmem:[%s3 + $0xa0] sm:$0xff]
  %v4308 = vld [vmem:[%s3 + $0xa8] sm:$0xff]
  %v4309 = vld [vmem:[%s3 + $0xb0] sm:$0xff]
  %v4310 = vld [vmem:[%s3 + $0xb8] sm:$0xff]
  %v4311 = vld [vmem:[%s3 + $0xc0] sm:$0xff]
  %v4312 = vld [vmem:[%s3 + $0xc8] sm:$0xff]
  %v4313 = vld [vmem:[%s3 + $0xd0] sm:$0xff]
  %v4314 = vld [vmem:[%s3 + $0xd8] sm:$0xff]
  %v4315 = vld [vmem:[%s3 + $0xe0] sm:$0xff]
  %v4316 = vld [vmem:[%s3 + $0xe8] sm:$0xff]
  %v4317 = vld [vmem:[%s3 + $0xf0] sm:$0xff]
  %v4318 = vld [vmem:[%s3 + $0xf8] sm:$0xff]
  %v4319 = vld [vmem:[%s3 + $0x100] sm:$0xff]
  %v4320 = vld [vmem:[%s3 + $0x108] sm:$0xff]
  %v4321 = vld [vmem:[%s3 + $0x110] sm:$0xff]
  %v4322 = vld [vmem:[%s3 + $0x118] sm:$0xff]
  %v4323 = vld [vmem:[%s3 + $0x120] sm:$0xff]
  %v4324 = vld [vmem:[%s3 + $0x128] sm:$0xff]
  %v4325 = vld [vmem:[%s3 + $0x130] sm:$0xff]
  %v4326 = vld [vmem:[%s3 + $0x138] sm:$0xff]
  %v4327 = vld [vmem:[%s3 + $0x140] sm:$0xff]
  %v4328 = vld [vmem:[%s3 + $0x148] sm:$0xff]
  %v4329 = vld [vmem:[%s3 + $0x150] sm:$0xff]
  %v4330 = vld [vmem:[%s3 + $0x158] sm:$0xff]
  %v4331 = vld [vmem:[%s3 + $0x160] sm:$0xff]
  %v4332 = vld [vmem:[%s3 + $0x168] sm:$0xff]
  %v4333 = vld [vmem:[%s3 + $0x170] sm:$0xff]
  %v4334 = vld [vmem:[%s3 + $0x178] sm:$0xff]
  %v4335 = vld [vmem:[%s3 + $0x180] sm:$0xff]
  %v4336 = vld [vmem:[%s3 + $0x188] sm:$0xff]
  %v4337 = vld [vmem:[%s3 + $0x190] sm:$0xff]
  %v4338 = vld [vmem:[%s3 + $0x198] sm:$0xff]
  %v4339 = vld [vmem:[%s3 + $0x1a0] sm:$0xff]
  %v4340 = vld [vmem:[%s3 + $0x1a8] sm:$0xff]
  %v4341 = vld [vmem:[%s3 + $0x1b0] sm:$0xff]
  %v4342 = vld [vmem:[%s3 + $0x1b8] sm:$0xff]
  %v4343 = vld [vmem:[%s3 + $0x1c0] sm:$0xff]
  %v4344 = vld [vmem:[%s3 + $0x1c8] sm:$0xff]
  %v4345 = vld [vmem:[%s3 + $0x1d0] sm:$0xff]
  %v4346 = vld [vmem:[%s3 + $0x1d8] sm:$0xff]
  %v4347 = vld [vmem:[%s3 + $0x1e0] sm:$0xff]
  %v4348 = vld [vmem:[%s3 + $0x1e8] sm:$0xff]
  %v4349 = vld [vmem:[%s3 + $0x1f0] sm:$0xff]
  %v4350 = vld [vmem:[%s3 + $0x1f8] sm:$0xff]
  %v4351 = vld [vmem:[%s3 + $0x200] sm:$0xff]
  %v4352 = vld [vmem:[%s3 + $0x208] sm:$0xff]
  %v4353 = vld [vmem:[%s3 + $0x210] sm:$0xff]
  %v4354 = vld [vmem:[%s3 + $0x218] sm:$0xff]
  %v4355 = vld [vmem:[%s3 + $0x220] sm:$0xff]
  %v4356 = vld [vmem:[%s3 + $0x228] sm:$0xff]
  %v4357 = vld [vmem:[%s3 + $0x230] sm:$0xff]
  %v4358 = vld [vmem:[%s3 + $0x238] sm:$0xff]
  %v4359 = vld [vmem:[%s3 + $0x240] sm:$0xff]
  %v4360 = vld [vmem:[%s3 + $0x248] sm:$0xff]
  %v4361 = vld [vmem:[%s3 + $0x250] sm:$0xff]
  %v4362 = vld [vmem:[%s3 + $0x258] sm:$0xff]
  %v4363 = vld [vmem:[%s3 + $0x260] sm:$0xff]
  %v4364 = vld [vmem:[%s3 + $0x268] sm:$0xff]
  %v4365 = vld [vmem:[%s3 + $0x270] sm:$0xff]
  %v4366 = vld [vmem:[%s3 + $0x278] sm:$0xff]
  %v4367 = vld [vmem:[%s3 + $0x280] sm:$0xff]
  %v4368 = vld [vmem:[%s3 + $0x288] sm:$0xff]
  %v4369 = vld [vmem:[%s3 + $0x290] sm:$0xff]
  %v4370 = vld [vmem:[%s3 + $0x298] sm:$0xff]
  %v4371 = vld [vmem:[%s3 + $0x2a0] sm:$0xff]
  %v4372 = vld [vmem:[%s3 + $0x2a8] sm:$0xff]
  %v4373 = vld [vmem:[%s3 + $0x2b0] sm:$0xff]
  %v4374 = vld [vmem:[%s3 + $0x2b8] sm:$0xff]
  %v4375 = vld [vmem:[%s3 + $0x2c0] sm:$0xff]
  %v4376 = vld [vmem:[%s3 + $0x2c8] sm:$0xff]
  %v4377 = vld [vmem:[%s3 + $0x2d0] sm:$0xff]
  %v4378 = vld [vmem:[%s3 + $0x2d8] sm:$0xff]
  %v4379 = vld [vmem:[%s3 + $0x2e0] sm:$0xff]
  %v4380 = vld [vmem:[%s3 + $0x2e8] sm:$0xff]
  %v4381 = vld [vmem:[%s3 + $0x2f0] sm:$0xff]
  %v4382 = vld [vmem:[%s3 + $0x2f8] sm:$0xff]
  %v4386 = vunpack.c.l.b16 %v4284
  %v4387 = vunpack.c.h.b16 %v4284
  %v4388 = vunpack.c.l.b16 %v4285
  %v4389 = vunpack.c.h.b16 %v4285
  %v4390 = vunpack.c.l.b16 %v4286
  %v4391 = vunpack.c.h.b16 %v4286
  %v4392 = vpack.c.b16 %v4386, %v4386
  %v4393 = vpack.c.b16 %v4387, %v4387
  %v4394 = vpack.c.b16 %v4388, %v4388
  %v4395 = vpack.c.b16 %v4389, %v4389
  %v4396 = vpack.c.b16 %v4390, %v4390
  %v4397 = vpack.c.b16 %v4391, %v4391
  %v4500 = vunpack.c.l.b16 %v4287
  %v4501 = vunpack.c.h.b16 %v4287
  %v4502 = vunpack.c.l.b16 %v4288
  %v4503 = vunpack.c.h.b16 %v4288
  %v4504 = vunpack.c.l.b16 %v4289
  %v4505 = vunpack.c.h.b16 %v4289
  %v4506 = vunpack.c.l.b16 %v4290
  %v4507 = vunpack.c.h.b16 %v4290
  %v4508 = vunpack.c.l.b16 %v4291
  %v4509 = vunpack.c.h.b16 %v4291
  %v4510 = vunpack.c.l.b16 %v4292
  %v4511 = vunpack.c.h.b16 %v4292
  %v4512 = vunpack.c.l.b16 %v4293
  %v4513 = vunpack.c.h.b16 %v4293
  %v4514 = vunpack.c.l.b16 %v4294
  %v4515 = vunpack.c.h.b16 %v4294
  %v4516 = vunpack.c.l.b16 %v4295
  %v4517 = vunpack.c.h.b16 %v4295
  %v4518 = vunpack.c.l.b16 %v4296
  %v4519 = vunpack.c.h.b16 %v4296
  %v4520 = vunpack.c.l.b16 %v4297
  %v4521 = vunpack.c.h.b16 %v4297
  %v4522 = vunpack.c.l.b16 %v4298
  %v4523 = vunpack.c.h.b16 %v4298
  %v4524 = vunpack.c.l.b16 %v4299
  %v4525 = vunpack.c.h.b16 %v4299
  %v4526 = vunpack.c.l.b16 %v4300
  %v4527 = vunpack.c.h.b16 %v4300
  %v4528 = vunpack.c.l.b16 %v4301
  %v4529 = vunpack.c.h.b16 %v4301
  %v4530 = vunpack.c.l.b16 %v4302
  %v4531 = vunpack.c.h.b16 %v4302
  %v4532 = vunpack.c.l.b16 %v4303
  %v4533 = vunpack.c.h.b16 %v4303
  %v4534 = vunpack.c.l.b16 %v4304
  %v4535 = vunpack.c.h.b16 %v4304
  %v4536 = vunpack.c.l.b16 %v4305
  %v4537 = vunpack.c.h.b16 %v4305
  %v4538 = vunpack.c.l.b16 %v4306
  %v4539 = vunpack.c.h.b16 %v4306
  %v4540 = vunpack.c.l.b16 %v4307
  %v4541 = vunpack.c.h.b16 %v4307
  %v4542 = vunpack.c.l.b16 %v4308
  %v4543 = vunpack.c.h.b16 %v4308
  %v4544 = vunpack.c.l.b16 %v4309
  %v4545 = vunpack.c.h.b16 %v4309
  %v4546 = vunpack.c.l.b16 %v4310
  %v4547 = vunpack.c.h.b16 %v4310
  %v4548 = vunpack.c.l.b16 %v4311
  %v4549 = vunpack.c.h.b16 %v4311
  %v4550 = vunpack.c.l.b16 %v4312
  %v4551 = vunpack.c.h.b16 %v4312
  %v4552 = vunpack.c.l.b16 %v4313
  %v4553 = vunpack.c.h.b16 %v4313
  %v4554 = vunpack.c.l.b16 %v4314
  %v4555 = vunpack.c.h.b16 %v4314
  %v4556 = vunpack.c.l.b16 %v4315
  %v4557 = vunpack.c.h.b16 %v4315
  %v4558 = vunpack.c.l.b16 %v4316
  %v4559 = vunpack.c.h.b16 %v4316
  %v4560 = vunpack.c.l.b16 %v4317
  %v4561 = vunpack.c.h.b16 %v4317
  %v4562 = vunpack.c.l.b16 %v4318
  %v4563 = vunpack.c.h.b16 %v4318
  %v4564 = vunpack.c.l.b16 %v4319
  %v4565 = vunpack.c.h.b16 %v4319
  %v4566 = vunpack.c.l.b16 %v4320
  %v4567 = vunpack.c.h.b16 %v4320
  %v4568 = vunpack.c.l.b16 %v4321
  %v4569 = vunpack.c.h.b16 %v4321
  %v4570 = vunpack.c.l.b16 %v4322
  %v4571 = vunpack.c.h.b16 %v4322
  %v4572 = vunpack.c.l.b16 %v4323
  %v4573 = vunpack.c.h.b16 %v4323
  %v4574 = vunpack.c.l.b16 %v4324
  %v4575 = vunpack.c.h.b16 %v4324
  %v4576 = vunpack.c.l.b16 %v4325
  %v4577 = vunpack.c.h.b16 %v4325
  %v4578 = vunpack.c.l.b16 %v4326
  %v4579 = vunpack.c.h.b16 %v4326
  %v4580 = vunpack.c.l.b16 %v4327
  %v4581 = vunpack.c.h.b16 %v4327
  %v4582 = vunpack.c.l.b16 %v4328
  %v4583 = vunpack.c.h.b16 %v4328
  %v4584 = vunpack.c.l.b16 %v4329
  %v4585 = vunpack.c.h.b16 %v4329
  %v4586 = vunpack.c.l.b16 %v4330
  %v4587 = vunpack.c.h.b16 %v4330
  %v4588 = vunpack.c.l.b16 %v4331
  %v4589 = vunpack.c.h.b16 %v4331
  %v4590 = vunpack.c.l.b16 %v4332
  %v4591 = vunpack.c.h.b16 %v4332
  %v4592 = vunpack.c.l.b16 %v4333
  %v4593 = vunpack.c.h.b16 %v4333
  %v4594 = vunpack.c.l.b16 %v4334
  %v4595 = vunpack.c.h.b16 %v4334
  %v4596 = vunpack.c.l.b16 %v4335
  %v4597 = vunpack.c.h.b16 %v4335
  %v4598 = vunpack.c.l.b16 %v4336
  %v4599 = vunpack.c.h.b16 %v4336
  %v4600 = vunpack.c.l.b16 %v4337
  %v4601 = vunpack.c.h.b16 %v4337
  %v4602 = vunpack.c.l.b16 %v4338
  %v4603 = vunpack.c.h.b16 %v4338
  %v4604 = vunpack.c.l.b16 %v4339
  %v4605 = vunpack.c.h.b16 %v4339
  %v4606 = vunpack.c.l.b16 %v4340
  %v4607 = vunpack.c.h.b16 %v4340
  %v4608 = vunpack.c.l.b16 %v4341
  %v4609 = vunpack.c.h.b16 %v4341
  %v4610 = vunpack.c.l.b16 %v4342
  %v4611 = vunpack.c.h.b16 %v4342
  %v4612 = vunpack.c.l.b16 %v4343
  %v4613 = vunpack.c.h.b16 %v4343
  %v4614 = vunpack.c.l.b16 %v4344
  %v4615 = vunpack.c.h.b16 %v4344
  %v4616 = vunpack.c.l.b16 %v4345
  %v4617 = vunpack.c.h.b16 %v4345
  %v4618 = vunpack.c.l.b16 %v4346
  %v4619 = vunpack.c.h.b16 %v4346
  %v4620 = vunpack.c.l.b16 %v4347
  %v4621 = vunpack.c.h.b16 %v4347
  %v4622 = vunpack.c.l.b16 %v4348
  %v4623 = vunpack.c.h.b16 %v4348
  %v4624 = vunpack.c.l.b16 %v4349
  %v4625 = vunpack.c.h.b16 %v4349
  %v4626 = vunpack.c.l.b16 %v4350
  %v4627 = vunpack.c.h.b16 %v4350
  %v4628 = vunpack.c.l.b16 %v4351
  %v4629 = vunpack.c.h.b16 %v4351
  %v4630 = vunpack.c.l.b16 %v4352
  %v4631 = vunpack.c.h.b16 %v4352
  %v4632 = vunpack.c.l.b16 %v4353
  %v4633 = vunpack.c.h.b16 %v4353
  %v4634 = vunpack.c.l.b16 %v4354
  %v4635 = vunpack.c.h.b16 %v4354
  %v4636 = vunpack.c.l.b16 %v4355
  %v4637 = vunpack.c.h.b16 %v4355
  %v4638 = vunpack.c.l.b16 %v4356
  %v4639 = vunpack.c.h.b16 %v4356
  %v4640 = vunpack.c.l.b16 %v4357
  %v4641 = vunpack.c.h.b16 %v4357
  %v4642 = vunpack.c.l.b16 %v4358
  %v4643 = vunpack.c.h.b16 %v4358
  %v4644 = vunpack.c.l.b16 %v4359
  %v4645 = vunpack.c.h.b16 %v4359
  %v4646 = vunpack.c.l.b16 %v4360
  %v4647 = vunpack.c.h.b16 %v4360
  %v4648 = vunpack.c.l.b16 %v4361
  %v4649 = vunpack.c.h.b16 %v4361
  %v4650 = vunpack.c.l.b16 %v4362
  %v4651 = vunpack.c.h.b16 %v4362
  %v4652 = vunpack.c.l.b16 %v4363
  %v4653 = vunpack.c.h.b16 %v4363
  %v4654 = vunpack.c.l.b16 %v4364
  %v4655 = vunpack.c.h.b16 %v4364
  %v4656 = vunpack.c.l.b16 %v4365
  %v4657 = vunpack.c.h.b16 %v4365
  %v4658 = vunpack.c.l.b16 %v4366
  %v4659 = vunpack.c.h.b16 %v4366
  %v4660 = vunpack.c.l.b16 %v4367
  %v4661 = vunpack.c.h.b16 %v4367
  %v4662 = vunpack.c.l.b16 %v4368
  %v4663 = vunpack.c.h.b16 %v4368
  %v4664 = vunpack.c.l.b16 %v4369
  %v4665 = vunpack.c.h.b16 %v4369
  %v4666 = vunpack.c.l.b16 %v4370
  %v4667 = vunpack.c.h.b16 %v4370
  %v4668 = vunpack.c.l.b16 %v4371
  %v4669 = vunpack.c.h.b16 %v4371
  %v4670 = vunpack.c.l.b16 %v4372
  %v4671 = vunpack.c.h.b16 %v4372
  %v4672 = vunpack.c.l.b16 %v4373
  %v4673 = vunpack.c.h.b16 %v4373
  %v4674 = vunpack.c.l.b16 %v4374
  %v4675 = vunpack.c.h.b16 %v4374
  %v4676 = vunpack.c.l.b16 %v4375
  %v4677 = vunpack.c.h.b16 %v4375
  %v4678 = vunpack.c.l.b16 %v4376
  %v4679 = vunpack.c.h.b16 %v4376
  %v4680 = vunpack.c.l.b16 %v4377
  %v4681 = vunpack.c.h.b16 %v4377
  %v4682 = vunpack.c.l.b16 %v4378
  %v4683 = vunpack.c.h.b16 %v4378
  %v4684 = vunpack.c.l.b16 %v4379
  %v4685 = vunpack.c.h.b16 %v4379
  %v4686 = vunpack.c.l.b16 %v4380
  %v4687 = vunpack.c.h.b16 %v4380
  %v4688 = vunpack.c.l.b16 %v4381
  %v4689 = vunpack.c.h.b16 %v4381
  %v4690 = vunpack.c.l.b16 %v4382
  %v4691 = vunpack.c.h.b16 %v4382
  %v4692 = vpack.c.b16 %v4502, %v4500
  %v4693 = vpack.c.b16 %v4503, %v4501
  %v4694 = vpack.c.b16 %v4506, %v4504
  %v4695 = vpack.c.b16 %v4507, %v4505
  %v4696 = vpack.c.b16 %v4510, %v4508
  %v4697 = vpack.c.b16 %v4511, %v4509
  %v4698 = vpack.c.b16 %v4514, %v4512
  %v4699 = vpack.c.b16 %v4515, %v4513
  %v4700 = vpack.c.b16 %v4518, %v4516
  %v4701 = vpack.c.b16 %v4519, %v4517
  %v4702 = vpack.c.b16 %v4522, %v4520
  %v4703 = vpack.c.b16 %v4523, %v4521
  %v4704 = vpack.c.b16 %v4526, %v4524
  %v4705 = vpack.c.b16 %v4527, %v4525
  %v4706 = vpack.c.b16 %v4530, %v4528
  %v4707 = vpack.c.b16 %v4531, %v4529
  %v4708 = vpack.c.b16 %v4534, %v4532
  %v4709 = vpack.c.b16 %v4535, %v4533
  %v4710 = vpack.c.b16 %v4538, %v4536
  %v4711 = vpack.c.b16 %v4539, %v4537
  %v4712 = vpack.c.b16 %v4542, %v4540
  %v4713 = vpack.c.b16 %v4543, %v4541
  %v4714 = vpack.c.b16 %v4546, %v4544
  %v4715 = vpack.c.b16 %v4547, %v4545
  %v4716 = vpack.c.b16 %v4550, %v4548
  %v4717 = vpack.c.b16 %v4551, %v4549
  %v4718 = vpack.c.b16 %v4554, %v4552
  %v4719 = vpack.c.b16 %v4555, %v4553
  %v4720 = vpack.c.b16 %v4558, %v4556
  %v4721 = vpack.c.b16 %v4559, %v4557
  %v4722 = vpack.c.b16 %v4562, %v4560
  %v4723 = vpack.c.b16 %v4563, %v4561
  %v4724 = vpack.c.b16 %v4566, %v4564
  %v4725 = vpack.c.b16 %v4567, %v4565
  %v4726 = vpack.c.b16 %v4570, %v4568
  %v4727 = vpack.c.b16 %v4571, %v4569
  %v4728 = vpack.c.b16 %v4574, %v4572
  %v4729 = vpack.c.b16 %v4575, %v4573
  %v4730 = vpack.c.b16 %v4578, %v4576
  %v4731 = vpack.c.b16 %v4579, %v4577
  %v4732 = vpack.c.b16 %v4582, %v4580
  %v4733 = vpack.c.b16 %v4583, %v4581
  %v4734 = vpack.c.b16 %v4586, %v4584
  %v4735 = vpack.c.b16 %v4587, %v4585
  %v4736 = vpack.c.b16 %v4590, %v4588
  %v4737 = vpack.c.b16 %v4591, %v4589
  %v4738 = vpack.c.b16 %v4594, %v4592
  %v4739 = vpack.c.b16 %v4595, %v4593
  %v4740 = vpack.c.b16 %v4598, %v4596
  %v4741 = vpack.c.b16 %v4599, %v4597
  %v4742 = vpack.c.b16 %v4602, %v4600
  %v4743 = vpack.c.b16 %v4603, %v4601
  %v4744 = vpack.c.b16 %v4606, %v4604
  %v4745 = vpack.c.b16 %v4607, %v4605
  %v4746 = vpack.c.b16 %v4610, %v4608
  %v4747 = vpack.c.b16 %v4611, %v4609
  %v4748 = vpack.c.b16 %v4614, %v4612
  %v4749 = vpack.c.b16 %v4615, %v4613
  %v4750 = vpack.c.b16 %v4618, %v4616
  %v4751 = vpack.c.b16 %v4619, %v4617
  %v4752 = vpack.c.b16 %v4622, %v4620
  %v4753 = vpack.c.b16 %v4623, %v4621
  %v4754 = vpack.c.b16 %v4626, %v4624
  %v4755 = vpack.c.b16 %v4627, %v4625
  %v4756 = vpack.c.b16 %v4630, %v4628
  %v4757 = vpack.c.b16 %v4631, %v4629
  %v4758 = vpack.c.b16 %v4634, %v4632
  %v4759 = vpack.c.b16 %v4635, %v4633
  %v4760 = vpack.c.b16 %v4638, %v4636
  %v4761 = vpack.c.b16 %v4639, %v4637
  %v4762 = vpack.c.b16 %v4642, %v4640
  %v4763 = vpack.c.b16 %v4643, %v4641
  %v4764 = vpack.c.b16 %v4646, %v4644
  %v4765 = vpack.c.b16 %v4647, %v4645
  %v4766 = vpack.c.b16 %v4650, %v4648
  %v4767 = vpack.c.b16 %v4651, %v4649
  %v4768 = vpack.c.b16 %v4654, %v4652
  %v4769 = vpack.c.b16 %v4655, %v4653
  %v4770 = vpack.c.b16 %v4658, %v4656
  %v4771 = vpack.c.b16 %v4659, %v4657
  %v4772 = vpack.c.b16 %v4662, %v4660
  %v4773 = vpack.c.b16 %v4663, %v4661
  %v4774 = vpack.c.b16 %v4666, %v4664
  %v4775 = vpack.c.b16 %v4667, %v4665
  %v4776 = vpack.c.b16 %v4670, %v4668
  %v4777 = vpack.c.b16 %v4671, %v4669
  %v4778 = vpack.c.b16 %v4674, %v4672
  %v4779 = vpack.c.b16 %v4675, %v4673
  %v4780 = vpack.c.b16 %v4678, %v4676
  %v4781 = vpack.c.b16 %v4679, %v4677
  %v4782 = vpack.c.b16 %v4682, %v4680
  %v4783 = vpack.c.b16 %v4683, %v4681
  %v4784 = vpack.c.b16 %v4686, %v4684
  %v4785 = vpack.c.b16 %v4687, %v4685
  %v4786 = vpack.c.b16 %v4690, %v4688
  %v4787 = vpack.c.b16 %v4691, %v4689
  %4884 = vmatprep.subr.bf16.mxu0 %v4707
  %4885 = vmatpush1.bf16.msra.mxu0 %v4706
  %4886 = vmatprep.subr.bf16.mxu0 %v4705
  %4887 = vmatpush1.bf16.msra.mxu0 %v4704
  %4888 = vmatprep.subr.bf16.mxu0 %v4703
  %4889 = vmatpush1.bf16.msra.mxu0 %v4702
  %4890 = vmatprep.subr.bf16.mxu0 %v4701
  %4891 = vmatpush1.bf16.msra.mxu0 %v4700
  %4892 = vmatprep.subr.bf16.mxu0 %v4699
  %4893 = vmatpush1.bf16.msra.mxu0 %v4698
  %4894 = vmatprep.subr.bf16.mxu0 %v4697
  %4895 = vmatpush1.bf16.msra.mxu0 %v4696
  %4896 = vmatprep.subr.bf16.mxu0 %v4695
  %4897 = vmatpush1.bf16.msra.mxu0 %v4694
  %4898 = vmatprep.subr.bf16.mxu0 %v4693
  %4899 = vmatpush1.bf16.msra.mxu0 %v4692
  %4900 = vmatprep.subr.bf16.mxu0 %v4723
  %4901 = vmatpush2.bf16.msra.mxu0 %v4722
  %4902 = vmatprep.subr.bf16.mxu0 %v4721
  %4903 = vmatpush2.bf16.msra.mxu0 %v4720
  %4904 = vmatprep.subr.bf16.mxu0 %v4719
  %4905 = vmatpush2.bf16.msra.mxu0 %v4718
  %4906 = vmatprep.subr.bf16.mxu0 %v4717
  %4907 = vmatpush2.bf16.msra.mxu0 %v4716
  %4908 = vmatprep.subr.bf16.mxu0 %v4715
  %4909 = vmatpush2.bf16.msra.mxu0 %v4714
  %4910 = vmatprep.subr.bf16.mxu0 %v4713
  %4911 = vmatpush2.bf16.msra.mxu0 %v4712
  %4912 = vmatprep.subr.bf16.mxu0 %v4711
  %4913 = vmatpush2.bf16.msra.mxu0 %v4710
  %4914 = vmatprep.subr.bf16.mxu0 %v4709
  %4915 = vmatpush2.bf16.msra.mxu0 %v4708
  %4916 = vmatprep.mubr.bf16.mxu0 %v4393
  %4917 = vmatmul.mubr.bf16.gmra.mxu0 %v4392
  %v4918 = vpop.f32.mrf.mxu0
  %v4919 = vadd.f32 0.0, %v4918
  %v4920 = vpop.f32.mrf.mxu0
  %v4921 = vadd.f32 0.0, %v4920
  %v4922 = vpop.f32.mrf.mxu0
  %v4923 = vpop.f32.mrf.mxu0
  %4924 = vdwg.mxu0
  %4925 = vmatprep.subr.bf16.mxu0 %v4739
  %4926 = vmatpush1.bf16.msra.mxu0 %v4738
  %4927 = vmatprep.subr.bf16.mxu0 %v4737
  %4928 = vmatpush1.bf16.msra.mxu0 %v4736
  %4929 = vmatprep.subr.bf16.mxu0 %v4735
  %4930 = vmatpush1.bf16.msra.mxu0 %v4734
  %4931 = vmatprep.subr.bf16.mxu0 %v4733
  %4932 = vmatpush1.bf16.msra.mxu0 %v4732
  %4933 = vmatprep.subr.bf16.mxu0 %v4731
  %4934 = vmatpush1.bf16.msra.mxu0 %v4730
  %4935 = vmatprep.subr.bf16.mxu0 %v4729
  %4936 = vmatpush1.bf16.msra.mxu0 %v4728
  %4937 = vmatprep.subr.bf16.mxu0 %v4727
  %4938 = vmatpush1.bf16.msra.mxu0 %v4726
  %4939 = vmatprep.subr.bf16.mxu0 %v4725
  %4940 = vmatpush1.bf16.msra.mxu0 %v4724
  %4941 = vmatprep.subr.bf16.mxu0 %v4755
  %4942 = vmatpush2.bf16.msra.mxu0 %v4754
  %4943 = vmatprep.subr.bf16.mxu0 %v4753
  %4944 = vmatpush2.bf16.msra.mxu0 %v4752
  %4945 = vmatprep.subr.bf16.mxu0 %v4751
  %4946 = vmatpush2.bf16.msra.mxu0 %v4750
  %4947 = vmatprep.subr.bf16.mxu0 %v4749
  %4948 = vmatpush2.bf16.msra.mxu0 %v4748
  %4949 = vmatprep.subr.bf16.mxu0 %v4747
  %4950 = vmatpush2.bf16.msra.mxu0 %v4746
  %4951 = vmatprep.subr.bf16.mxu0 %v4745
  %4952 = vmatpush2.bf16.msra.mxu0 %v4744
  %4953 = vmatprep.subr.bf16.mxu0 %v4743
  %4954 = vmatpush2.bf16.msra.mxu0 %v4742
  %4955 = vmatprep.subr.bf16.mxu0 %v4741
  %4956 = vmatpush2.bf16.msra.mxu0 %v4740
  %4957 = vmatprep.mubr.bf16.mxu0 %v4395
  %4958 = vmatmul.mubr.bf16.gmra.mxu0 %v4394
  %v4959 = vpop.f32.mrf.mxu0
  %v4960 = vadd.f32 %v4919, %v4959
  %v4961 = vpop.f32.mrf.mxu0
  %v4962 = vadd.f32 %v4921, %v4961
  %v4963 = vpop.f32.mrf.mxu0
  %v4964 = vpop.f32.mrf.mxu0
  %4965 = vdwg.mxu0
  %4966 = vmatprep.subr.bf16.mxu0 %v4771
  %4967 = vmatpush1.bf16.msra.mxu0 %v4770
  %4968 = vmatprep.subr.bf16.mxu0 %v4769
  %4969 = vmatpush1.bf16.msra.mxu0 %v4768
  %4970 = vmatprep.subr.bf16.mxu0 %v4767
  %4971 = vmatpush1.bf16.msra.mxu0 %v4766
  %4972 = vmatprep.subr.bf16.mxu0 %v4765
  %4973 = vmatpush1.bf16.msra.mxu0 %v4764
  %4974 = vmatprep.subr.bf16.mxu0 %v4763
  %4975 = vmatpush1.bf16.msra.mxu0 %v4762
  %4976 = vmatprep.subr.bf16.mxu0 %v4761
  %4977 = vmatpush1.bf16.msra.mxu0 %v4760
  %4978 = vmatprep.subr.bf16.mxu0 %v4759
  %4979 = vmatpush1.bf16.msra.mxu0 %v4758
  %4980 = vmatprep.subr.bf16.mxu0 %v4757
  %4981 = vmatpush1.bf16.msra.mxu0 %v4756
  %4982 = vmatprep.subr.bf16.mxu0 %v4787
  %4983 = vmatpush2.bf16.msra.mxu0 %v4786
  %4984 = vmatprep.subr.bf16.mxu0 %v4785
  %4985 = vmatpush2.bf16.msra.mxu0 %v4784
  %4986 = vmatprep.subr.bf16.mxu0 %v4783
  %4987 = vmatpush2.bf16.msra.mxu0 %v4782
  %4988 = vmatprep.subr.bf16.mxu0 %v4781
  %4989 = vmatpush2.bf16.msra.mxu0 %v4780
  %4990 = vmatprep.subr.bf16.mxu0 %v4779
  %4991 = vmatpush2.bf16.msra.mxu0 %v4778
  %4992 = vmatprep.subr.bf16.mxu0 %v4777
  %4993 = vmatpush2.bf16.msra.mxu0 %v4776
  %4994 = vmatprep.subr.bf16.mxu0 %v4775
  %4995 = vmatpush2.bf16.msra.mxu0 %v4774
  %4996 = vmatprep.subr.bf16.mxu0 %v4773
  %4997 = vmatpush2.bf16.msra.mxu0 %v4772
  %4998 = vmatprep.mubr.bf16.mxu0 %v4397
  %4999 = vmatmul.mubr.bf16.gmra.mxu0 %v4396
  %v5000 = vpop.f32.mrf.mxu0
  %v5001 = vadd.f32 %v4960, %v5000
  %v5002 = vpop.f32.mrf.mxu0
  %v5003 = vadd.f32 %v4962, %v5002
  %v5004 = vpop.f32.mrf.mxu0
  %v5005 = vpop.f32.mrf.mxu0
  %5006 = vdwg.mxu0
  %v5007 = vmax.f32 %v5001, %v5003
  %5009 = vrot.lane.b32.xlu0 %v5007, 64
  %v5010 = vpop.permute.xlu0 %5009
  %v5012 = vmax.f32 %v5007, %v5010
  %v5013 = vld [vmem:[%s4] sm:$0x1]
  %v5015 = vlaneseq
  %v5016 = vshrl.u32 %v5015, 7
  %v5017 = vsub.s32 0, %v5016
  %v5018 = vrot.slane %v5013, %v5017
  %v5020 = vadd.f32 %v5012, %v5018
  %v5021 = vsub.f32 0.0, %v5020
  %v5022 = vmul.f32 %v5021, 1.442695
  %v5023 = vpow.pop %v5022
  %v5024 = vadd.f32 %v5023, 1.0
  %v5025 = vrcp.pop %v5024
  %v5026 = vpack.c.bf16 %v5025, %v5025
  %v5027 = vld [vmem:[%s5] sm:$0xf]
  %v5028 = vld [vmem:[%s5 + $0x4] sm:$0xf]
  %v5029 = vld [vmem:[%s5 + $0x8] sm:$0xf]
  %v5030 = vld [vmem:[%s5 + $0xc] sm:$0xf]
  %v5031 = vld [vmem:[%s5 + $0x10] sm:$0xf]
  %v5032 = vld [vmem:[%s5 + $0x14] sm:$0xf]
  %v5033 = vld [vmem:[%s5 + $0x18] sm:$0xf]
  %v5034 = vld [vmem:[%s5 + $0x1c] sm:$0xf]
  %v5035 = vld [vmem:[#allocation2 + $0x8] sm:$0xff]
  %v5036 = vld [vmem:[#allocation2 + $0x10] sm:$0xff]
  %v5037 = vld [vmem:[#allocation2 + $0x18] sm:$0xff]
  %v5041 = vunpack.c.l.b16 %v5035
  %v5042 = vunpack.c.h.b16 %v5035
  %v5043 = vunpack.c.l.b16 %v5036
  %v5044 = vunpack.c.h.b16 %v5036
  %v5045 = vunpack.c.l.b16 %v5037
  %v5046 = vunpack.c.h.b16 %v5037
  %v5047 = vpack.c.b16 %v5041, %v5041
  %v5048 = vpack.c.b16 %v5042, %v5042
  %v5049 = vpack.c.b16 %v5043, %v5043
  %v5050 = vpack.c.b16 %v5044, %v5044
  %v5051 = vpack.c.b16 %v5045, %v5045
  %v5052 = vpack.c.b16 %v5046, %v5046
  %5059 = vmatprep.subr.bf16.mxu0 %v4707
  %5060 = vmatpush1.bf16.msra.mxu0 %v4706
  %5061 = vmatprep.subr.bf16.mxu0 %v4705
  %5062 = vmatpush1.bf16.msra.mxu0 %v4704
  %5063 = vmatprep.subr.bf16.mxu0 %v4703
  %5064 = vmatpush1.bf16.msra.mxu0 %v4702
  %5065 = vmatprep.subr.bf16.mxu0 %v4701
  %5066 = vmatpush1.bf16.msra.mxu0 %v4700
  %5067 = vmatprep.subr.bf16.mxu0 %v4699
  %5068 = vmatpush1.bf16.msra.mxu0 %v4698
  %5069 = vmatprep.subr.bf16.mxu0 %v4697
  %5070 = vmatpush1.bf16.msra.mxu0 %v4696
  %5071 = vmatprep.subr.bf16.mxu0 %v4695
  %5072 = vmatpush1.bf16.msra.mxu0 %v4694
  %5073 = vmatprep.subr.bf16.mxu0 %v4693
  %5074 = vmatpush1.bf16.msra.mxu0 %v4692
  %5075 = vmatprep.subr.bf16.mxu0 %v4723
  %5076 = vmatpush2.bf16.msra.mxu0 %v4722
  %5077 = vmatprep.subr.bf16.mxu0 %v4721
  %5078 = vmatpush2.bf16.msra.mxu0 %v4720
  %5079 = vmatprep.subr.bf16.mxu0 %v4719
  %5080 = vmatpush2.bf16.msra.mxu0 %v4718
  %5081 = vmatprep.subr.bf16.mxu0 %v4717
  %5082 = vmatpush2.bf16.msra.mxu0 %v4716
  %5083 = vmatprep.subr.bf16.mxu0 %v4715
  %5084 = vmatpush2.bf16.msra.mxu0 %v4714
  %5085 = vmatprep.subr.bf16.mxu0 %v4713
  %5086 = vmatpush2.bf16.msra.mxu0 %v4712
  %5087 = vmatprep.subr.bf16.mxu0 %v4711
  %5088 = vmatpush2.bf16.msra.mxu0 %v4710
  %5089 = vmatprep.subr.bf16.mxu0 %v4709
  %5090 = vmatpush2.bf16.msra.mxu0 %v4708
  %5091 = vmatprep.mubr.bf16.mxu0 %v5048
  %5092 = vmatmul.mubr.bf16.gmra.mxu0 %v5047
  %v5093 = vpop.f32.mrf.mxu0
  %v5094 = vadd.f32 0.0, %v5093
  %v5095 = vpop.f32.mrf.mxu0
  %v5096 = vadd.f32 0.0, %v5095
  %v5097 = vpop.f32.mrf.mxu0
  %v5098 = vpop.f32.mrf.mxu0
  %5099 = vdwg.mxu0
  %5100 = vmatprep.subr.bf16.mxu0 %v4739
  %5101 = vmatpush1.bf16.msra.mxu0 %v4738
  %5102 = vmatprep.subr.bf16.mxu0 %v4737
  %5103 = vmatpush1.bf16.msra.mxu0 %v4736
  %5104 = vmatprep.subr.bf16.mxu0 %v4735
  %5105 = vmatpush1.bf16.msra.mxu0 %v4734
  %5106 = vmatprep.subr.bf16.mxu0 %v4733
  %5107 = vmatpush1.bf16.msra.mxu0 %v4732
  %5108 = vmatprep.subr.bf16.mxu0 %v4731
  %5109 = vmatpush1.bf16.msra.mxu0 %v4730
  %5110 = vmatprep.subr.bf16.mxu0 %v4729
  %5111 = vmatpush1.bf16.msra.mxu0 %v4728
  %5112 = vmatprep.subr.bf16.mxu0 %v4727
  %5113 = vmatpush1.bf16.msra.mxu0 %v4726
  %5114 = vmatprep.subr.bf16.mxu0 %v4725
  %5115 = vmatpush1.bf16.msra.mxu0 %v4724
  %5116 = vmatprep.subr.bf16.mxu0 %v4755
  %5117 = vmatpush2.bf16.msra.mxu0 %v4754
  %5118 = vmatprep.subr.bf16.mxu0 %v4753
  %5119 = vmatpush2.bf16.msra.mxu0 %v4752
  %5120 = vmatprep.subr.bf16.mxu0 %v4751
  %5121 = vmatpush2.bf16.msra.mxu0 %v4750
  %5122 = vmatprep.subr.bf16.mxu0 %v4749
  %5123 = vmatpush2.bf16.msra.mxu0 %v4748
  %5124 = vmatprep.subr.bf16.mxu0 %v4747
  %5125 = vmatpush2.bf16.msra.mxu0 %v4746
  %5126 = vmatprep.subr.bf16.mxu0 %v4745
  %5127 = vmatpush2.bf16.msra.mxu0 %v4744
  %5128 = vmatprep.subr.bf16.mxu0 %v4743
  %5129 = vmatpush2.bf16.msra.mxu0 %v4742
  %5130 = vmatprep.subr.bf16.mxu0 %v4741
  %5131 = vmatpush2.bf16.msra.mxu0 %v4740
  %5132 = vmatprep.mubr.bf16.mxu0 %v5050
  %5133 = vmatmul.mubr.bf16.gmra.mxu0 %v5049
  %v5134 = vpop.f32.mrf.mxu0
  %v5135 = vadd.f32 %v5094, %v5134
  %v5136 = vpop.f32.mrf.mxu0
  %v5137 = vadd.f32 %v5096, %v5136
  %v5138 = vpop.f32.mrf.mxu0
  %v5139 = vpop.f32.mrf.mxu0
  %5140 = vdwg.mxu0
  %5141 = vmatprep.subr.bf16.mxu0 %v4771
  %5142 = vmatpush1.bf16.msra.mxu0 %v4770
  %5143 = vmatprep.subr.bf16.mxu0 %v4769
  %5144 = vmatpush1.bf16.msra.mxu0 %v4768
  %5145 = vmatprep.subr.bf16.mxu0 %v4767
  %5146 = vmatpush1.bf16.msra.mxu0 %v4766
  %5147 = vmatprep.subr.bf16.mxu0 %v4765
  %5148 = vmatpush1.bf16.msra.mxu0 %v4764
  %5149 = vmatprep.subr.bf16.mxu0 %v4763
  %5150 = vmatpush1.bf16.msra.mxu0 %v4762
  %5151 = vmatprep.subr.bf16.mxu0 %v4761
  %5152 = vmatpush1.bf16.msra.mxu0 %v4760
  %5153 = vmatprep.subr.bf16.mxu0 %v4759
  %5154 = vmatpush1.bf16.msra.mxu0 %v4758
  %5155 = vmatprep.subr.bf16.mxu0 %v4757
  %5156 = vmatpush1.bf16.msra.mxu0 %v4756
  %5157 = vmatprep.subr.bf16.mxu0 %v4787
  %5158 = vmatpush2.bf16.msra.mxu0 %v4786
  %5159 = vmatprep.subr.bf16.mxu0 %v4785
  %5160 = vmatpush2.bf16.msra.mxu0 %v4784
  %5161 = vmatprep.subr.bf16.mxu0 %v4783
  %5162 = vmatpush2.bf16.msra.mxu0 %v4782
  %5163 = vmatprep.subr.bf16.mxu0 %v4781
  %5164 = vmatpush2.bf16.msra.mxu0 %v4780
  %5165 = vmatprep.subr.bf16.mxu0 %v4779
  %5166 = vmatpush2.bf16.msra.mxu0 %v4778
  %5167 = vmatprep.subr.bf16.mxu0 %v4777
  %5168 = vmatpush2.bf16.msra.mxu0 %v4776
  %5169 = vmatprep.subr.bf16.mxu0 %v4775
  %5170 = vmatpush2.bf16.msra.mxu0 %v4774
  %5171 = vmatprep.subr.bf16.mxu0 %v4773
  %5172 = vmatpush2.bf16.msra.mxu0 %v4772
  %5173 = vmatprep.mubr.bf16.mxu0 %v5052
  %5174 = vmatmul.mubr.bf16.gmra.mxu0 %v5051
  %v5175 = vpop.f32.mrf.mxu0
  %v5176 = vadd.f32 %v5135, %v5175
  %v5177 = vpop.f32.mrf.mxu0
  %v5178 = vadd.f32 %v5137, %v5177
  %v5179 = vpop.f32.mrf.mxu0
  %v5180 = vpop.f32.mrf.mxu0
  %5181 = vdwg.mxu0
  %v5182 = vmax.f32 %v5176, %v5178
  %5184 = vrot.lane.b32.xlu0 %v5182, 64
  %v5185 = vpop.permute.xlu0 %5184
  %v5187 = vmax.f32 %v5182, %v5185
  %v5188 = vadd.f32 %v5187, %v5018
  %v5189 = vsub.f32 0.0, %v5188
  %v5190 = vmul.f32 %v5189, 1.442695
  %v5191 = vpow.pop %v5190
  %v5192 = vadd.f32 %v5191, 1.0
  %v5193 = vrcp.pop %v5192
  %v5194 = vpack.c.bf16 %v5193, %v5193
  %s5195 = scalar_lea.vmem %s5, 32
  %v5196 = vld [vmem:[%s5195] sm:$0xf]
  %v5197 = vld [vmem:[%s5195 + $0x4] sm:$0xf]
  %v5198 = vld [vmem:[%s5195 + $0x8] sm:$0xf]
  %v5199 = vld [vmem:[%s5195 + $0xc] sm:$0xf]
  %v5200 = vld [vmem:[%s5195 + $0x10] sm:$0xf]
  %v5201 = vld [vmem:[%s5195 + $0x14] sm:$0xf]
  %v5202 = vld [vmem:[%s5195 + $0x18] sm:$0xf]
  %v5203 = vld [vmem:[%s5195 + $0x1c] sm:$0xf]
  %v5212 = vunpack.c.l.b16 %v5196
  %v5213 = vunpack.c.l.b16 %v5197
  %v5214 = vunpack.c.l.b16 %v5198
  %v5215 = vunpack.c.l.b16 %v5199
  %v5216 = vunpack.c.l.b16 %v5200
  %v5217 = vunpack.c.l.b16 %v5201
  %v5218 = vunpack.c.l.b16 %v5202
  %v5219 = vunpack.c.l.b16 %v5203
  %v5220 = vpack.c.b16 %v5213, %v5212
  %v5221 = vpack.c.b16 %v5215, %v5214
  %v5222 = vpack.c.b16 %v5217, %v5216
  %v5223 = vpack.c.b16 %v5219, %v5218
  %vm5228 = vcmask 523264
  %v5230 = vsel %vm5228, %v5194, 0
  %5232 = vmatprep.subr.bf16.mxu0 0
  %5233 = vmatpush1.bf16.msra.mxu0 0
  %5234 = vmatprep.subr.bf16.mxu0 0
  %5235 = vmatpush1.bf16.msra.mxu0 0
  %5236 = vmatprep.subr.bf16.mxu0 0
  %5237 = vmatpush1.bf16.msra.mxu0 0
  %5238 = vmatprep.subr.bf16.mxu0 0
  %5239 = vmatpush1.bf16.msra.mxu0 0
  %5240 = vmatprep.subr.bf16.mxu0 0
  %5241 = vmatpush1.bf16.msra.mxu0 %v5223
  %5242 = vmatprep.subr.bf16.mxu0 0
  %5243 = vmatpush1.bf16.msra.mxu0 %v5222
  %5244 = vmatprep.subr.bf16.mxu0 0
  %5245 = vmatpush1.bf16.msra.mxu0 %v5221
  %5246 = vmatprep.subr.bf16.mxu0 0
  %5247 = vmatpush1.bf16.msra.mxu0 %v5220
  %5248 = vmatprep.subr.bf16.mxu0 0
  %5249 = vmatpush2.bf16.msra.mxu0 0
  %5250 = vmatprep.subr.bf16.mxu0 0
  %5251 = vmatpush2.bf16.msra.mxu0 0
  %5252 = vmatprep.subr.bf16.mxu0 0
  %5253 = vmatpush2.bf16.msra.mxu0 0
  %5254 = vmatprep.subr.bf16.mxu0 0
  %5255 = vmatpush2.bf16.msra.mxu0 0
  %5256 = vmatprep.subr.bf16.mxu0 0
  %5257 = vmatpush2.bf16.msra.mxu0 0
  %5258 = vmatprep.subr.bf16.mxu0 0
  %5259 = vmatpush2.bf16.msra.mxu0 0
  %5260 = vmatprep.subr.bf16.mxu0 0
  %5261 = vmatpush2.bf16.msra.mxu0 0
  %5262 = vmatprep.subr.bf16.mxu0 0
  %5263 = vmatpush2.bf16.msra.mxu0 0
  %5264 = vmatprep.mubr.bf16.mxu0 0
  %5265 = vmatmul.mubr.bf16.gmra.mxu0 %v5230
  %v5266 = vpop.f32.mrf.mxu0
  %v5267 = vadd.f32 0.0, %v5266
  %v5268 = vpop.f32.mrf.mxu0
  %v5269 = vpop.f32.mrf.mxu0
  %v5270 = vpop.f32.mrf.mxu0
  %5271 = vdwg.mxu0
  %v5280 = vunpack.c.l.b16 %v5027
  %v5281 = vunpack.c.l.b16 %v5028
  %v5282 = vunpack.c.l.b16 %v5029
  %v5283 = vunpack.c.l.b16 %v5030
  %v5284 = vunpack.c.l.b16 %v5031
  %v5285 = vunpack.c.l.b16 %v5032
  %v5286 = vunpack.c.l.b16 %v5033
  %v5287 = vunpack.c.l.b16 %v5034
  %v5288 = vpack.c.b16 %v5281, %v5280
  %v5289 = vpack.c.b16 %v5283, %v5282
  %v5290 = vpack.c.b16 %v5285, %v5284
  %v5291 = vpack.c.b16 %v5287, %v5286
  %v5297 = vsel %vm5228, %v5026, 0
  %5299 = vmatprep.subr.bf16.mxu0 0
  %5300 = vmatpush1.bf16.msra.mxu0 0
  %5301 = vmatprep.subr.bf16.mxu0 0
  %5302 = vmatpush1.bf16.msra.mxu0 0
  %5303 = vmatprep.subr.bf16.mxu0 0
  %5304 = vmatpush1.bf16.msra.mxu0 0
  %5305 = vmatprep.subr.bf16.mxu0 0
  %5306 = vmatpush1.bf16.msra.mxu0 0
  %5307 = vmatprep.subr.bf16.mxu0 0
  %5308 = vmatpush1.bf16.msra.mxu0 %v5291
  %5309 = vmatprep.subr.bf16.mxu0 0
  %5310 = vmatpush1.bf16.msra.mxu0 %v5290
  %5311 = vmatprep.subr.bf16.mxu0 0
  %5312 = vmatpush1.bf16.msra.mxu0 %v5289
  %5313 = vmatprep.subr.bf16.mxu0 0
  %5314 = vmatpush1.bf16.msra.mxu0 %v5288
  %5315 = vmatprep.subr.bf16.mxu0 0
  %5316 = vmatpush2.bf16.msra.mxu0 0
  %5317 = vmatprep.subr.bf16.mxu0 0
  %5318 = vmatpush2.bf16.msra.mxu0 0
  %5319 = vmatprep.subr.bf16.mxu0 0
  %5320 = vmatpush2.bf16.msra.mxu0 0
  %5321 = vmatprep.subr.bf16.mxu0 0
  %5322 = vmatpush2.bf16.msra.mxu0 0
  %5323 = vmatprep.subr.bf16.mxu0 0
  %5324 = vmatpush2.bf16.msra.mxu0 0
  %5325 = vmatprep.subr.bf16.mxu0 0
  %5326 = vmatpush2.bf16.msra.mxu0 0
  %5327 = vmatprep.subr.bf16.mxu0 0
  %5328 = vmatpush2.bf16.msra.mxu0 0
  %5329 = vmatprep.subr.bf16.mxu0 0
  %5330 = vmatpush2.bf16.msra.mxu0 0
  %5331 = vmatprep.mubr.bf16.mxu0 0
  %5332 = vmatmul.mubr.bf16.gmra.mxu0 %v5297
  %v5333 = vpop.f32.mrf.mxu0
  %v5334 = vadd.f32 %v5267, %v5333
  %v5335 = vpop.f32.mrf.mxu0
  %v5336 = vpop.f32.mrf.mxu0
  %v5337 = vpop.f32.mrf.mxu0
  %5338 = vdwg.mxu0
  %v5339 = vld [vmem:[#allocation2 + $0x10] sm:$0xff]
  %v5340 = vld [vmem:[#allocation2 + $0x18] sm:$0xff]
  %v5341 = vld [vmem:[#allocation2 + $0x20] sm:$0xff]
  %v5345 = vunpack.c.l.b16 %v5339
  %v5346 = vunpack.c.h.b16 %v5339
  %v5347 = vunpack.c.l.b16 %v5340
  %v5348 = vunpack.c.h.b16 %v5340
  %v5349 = vunpack.c.l.b16 %v5341
  %v5350 = vunpack.c.h.b16 %v5341
  %v5351 = vpack.c.b16 %v5345, %v5345
  %v5352 = vpack.c.b16 %v5346, %v5346
  %v5353 = vpack.c.b16 %v5347, %v5347
  %v5354 = vpack.c.b16 %v5348, %v5348
  %v5355 = vpack.c.b16 %v5349, %v5349
  %v5356 = vpack.c.b16 %v5350, %v5350
  %5363 = vmatprep.subr.bf16.mxu0 %v4707
  %5364 = vmatpush1.bf16.msra.mxu0 %v4706
  %5365 = vmatprep.subr.bf16.mxu0 %v4705
  %5366 = vmatpush1.bf16.msra.mxu0 %v4704
  %5367 = vmatprep.subr.bf16.mxu0 %v4703
  %5368 = vmatpush1.bf16.msra.mxu0 %v4702
  %5369 = vmatprep.subr.bf16.mxu0 %v4701
  %5370 = vmatpush1.bf16.msra.mxu0 %v4700
  %5371 = vmatprep.subr.bf16.mxu0 %v4699
  %5372 = vmatpush1.bf16.msra.mxu0 %v4698
  %5373 = vmatprep.subr.bf16.mxu0 %v4697
  %5374 = vmatpush1.bf16.msra.mxu0 %v4696
  %5375 = vmatprep.subr.bf16.mxu0 %v4695
  %5376 = vmatpush1.bf16.msra.mxu0 %v4694
  %5377 = vmatprep.subr.bf16.mxu0 %v4693
  %5378 = vmatpush1.bf16.msra.mxu0 %v4692
  %5379 = vmatprep.subr.bf16.mxu0 %v4723
  %5380 = vmatpush2.bf16.msra.mxu0 %v4722
  %5381 = vmatprep.subr.bf16.mxu0 %v4721
  %5382 = vmatpush2.bf16.msra.mxu0 %v4720
  %5383 = vmatprep.subr.bf16.mxu0 %v4719
  %5384 = vmatpush2.bf16.msra.mxu0 %v4718
  %5385 = vmatprep.subr.bf16.mxu0 %v4717
  %5386 = vmatpush2.bf16.msra.mxu0 %v4716
  %5387 = vmatprep.subr.bf16.mxu0 %v4715
  %5388 = vmatpush2.bf16.msra.mxu0 %v4714
  %5389 = vmatprep.subr.bf16.mxu0 %v4713
  %5390 = vmatpush2.bf16.msra.mxu0 %v4712
  %5391 = vmatprep.subr.bf16.mxu0 %v4711
  %5392 = vmatpush2.bf16.msra.mxu0 %v4710
  %5393 = vmatprep.subr.bf16.mxu0 %v4709
  %5394 = vmatpush2.bf16.msra.mxu0 %v4708
  %5395 = vmatprep.mubr.bf16.mxu0 %v5352
  %5396 = vmatmul.mubr.bf16.gmra.mxu0 %v5351
  %v5397 = vpop.f32.mrf.mxu0
  %v5398 = vadd.f32 0.0, %v5397
  %v5399 = vpop.f32.mrf.mxu0
  %v5400 = vadd.f32 0.0, %v5399
  %v5401 = vpop.f32.mrf.mxu0
  %v5402 = vpop.f32.mrf.mxu0
  %5403 = vdwg.mxu0
  %5404 = vmatprep.subr.bf16.mxu0 %v4739
  %5405 = vmatpush1.bf16.msra.mxu0 %v4738
  %5406 = vmatprep.subr.bf16.mxu0 %v4737
  %5407 = vmatpush1.bf16.msra.mxu0 %v4736
  %5408 = vmatprep.subr.bf16.mxu0 %v4735
  %5409 = vmatpush1.bf16.msra.mxu0 %v4734
  %5410 = vmatprep.subr.bf16.mxu0 %v4733
  %5411 = vmatpush1.bf16.msra.mxu0 %v4732
  %5412 = vmatprep.subr.bf16.mxu0 %v4731
  %5413 = vmatpush1.bf16.msra.mxu0 %v4730
  %5414 = vmatprep.subr.bf16.mxu0 %v4729
  %5415 = vmatpush1.bf16.msra.mxu0 %v4728
  %5416 = vmatprep.subr.bf16.mxu0 %v4727
  %5417 = vmatpush1.bf16.msra.mxu0 %v4726
  %5418 = vmatprep.subr.bf16.mxu0 %v4725
  %5419 = vmatpush1.bf16.msra.mxu0 %v4724
  %5420 = vmatprep.subr.bf16.mxu0 %v4755
  %5421 = vmatpush2.bf16.msra.mxu0 %v4754
  %5422 = vmatprep.subr.bf16.mxu0 %v4753
  %5423 = vmatpush2.bf16.msra.mxu0 %v4752
  %5424 = vmatprep.subr.bf16.mxu0 %v4751
  %5425 = vmatpush2.bf16.msra.mxu0 %v4750
  %5426 = vmatprep.subr.bf16.mxu0 %v4749
  %5427 = vmatpush2.bf16.msra.mxu0 %v4748
  %5428 = vmatprep.subr.bf16.mxu0 %v4747
  %5429 = vmatpush2.bf16.msra.mxu0 %v4746
  %5430 = vmatprep.subr.bf16.mxu0 %v4745
  %5431 = vmatpush2.bf16.msra.mxu0 %v4744
  %5432 = vmatprep.subr.bf16.mxu0 %v4743
  %5433 = vmatpush2.bf16.msra.mxu0 %v4742
  %5434 = vmatprep.subr.bf16.mxu0 %v4741
  %5435 = vmatpush2.bf16.msra.mxu0 %v4740
  %5436 = vmatprep.mubr.bf16.mxu0 %v5354
  %5437 = vmatmul.mubr.bf16.gmra.mxu0 %v5353
  %v5438 = vpop.f32.mrf.mxu0
  %v5439 = vadd.f32 %v5398, %v5438
  %v5440 = vpop.f32.mrf.mxu0
  %v5441 = vadd.f32 %v5400, %v5440
  %v5442 = vpop.f32.mrf.mxu0
  %v5443 = vpop.f32.mrf.mxu0
  %5444 = vdwg.mxu0
  %5445 = vmatprep.subr.bf16.mxu0 %v4771
  %5446 = vmatpush1.bf16.msra.mxu0 %v4770
  %5447 = vmatprep.subr.bf16.mxu0 %v4769
  %5448 = vmatpush1.bf16.msra.mxu0 %v4768
  %5449 = vmatprep.subr.bf16.mxu0 %v4767
  %5450 = vmatpush1.bf16.msra.mxu0 %v4766
  %5451 = vmatprep.subr.bf16.mxu0 %v4765
  %5452 = vmatpush1.bf16.msra.mxu0 %v4764
  %5453 = vmatprep.subr.bf16.mxu0 %v4763
  %5454 = vmatpush1.bf16.msra.mxu0 %v4762
  %5455 = vmatprep.subr.bf16.mxu0 %v4761
  %5456 = vmatpush1.bf16.msra.mxu0 %v4760
  %5457 = vmatprep.subr.bf16.mxu0 %v4759
  %5458 = vmatpush1.bf16.msra.mxu0 %v4758
  %5459 = vmatprep.subr.bf16.mxu0 %v4757
  %5460 = vmatpush1.bf16.msra.mxu0 %v4756
  %5461 = vmatprep.subr.bf16.mxu0 %v4787
  %5462 = vmatpush2.bf16.msra.mxu0 %v4786
  %5463 = vmatprep.subr.bf16.mxu0 %v4785
  %5464 = vmatpush2.bf16.msra.mxu0 %v4784
  %5465 = vmatprep.subr.bf16.mxu0 %v4783
  %5466 = vmatpush2.bf16.msra.mxu0 %v4782
  %5467 = vmatprep.subr.bf16.mxu0 %v4781
  %5468 = vmatpush2.bf16.msra.mxu0 %v4780
  %5469 = vmatprep.subr.bf16.mxu0 %v4779
  %5470 = vmatpush2.bf16.msra.mxu0 %v4778
  %5471 = vmatprep.subr.bf16.mxu0 %v4777
  %5472 = vmatpush2.bf16.msra.mxu0 %v4776
  %5473 = vmatprep.subr.bf16.mxu0 %v4775
  %5474 = vmatpush2.bf16.msra.mxu0 %v4774
  %5475 = vmatprep.subr.bf16.mxu0 %v4773
  %5476 = vmatpush2.bf16.msra.mxu0 %v4772
  %5477 = vmatprep.mubr.bf16.mxu0 %v5356
  %5478 = vmatmul.mubr.bf16.gmra.mxu0 %v5355
  %v5479 = vpop.f32.mrf.mxu0
  %v5480 = vadd.f32 %v5439, %v5479
  %v5481 = vpop.f32.mrf.mxu0
  %v5482 = vadd.f32 %v5441, %v5481
  %v5483 = vpop.f32.mrf.mxu0
  %v5484 = vpop.f32.mrf.mxu0
  %5485 = vdwg.mxu0
  %v5486 = vmax.f32 %v5480, %v5482
  %5488 = vrot.lane.b32.xlu0 %v5486, 64
  %v5489 = vpop.permute.xlu0 %5488
  %v5491 = vmax.f32 %v5486, %v5489
  %v5492 = vadd.f32 %v5491, %v5018
  %v5493 = vsub.f32 0.0, %v5492
  %v5494 = vmul.f32 %v5493, 1.442695
  %v5495 = vpow.pop %v5494
  %v5496 = vadd.f32 %v5495, 1.0
  %v5497 = vrcp.pop %v5496
  %v5498 = vpack.c.bf16 %v5497, %v5497
  %s5499 = scalar_lea.vmem %s5, 64
  %v5500 = vld [vmem:[%s5499] sm:$0xf]
  %v5501 = vld [vmem:[%s5499 + $0x4] sm:$0xf]
  %v5502 = vld [vmem:[%s5499 + $0x8] sm:$0xf]
  %v5503 = vld [vmem:[%s5499 + $0xc] sm:$0xf]
  %v5504 = vld [vmem:[%s5499 + $0x10] sm:$0xf]
  %v5505 = vld [vmem:[%s5499 + $0x14] sm:$0xf]
  %v5506 = vld [vmem:[%s5499 + $0x18] sm:$0xf]
  %v5507 = vld [vmem:[%s5499 + $0x1c] sm:$0xf]
  %v5516 = vunpack.c.l.b16 %v5500
  %v5517 = vunpack.c.l.b16 %v5501
  %v5518 = vunpack.c.l.b16 %v5502
  %v5519 = vunpack.c.l.b16 %v5503
  %v5520 = vunpack.c.l.b16 %v5504
  %v5521 = vunpack.c.l.b16 %v5505
  %v5522 = vunpack.c.l.b16 %v5506
  %v5523 = vunpack.c.l.b16 %v5507
  %v5524 = vpack.c.b16 %v5517, %v5516
  %v5525 = vpack.c.b16 %v5519, %v5518
  %v5526 = vpack.c.b16 %v5521, %v5520
  %v5527 = vpack.c.b16 %v5523, %v5522
  %v5533 = vsel %vm5228, %v5498, 0
  %5535 = vmatprep.subr.bf16.mxu0 0
  %5536 = vmatpush1.bf16.msra.mxu0 0
  %5537 = vmatprep.subr.bf16.mxu0 0
  %5538 = vmatpush1.bf16.msra.mxu0 0
  %5539 = vmatprep.subr.bf16.mxu0 0
  %5540 = vmatpush1.bf16.msra.mxu0 0
  %5541 = vmatprep.subr.bf16.mxu0 0
  %5542 = vmatpush1.bf16.msra.mxu0 0
  %5543 = vmatprep.subr.bf16.mxu0 0
  %5544 = vmatpush1.bf16.msra.mxu0 %v5527
  %5545 = vmatprep.subr.bf16.mxu0 0
  %5546 = vmatpush1.bf16.msra.mxu0 %v5526
  %5547 = vmatprep.subr.bf16.mxu0 0
  %5548 = vmatpush1.bf16.msra.mxu0 %v5525
  %5549 = vmatprep.subr.bf16.mxu0 0
  %5550 = vmatpush1.bf16.msra.mxu0 %v5524
  %5551 = vmatprep.subr.bf16.mxu0 0
  %5552 = vmatpush2.bf16.msra.mxu0 0
  %5553 = vmatprep.subr.bf16.mxu0 0
  %5554 = vmatpush2.bf16.msra.mxu0 0
  %5555 = vmatprep.subr.bf16.mxu0 0
  %5556 = vmatpush2.bf16.msra.mxu0 0
  %5557 = vmatprep.subr.bf16.mxu0 0
  %5558 = vmatpush2.bf16.msra.mxu0 0
  %5559 = vmatprep.subr.bf16.mxu0 0
  %5560 = vmatpush2.bf16.msra.mxu0 0
  %5561 = vmatprep.subr.bf16.mxu0 0
  %5562 = vmatpush2.bf16.msra.mxu0 0
  %5563 = vmatprep.subr.bf16.mxu0 0
  %5564 = vmatpush2.bf16.msra.mxu0 0
  %5565 = vmatprep.subr.bf16.mxu0 0
  %5566 = vmatpush2.bf16.msra.mxu0 0
  %5567 = vmatprep.mubr.bf16.mxu0 0
  %5568 = vmatmul.mubr.bf16.gmra.mxu0 %v5533
  %v5569 = vpop.f32.mrf.mxu0
  %v5570 = vadd.f32 0.0, %v5569
  %v5571 = vpop.f32.mrf.mxu0
  %v5572 = vpop.f32.mrf.mxu0
  %v5573 = vpop.f32.mrf.mxu0
  %5574 = vdwg.mxu0
  %v5575 = vadd.f32 %v5334, %v5570
  %v5576 = vld [vmem:[#allocation2 + $0x18] sm:$0xff]
  %v5577 = vld [vmem:[#allocation2 + $0x20] sm:$0xff]
  %v5578 = vld [vmem:[#allocation2 + $0x28] sm:$0xff]
  %v5582 = vunpack.c.l.b16 %v5576
  %v5583 = vunpack.c.h.b16 %v5576
  %v5584 = vunpack.c.l.b16 %v5577
  %v5585 = vunpack.c.h.b16 %v5577
  %v5586 = vunpack.c.l.b16 %v5578
  %v5587 = vunpack.c.h.b16 %v5578
  %v5588 = vpack.c.b16 %v5582, %v5582
  %v5589 = vpack.c.b16 %v5583, %v5583
  %v5590 = vpack.c.b16 %v5584, %v5584
  %v5591 = vpack.c.b16 %v5585, %v5585
  %v5592 = vpack.c.b16 %v5586, %v5586
  %v5593 = vpack.c.b16 %v5587, %v5587
  %5600 = vmatprep.subr.bf16.mxu0 %v4707
  %5601 = vmatpush1.bf16.msra.mxu0 %v4706
  %5602 = vmatprep.subr.bf16.mxu0 %v4705
  %5603 = vmatpush1.bf16.msra.mxu0 %v4704
  %5604 = vmatprep.subr.bf16.mxu0 %v4703
  %5605 = vmatpush1.bf16.msra.mxu0 %v4702
  %5606 = vmatprep.subr.bf16.mxu0 %v4701
  %5607 = vmatpush1.bf16.msra.mxu0 %v4700
  %5608 = vmatprep.subr.bf16.mxu0 %v4699
  %5609 = vmatpush1.bf16.msra.mxu0 %v4698
  %5610 = vmatprep.subr.bf16.mxu0 %v4697
  %5611 = vmatpush1.bf16.msra.mxu0 %v4696
  %5612 = vmatprep.subr.bf16.mxu0 %v4695
  %5613 = vmatpush1.bf16.msra.mxu0 %v4694
  %5614 = vmatprep.subr.bf16.mxu0 %v4693
  %5615 = vmatpush1.bf16.msra.mxu0 %v4692
  %5616 = vmatprep.subr.bf16.mxu0 %v4723
  %5617 = vmatpush2.bf16.msra.mxu0 %v4722
  %5618 = vmatprep.subr.bf16.mxu0 %v4721
  %5619 = vmatpush2.bf16.msra.mxu0 %v4720
  %5620 = vmatprep.subr.bf16.mxu0 %v4719
  %5621 = vmatpush2.bf16.msra.mxu0 %v4718
  %5622 = vmatprep.subr.bf16.mxu0 %v4717
  %5623 = vmatpush2.bf16.msra.mxu0 %v4716
  %5624 = vmatprep.subr.bf16.mxu0 %v4715
  %5625 = vmatpush2.bf16.msra.mxu0 %v4714
  %5626 = vmatprep.subr.bf16.mxu0 %v4713
  %5627 = vmatpush2.bf16.msra.mxu0 %v4712
  %5628 = vmatprep.subr.bf16.mxu0 %v4711
  %5629 = vmatpush2.bf16.msra.mxu0 %v4710
  %5630 = vmatprep.subr.bf16.mxu0 %v4709
  %5631 = vmatpush2.bf16.msra.mxu0 %v4708
  %5632 = vmatprep.mubr.bf16.mxu0 %v5589
  %5633 = vmatmul.mubr.bf16.gmra.mxu0 %v5588
  %v5634 = vpop.f32.mrf.mxu0
  %v5635 = vadd.f32 0.0, %v5634
  %v5636 = vpop.f32.mrf.mxu0
  %v5637 = vadd.f32 0.0, %v5636
  %v5638 = vpop.f32.mrf.mxu0
  %v5639 = vpop.f32.mrf.mxu0
  %5640 = vdwg.mxu0
  %5641 = vmatprep.subr.bf16.mxu0 %v4739
  %5642 = vmatpush1.bf16.msra.mxu0 %v4738
  %5643 = vmatprep.subr.bf16.mxu0 %v4737
  %5644 = vmatpush1.bf16.msra.mxu0 %v4736
  %5645 = vmatprep.subr.bf16.mxu0 %v4735
  %5646 = vmatpush1.bf16.msra.mxu0 %v4734
  %5647 = vmatprep.subr.bf16.mxu0 %v4733
  %5648 = vmatpush1.bf16.msra.mxu0 %v4732
  %5649 = vmatprep.subr.bf16.mxu0 %v4731
  %5650 = vmatpush1.bf16.msra.mxu0 %v4730
  %5651 = vmatprep.subr.bf16.mxu0 %v4729
  %5652 = vmatpush1.bf16.msra.mxu0 %v4728
  %5653 = vmatprep.subr.bf16.mxu0 %v4727
  %5654 = vmatpush1.bf16.msra.mxu0 %v4726
  %5655 = vmatprep.subr.bf16.mxu0 %v4725
  %5656 = vmatpush1.bf16.msra.mxu0 %v4724
  %5657 = vmatprep.subr.bf16.mxu0 %v4755
  %5658 = vmatpush2.bf16.msra.mxu0 %v4754
  %5659 = vmatprep.subr.bf16.mxu0 %v4753
  %5660 = vmatpush2.bf16.msra.mxu0 %v4752
  %5661 = vmatprep.subr.bf16.mxu0 %v4751
  %5662 = vmatpush2.bf16.msra.mxu0 %v4750
  %5663 = vmatprep.subr.bf16.mxu0 %v4749
  %5664 = vmatpush2.bf16.msra.mxu0 %v4748
  %5665 = vmatprep.subr.bf16.mxu0 %v4747
  %5666 = vmatpush2.bf16.msra.mxu0 %v4746
  %5667 = vmatprep.subr.bf16.mxu0 %v4745
  %5668 = vmatpush2.bf16.msra.mxu0 %v4744
  %5669 = vmatprep.subr.bf16.mxu0 %v4743
  %5670 = vmatpush2.bf16.msra.mxu0 %v4742
  %5671 = vmatprep.subr.bf16.mxu0 %v4741
  %5672 = vmatpush2.bf16.msra.mxu0 %v4740
  %5673 = vmatprep.mubr.bf16.mxu0 %v5591
  %5674 = vmatmul.mubr.bf16.gmra.mxu0 %v5590
  %v5675 = vpop.f32.mrf.mxu0
  %v5676 = vadd.f32 %v5635, %v5675
  %v5677 = vpop.f32.mrf.mxu0
  %v5678 = vadd.f32 %v5637, %v5677
  %v5679 = vpop.f32.mrf.mxu0
  %v5680 = vpop.f32.mrf.mxu0
  %5681 = vdwg.mxu0
  %5682 = vmatprep.subr.bf16.mxu0 %v4771
  %5683 = vmatpush1.bf16.msra.mxu0 %v4770
  %5684 = vmatprep.subr.bf16.mxu0 %v4769
  %5685 = vmatpush1.bf16.msra.mxu0 %v4768
  %5686 = vmatprep.subr.bf16.mxu0 %v4767
  %5687 = vmatpush1.bf16.msra.mxu0 %v4766
  %5688 = vmatprep.subr.bf16.mxu0 %v4765
  %5689 = vmatpush1.bf16.msra.mxu0 %v4764
  %5690 = vmatprep.subr.bf16.mxu0 %v4763
  %5691 = vmatpush1.bf16.msra.mxu0 %v4762
  %5692 = vmatprep.subr.bf16.mxu0 %v4761
  %5693 = vmatpush1.bf16.msra.mxu0 %v4760
  %5694 = vmatprep.subr.bf16.mxu0 %v4759
  %5695 = vmatpush1.bf16.msra.mxu0 %v4758
  %5696 = vmatprep.subr.bf16.mxu0 %v4757
  %5697 = vmatpush1.bf16.msra.mxu0 %v4756
  %5698 = vmatprep.subr.bf16.mxu0 %v4787
  %5699 = vmatpush2.bf16.msra.mxu0 %v4786
  %5700 = vmatprep.subr.bf16.mxu0 %v4785
  %5701 = vmatpush2.bf16.msra.mxu0 %v4784
  %5702 = vmatprep.subr.bf16.mxu0 %v4783
  %5703 = vmatpush2.bf16.msra.mxu0 %v4782
  %5704 = vmatprep.subr.bf16.mxu0 %v4781
  %5705 = vmatpush2.bf16.msra.mxu0 %v4780
  %5706 = vmatprep.subr.bf16.mxu0 %v4779
  %5707 = vmatpush2.bf16.msra.mxu0 %v4778
  %5708 = vmatprep.subr.bf16.mxu0 %v4777
  %5709 = vmatpush2.bf16.msra.mxu0 %v4776
  %5710 = vmatprep.subr.bf16.mxu0 %v4775
  %5711 = vmatpush2.bf16.msra.mxu0 %v4774
  %5712 = vmatprep.subr.bf16.mxu0 %v4773
  %5713 = vmatpush2.bf16.msra.mxu0 %v4772
  %5714 = vmatprep.mubr.bf16.mxu0 %v5593
  %5715 = vmatmul.mubr.bf16.gmra.mxu0 %v5592
  %v5716 = vpop.f32.mrf.mxu0
  %v5717 = vadd.f32 %v5676, %v5716
  %v5718 = vpop.f32.mrf.mxu0
  %v5719 = vadd.f32 %v5678, %v5718
  %v5720 = vpop.f32.mrf.mxu0
  %v5721 = vpop.f32.mrf.mxu0
  %5722 = vdwg.mxu0
  %v5723 = vmax.f32 %v5717, %v5719
  %5725 = vrot.lane.b32.xlu0 %v5723, 64
  %v5726 = vpop.permute.xlu0 %5725
  %v5728 = vmax.f32 %v5723, %v5726
  %v5729 = vadd.f32 %v5728, %v5018
  %v5730 = vsub.f32 0.0, %v5729
  %v5731 = vmul.f32 %v5730, 1.442695
  %v5732 = vpow.pop %v5731
  %v5733 = vadd.f32 %v5732, 1.0
  %v5734 = vrcp.pop %v5733
  %v5735 = vpack.c.bf16 %v5734, %v5734
  %s5736 = scalar_lea.vmem %s5, 96
  %v5737 = vld [vmem:[%s5736] sm:$0xf]
  %v5738 = vld [vmem:[%s5736 + $0x4] sm:$0xf]
  %v5739 = vld [vmem:[%s5736 + $0x8] sm:$0xf]
  %v5740 = vld [vmem:[%s5736 + $0xc] sm:$0xf]
  %v5741 = vld [vmem:[%s5736 + $0x10] sm:$0xf]
  %v5742 = vld [vmem:[%s5736 + $0x14] sm:$0xf]
  %v5743 = vld [vmem:[%s5736 + $0x18] sm:$0xf]
  %v5744 = vld [vmem:[%s5736 + $0x1c] sm:$0xf]
  %v5753 = vunpack.c.l.b16 %v5737
  %v5754 = vunpack.c.l.b16 %v5738
  %v5755 = vunpack.c.l.b16 %v5739
  %v5756 = vunpack.c.l.b16 %v5740
  %v5757 = vunpack.c.l.b16 %v5741
  %v5758 = vunpack.c.l.b16 %v5742
  %v5759 = vunpack.c.l.b16 %v5743
  %v5760 = vunpack.c.l.b16 %v5744
  %v5761 = vpack.c.b16 %v5754, %v5753
  %v5762 = vpack.c.b16 %v5756, %v5755
  %v5763 = vpack.c.b16 %v5758, %v5757
  %v5764 = vpack.c.b16 %v5760, %v5759
  %v5770 = vsel %vm5228, %v5735, 0
  %5772 = vmatprep.subr.bf16.mxu0 0
  %5773 = vmatpush1.bf16.msra.mxu0 0
  %5774 = vmatprep.subr.bf16.mxu0 0
  %5775 = vmatpush1.bf16.msra.mxu0 0
  %5776 = vmatprep.subr.bf16.mxu0 0
  %5777 = vmatpush1.bf16.msra.mxu0 0
  %5778 = vmatprep.subr.bf16.mxu0 0
  %5779 = vmatpush1.bf16.msra.mxu0 0
  %5780 = vmatprep.subr.bf16.mxu0 0
  %5781 = vmatpush1.bf16.msra.mxu0 %v5764
  %5782 = vmatprep.subr.bf16.mxu0 0
  %5783 = vmatpush1.bf16.msra.mxu0 %v5763
  %5784 = vmatprep.subr.bf16.mxu0 0
  %5785 = vmatpush1.bf16.msra.mxu0 %v5762
  %5786 = vmatprep.subr.bf16.mxu0 0
  %5787 = vmatpush1.bf16.msra.mxu0 %v5761
  %5788 = vmatprep.subr.bf16.mxu0 0
  %5789 = vmatpush2.bf16.msra.mxu0 0
  %5790 = vmatprep.subr.bf16.mxu0 0
  %5791 = vmatpush2.bf16.msra.mxu0 0
  %5792 = vmatprep.subr.bf16.mxu0 0
  %5793 = vmatpush2.bf16.msra.mxu0 0
  %5794 = vmatprep.subr.bf16.mxu0 0
  %5795 = vmatpush2.bf16.msra.mxu0 0
  %5796 = vmatprep.subr.bf16.mxu0 0
  %5797 = vmatpush2.bf16.msra.mxu0 0
  %5798 = vmatprep.subr.bf16.mxu0 0
  %5799 = vmatpush2.bf16.msra.mxu0 0
  %5800 = vmatprep.subr.bf16.mxu0 0
  %5801 = vmatpush2.bf16.msra.mxu0 0
  %5802 = vmatprep.subr.bf16.mxu0 0
  %5803 = vmatpush2.bf16.msra.mxu0 0
  %5804 = vmatprep.mubr.bf16.mxu0 0
  %5805 = vmatmul.mubr.bf16.gmra.mxu0 %v5770
  %v5806 = vpop.f32.mrf.mxu0
  %v5807 = vadd.f32 0.0, %v5806
  %v5808 = vpop.f32.mrf.mxu0
  %v5809 = vpop.f32.mrf.mxu0
  %v5810 = vpop.f32.mrf.mxu0
  %5811 = vdwg.mxu0
  %v5812 = vadd.f32 %v5575, %v5807
  %v5813 = vld [vmem:[%s6] sm:$0x1]
  %v5815 = vlaneseq
  %v5816 = vshrl.u32 %v5815, 7
  %v5817 = vsub.s32 0, %v5816
  %v5818 = vrot.slane %v5813, %v5817
  %v5820 = vadd.f32 %v5812, %v5818
  %v5821 = vsub.f32 0.0, %v5820
  %v5822 = vmul.f32 %v5821, 1.442695
  %v5823 = vpow.pop %v5822
  %v5824 = vadd.f32 %v5823, 1.0
  %v5825 = vrcp.pop %v5824
  %v5826 = vpack.c.bf16 %v5825, %v5825
  %v5827 = vld [vmem:[%s7] sm:$0xf]
  %v5828 = vld [vmem:[%s7 + $0x4] sm:$0xf]
  %v5829 = vld [vmem:[%s7 + $0x8] sm:$0xf]
  %v5830 = vld [vmem:[%s7 + $0xc] sm:$0xf]
  %v5831 = vld [vmem:[%s7 + $0x10] sm:$0xf]
  %v5832 = vld [vmem:[%s7 + $0x14] sm:$0xf]
  %v5833 = vld [vmem:[%s7 + $0x18] sm:$0xf]
  %v5834 = vld [vmem:[%s7 + $0x1c] sm:$0xf]
  %v5835 = vld [vmem:[%s7 + $0x20] sm:$0xf]
  %v5836 = vld [vmem:[%s7 + $0x24] sm:$0xf]
  %v5837 = vld [vmem:[%s7 + $0x28] sm:$0xf]
  %v5838 = vld [vmem:[%s7 + $0x2c] sm:$0xf]
  %v5839 = vld [vmem:[%s7 + $0x30] sm:$0xf]
  %v5840 = vld [vmem:[%s7 + $0x34] sm:$0xf]
  %v5841 = vld [vmem:[%s7 + $0x38] sm:$0xf]
  %v5842 = vld [vmem:[%s8] sm:$0x1]
  %v5844 = vlaneseq
  %v5845 = vshrl.u32 %v5844, 7
  %v5846 = vsub.s32 0, %v5845
  %v5847 = vrot.slane %v5842, %v5846
  %v5864 = vunpack.c.l.b16 %v5827
  %v5865 = vunpack.c.l.b16 %v5828
  %v5866 = vunpack.c.l.b16 %v5829
  %v5867 = vunpack.c.l.b16 %v5830
  %v5868 = vunpack.c.l.b16 %v5831
  %v5869 = vunpack.c.l.b16 %v5832
  %v5870 = vunpack.c.l.b16 %v5833
  %v5871 = vunpack.c.l.b16 %v5834
  %v5872 = vunpack.c.l.b16 %v5835
  %v5873 = vunpack.c.l.b16 %v5836
  %v5874 = vunpack.c.l.b16 %v5837
  %v5875 = vunpack.c.l.b16 %v5838
  %v5876 = vunpack.c.l.b16 %v5839
  %v5877 = vunpack.c.l.b16 %v5840
  %v5878 = vunpack.c.l.b16 %v5841
  %v5879 = vpack.c.b16 %v5865, %v5864
  %v5880 = vpack.c.b16 %v5867, %v5866
  %v5881 = vpack.c.b16 %v5869, %v5868
  %v5882 = vpack.c.b16 %v5871, %v5870
  %v5883 = vpack.c.b16 %v5873, %v5872
  %v5884 = vpack.c.b16 %v5875, %v5874
  %v5885 = vpack.c.b16 %v5877, %v5876
  %v5886 = vpack.c.b16 %v5878, %v5878
  %vm5894 = vcmask 982016
  %v5896 = vsel %vm5894, %v5826, 0
  %v5899 = vsel %vm266, %v5886, 0
  %5901 = vmatprep.subr.bf16.mxu0 0
  %5902 = vmatpush1.bf16.msra.mxu0 %v5899
  %5903 = vmatprep.subr.bf16.mxu0 0
  %5904 = vmatpush1.bf16.msra.mxu0 %v5885
  %5905 = vmatprep.subr.bf16.mxu0 0
  %5906 = vmatpush1.bf16.msra.mxu0 %v5884
  %5907 = vmatprep.subr.bf16.mxu0 0
  %5908 = vmatpush1.bf16.msra.mxu0 %v5883
  %5909 = vmatprep.subr.bf16.mxu0 0
  %5910 = vmatpush1.bf16.msra.mxu0 %v5882
  %5911 = vmatprep.subr.bf16.mxu0 0
  %5912 = vmatpush1.bf16.msra.mxu0 %v5881
  %5913 = vmatprep.subr.bf16.mxu0 0
  %5914 = vmatpush1.bf16.msra.mxu0 %v5880
  %5915 = vmatprep.subr.bf16.mxu0 0
  %5916 = vmatpush1.bf16.msra.mxu0 %v5879
  %5917 = vmatprep.subr.bf16.mxu0 0
  %5918 = vmatpush2.bf16.msra.mxu0 0
  %5919 = vmatprep.subr.bf16.mxu0 0
  %5920 = vmatpush2.bf16.msra.mxu0 0
  %5921 = vmatprep.subr.bf16.mxu0 0
  %5922 = vmatpush2.bf16.msra.mxu0 0
  %5923 = vmatprep.subr.bf16.mxu0 0
  %5924 = vmatpush2.bf16.msra.mxu0 0
  %5925 = vmatprep.subr.bf16.mxu0 0
  %5926 = vmatpush2.bf16.msra.mxu0 0
  %5927 = vmatprep.subr.bf16.mxu0 0
  %5928 = vmatpush2.bf16.msra.mxu0 0
  %5929 = vmatprep.subr.bf16.mxu0 0
  %5930 = vmatpush2.bf16.msra.mxu0 0
  %5931 = vmatprep.subr.bf16.mxu0 0
  %5932 = vmatpush2.bf16.msra.mxu0 0
  %5933 = vmatprep.mubr.bf16.mxu0 0
  %5934 = vmatmul.mubr.bf16.gmra.mxu0 %v5896
  %v5935 = vpop.f32.mrf.mxu0
  %v5936 = vadd.f32 %v5847, %v5935
  %v5937 = vpop.f32.mrf.mxu0
  %v5938 = vpop.f32.mrf.mxu0
  %v5939 = vpop.f32.mrf.mxu0
  %5940 = vdwg.mxu0
  %v5941 = vsub.f32 0.0, %v5936
  %v5942 = vmul.f32 %v5941, 1.442695
  %v5943 = vpow.pop %v5942
  %v5944 = vadd.f32 %v5943, 1.0
  %v5945 = vrcp.pop %v5944
  %v5946 = vpack.c.bf16 %v5945, %v5945
  %v5947 = vld [vmem:[%s9] sm:$0xf]
  %v5948 = vld [vmem:[%s9 + $0x4] sm:$0xf]
  %v5949 = vld [vmem:[%s9 + $0x8] sm:$0xf]
  %v5950 = vld [vmem:[%s9 + $0xc] sm:$0xf]
  %v5951 = vld [vmem:[%s9 + $0x10] sm:$0xf]
  %v5952 = vld [vmem:[%s9 + $0x14] sm:$0xf]
  %v5953 = vld [vmem:[%s9 + $0x18] sm:$0xf]
  %v5954 = vld [vmem:[%s9 + $0x1c] sm:$0xf]
  %v5955 = vld [vmem:[%s9 + $0x20] sm:$0xf]
  %v5956 = vld [vmem:[%s9 + $0x24] sm:$0xf]
  %v5957 = vld [vmem:[%s9 + $0x28] sm:$0x3]
  %v5958 = vld [vmem:[%s10] sm:$0x1]
  %v5960 = vlaneseq
  %v5961 = vshrl.u32 %v5960, 7
  %v5962 = vsub.s32 0, %v5961
  %v5963 = vrot.slane %v5958, %v5962
  %v5976 = vunpack.c.l.b16 %v5947
  %v5977 = vunpack.c.l.b16 %v5948
  %v5978 = vunpack.c.l.b16 %v5949
  %v5979 = vunpack.c.l.b16 %v5950
  %v5980 = vunpack.c.l.b16 %v5951
  %v5981 = vunpack.c.l.b16 %v5952
  %v5982 = vunpack.c.l.b16 %v5953
  %v5983 = vunpack.c.l.b16 %v5954
  %v5984 = vunpack.c.l.b16 %v5955
  %v5985 = vunpack.c.l.b16 %v5956
  %v5986 = vunpack.c.l.b16 %v5957
  %v5987 = vpack.c.b16 %v5977, %v5976
  %v5988 = vpack.c.b16 %v5979, %v5978
  %v5989 = vpack.c.b16 %v5981, %v5980
  %v5990 = vpack.c.b16 %v5983, %v5982
  %v5991 = vpack.c.b16 %v5985, %v5984
  %v5992 = vpack.c.b16 %v5986, %v5986
  %vm5998 = vcmask 687104
  %v6000 = vsel %vm5998, %v5946, 0
  %vm6002 = vcmask 1041408
  %v6004 = vsel %vm6002, %v5992, 0
  %6006 = vmatprep.subr.bf16.mxu0 0
  %6007 = vmatpush1.bf16.msra.mxu0 0
  %6008 = vmatprep.subr.bf16.mxu0 0
  %6009 = vmatpush1.bf16.msra.mxu0 0
  %6010 = vmatprep.subr.bf16.mxu0 0
  %6011 = vmatpush1.bf16.msra.mxu0 %v6004
  %6012 = vmatprep.subr.bf16.mxu0 0
  %6013 = vmatpush1.bf16.msra.mxu0 %v5991
  %6014 = vmatprep.subr.bf16.mxu0 0
  %6015 = vmatpush1.bf16.msra.mxu0 %v5990
  %6016 = vmatprep.subr.bf16.mxu0 0
  %6017 = vmatpush1.bf16.msra.mxu0 %v5989
  %6018 = vmatprep.subr.bf16.mxu0 0
  %6019 = vmatpush1.bf16.msra.mxu0 %v5988
  %6020 = vmatprep.subr.bf16.mxu0 0
  %6021 = vmatpush1.bf16.msra.mxu0 %v5987
  %6022 = vmatprep.subr.bf16.mxu0 0
  %6023 = vmatpush2.bf16.msra.mxu0 0
  %6024 = vmatprep.subr.bf16.mxu0 0
  %6025 = vmatpush2.bf16.msra.mxu0 0
  %6026 = vmatprep.subr.bf16.mxu0 0
  %6027 = vmatpush2.bf16.msra.mxu0 0
  %6028 = vmatprep.subr.bf16.mxu0 0
  %6029 = vmatpush2.bf16.msra.mxu0 0
  %6030 = vmatprep.subr.bf16.mxu0 0
  %6031 = vmatpush2.bf16.msra.mxu0 0
  %6032 = vmatprep.subr.bf16.mxu0 0
  %6033 = vmatpush2.bf16.msra.mxu0 0
  %6034 = vmatprep.subr.bf16.mxu0 0
  %6035 = vmatpush2.bf16.msra.mxu0 0
  %6036 = vmatprep.subr.bf16.mxu0 0
  %6037 = vmatpush2.bf16.msra.mxu0 0
  %6038 = vmatprep.mubr.bf16.mxu0 0
  %6039 = vmatmul.mubr.bf16.gmra.mxu0 %v6000
  %v6040 = vpop.f32.mrf.mxu0
  %v6041 = vadd.f32 %v5963, %v6040
  %v6042 = vpop.f32.mrf.mxu0
  %v6043 = vpop.f32.mrf.mxu0
  %v6044 = vpop.f32.mrf.mxu0
  %6045 = vdwg.mxu0
  %6046 = vst [vmem:[%s11] sm:$0xff] %v6041
  // Predicated region
  $region46: #{lenet_forward.1} parent=0 // pred_check
    _
  $region47: #{lenet_forward.1} parent=0 // pred_check_branch
    %6048 = sbr.rel (0) target = $region49
  $region48: #{lenet_forward.1} parent=0 // pred_region
    _
  $region49: #{lenet_forward.1} parent=0 // pred_fallthru
    _
  // Predicated region
  $region50: #{lenet_forward.1} parent=0 // pred_check
    _
  $region51: #{lenet_forward.1} parent=0 // pred_check_branch
    %6050 = sbr.rel (0) target = $region53
  $region52: #{lenet_forward.1} parent=0 // pred_region
    _
  $region53: #{lenet_forward.1} parent=0 // pred_fallthru
    _

</llo_original>
